<compile_context>
chip_gen: v7x
topology: tpu7x:2x2x1
jax: 0.10.0
libtpu: 0.0.40
codegen_flags: <defaults>
</compile_context>

<pallas_src>
import math
from functools import partial

import numpy as np
import jax
import jax.numpy as jnp
from jax.experimental import pallas as pl
from jax.experimental.pallas import tpu as pltpu


def _round_up(x, m):
    return ((x + m - 1) // m) * m


# ----------------------------------------------------------------------------
# Deterministic parameter setup (mirrors PAC.__init__)
# ----------------------------------------------------------------------------
def calc_bands_pha(start_hz=2.0, end_hz=20.0, n_bands=100):
    mid = np.linspace(start_hz, end_hz, n_bands)
    return np.stack([mid - mid / 4.0, mid + mid / 4.0], axis=1)


def calc_bands_amp(start_hz=60.0, end_hz=160.0, n_bands=100):
    mid = np.linspace(start_hz, end_hz, n_bands)
    return np.stack([mid - mid / 8.0, mid + mid / 8.0], axis=1)


def design_fir_bandpass(low_hz, high_hz, fs, numtaps):
    """Deterministic Hamming-windowed-sinc band-pass FIR taps (firwin-style)."""
    # TODO(synk): exact scipy.signal.firwin tap normalization of the original
    # BandPassFilter is not reproduced bit-exactly; same filter family/shape.
    n = np.arange(numtaps) - (numtaps - 1) / 2.0

    def lowpass(fc):
        fc = float(np.clip(fc, 1e-3, fs / 2.0 - 1e-3))
        return 2.0 * fc / fs * np.sinc(2.0 * fc / fs * n)

    h = (lowpass(high_hz) - lowpass(low_hz)) * np.hamming(numtaps)
    fc = 0.5 * (low_hz + high_hz)
    gain = np.abs(np.sum(h * np.exp(-2j * np.pi * fc / fs * np.arange(numtaps))))
    return (h / max(gain, 1e-6)).astype(np.float32)


# ----------------------------------------------------------------------------
# One-off probe: strided-roll direction / availability (cached).
# ----------------------------------------------------------------------------
_ROLL_MODE_CACHE = []


def _probe_strided_roll():
    def kern(o_ref):
        v = jax.lax.broadcasted_iota(jnp.float32, (8, 128), 1)
        o_ref[...] = pltpu.roll(v, 0, 1, stride=1, stride_axis=0)

    try:
        r = pl.pallas_call(
            kern, out_shape=jax.ShapeDtypeStruct((8, 128), jnp.float32))()
        r = np.asarray(jax.block_until_ready(r))
    except Exception:
        return None
    if r[1, 0] == 127.0 and r[3, 0] == 125.0:   # jnp.roll semantics (row j shifted right by j)
        return "np"
    if r[1, 0] == 1.0 and r[3, 0] == 3.0:       # rotate-left semantics
        return "opp"
    return None


def _roll_mode():
    if not _ROLL_MODE_CACHE:
        _ROLL_MODE_CACHE.append(_probe_strided_roll())
    return _ROLL_MODE_CACHE[0]


# ----------------------------------------------------------------------------
# Kernel 1: FIR band-pass filter bank, Toeplitz window built in VMEM via one
#           strided XLU roll per segment (no HBM im2col, no per-tap slices).
# ----------------------------------------------------------------------------
_SEG_BLK = 8   # segments per grid step (raise to 16 on v5e/v6e, lower to 4 on v7x
               # for very long sequences -- see VMEM note in bandpass_filterbank).


def _bandpass_roll_kernel(x_ref, h_ref, out_ref, *, Lp, col0, T_out):
    # x_ref:   (G, Tpad)      zero-padded signal rows
    # h_ref:   (F, Lp)        taps (orientation fixed up by the wrapper)
    # out_ref: (G, F, T_out)  lane-dense band-passed output
    h = h_ref[...]
    G = out_ref.shape[0]
    Tpad = x_ref.shape[1]
    for g in range(G):
        row = x_ref[pl.ds(g, 1), :]                       # (1, Tpad)
        # One sublane broadcast + ONE strided roll (row j rotated by j lanes)
        # rebuilds the whole (Lp, Tpad) Toeplitz window on the XLU, replacing
        # 65 misaligned single-row slice loads per segment.
        win = jnp.broadcast_to(row, (Lp, Tpad))
        win = pltpu.roll(win, 0, 1, stride=1, stride_axis=0)
        out_ref[g] = jnp.dot(h, win[:, col0:col0 + T_out],
                             preferred_element_type=jnp.float32)


def _bandpass_slice_kernel(x_ref, h_ref, out_ref, *, L, T_out):
    # Fallback window build (used only if the strided-roll probe fails).
    h = h_ref[...]
    G = out_ref.shape[0]
    for g in range(G):
        rows = [x_ref[pl.ds(g, 1), pl.ds(l, T_out)] for l in range(L)]
        win = jnp.concatenate(rows, axis=0)               # (L, T_out)
        out_ref[g] = jnp.dot(h[:, :L], win, preferred_element_type=jnp.float32)


def bandpass_filterbank(x2d, H, T, L):
    """x2d: (NS, T) raw signal rows; H: (F, L) correlation taps.
    Returns (NS, F, T) float32 band-passed signal ('same' zero padding)."""
    NS = x2d.shape[0]
    F = H.shape[0]
    assert L % 2 == 1 and L <= 128
    P = L // 2
    mode = _roll_mode()

    T_al = _round_up(T, 128)                # lane-aligned output length
    Lp = _round_up(L, 128)                  # full MXU K tile / sublane-padded taps

    if mode == "np":
        # window position col0+t contains xpad[col0 + t - j]; flip taps.
        col0 = _round_up(L - 1, 128)
        left = col0 - (L - 1)
        width = col0 + T_al
        Hk = np.ascontiguousarray(H[:, ::-1])
    else:
        # "opp" strided roll (window[j, t] = xpad[t + j]) or slice fallback.
        col0 = 0
        left = 0
        width = T_al + Lp - 1
        Hk = H
    Tpad_al = _round_up(width, 128)

    Hk_pad = np.zeros((F, Lp), np.float32)
    Hk_pad[:, :L] = Hk
    Hk_pad = jnp.asarray(Hk_pad)

    NS_al = _round_up(NS, _SEG_BLK)
    xp = jnp.zeros((NS_al, Tpad_al), jnp.float32)
    xp = xp.at[:NS, left + P:left + P + T].set(x2d.astype(jnp.float32))

    if mode is not None:
        kern = partial(_bandpass_roll_kernel, Lp=Lp, col0=col0, T_out=T_al)
    else:
        kern = partial(_bandpass_slice_kernel, L=L, T_out=T_al)

    cost = pl.CostEstimate(
        flops=int(2 * NS_al * F * Lp * T_al),
        transcendentals=0,
        bytes_accessed=int(4 * (NS_al * Tpad_al + F * Lp + NS_al * F * T_al)),
    )
    # NOTE: for production sizes keep the double-buffered (SEG_BLK, F, T_al) f32
    # output block within the scoped VMEM budget (v7x: 64 MiB physical) -- drop
    # _SEG_BLK or add a T grid axis for very long sequences.
    out = pl.pallas_call(
        kern,
        out_shape=jax.ShapeDtypeStruct((NS_al, F, T_al), jnp.float32),
        grid=(NS_al // _SEG_BLK,),
        in_specs=[
            pl.BlockSpec((_SEG_BLK, Tpad_al), lambda i: (i, 0)),
            pl.BlockSpec((F, Lp), lambda i: (0, 0)),
        ],
        out_specs=pl.BlockSpec((_SEG_BLK, F, T_al), lambda i: (i, 0, 0)),
        compiler_params=pltpu.CompilerParams(dimension_semantics=("parallel",)),
        cost_estimate=cost,
    )(xp, Hk_pad)
    return out[:NS, :, :T]


# ----------------------------------------------------------------------------
# Kernel 2: Modulation Index (Tort MI), mean over segments.
# ----------------------------------------------------------------------------
def _mi_kernel(pha_ref, amp_ref, out_ref, *, n_bins, n_segments, f_pha, f_amp,
               t_chunk, mxu_dtype):
    # pha_ref: (1, 1, F_pha, T)   instantaneous phase in (-pi, pi]
    # amp_ref: (1, 1, F_amp, T)   amplitude envelopes
    # out_ref: (1, F_amp, F_pha)  MI accumulator, resident across the S axis
    s = pl.program_id(1)

    @pl.when(s == 0)
    def _init():
        out_ref[...] = jnp.zeros_like(out_ref)

    phase = pha_ref[0, 0]                                  # (F_pha, T)
    amp = amp_ref[0, 0]                                    # (F_amp, T)
    T = phase.shape[-1]
    NBF = n_bins * f_pha
    eps = jnp.float32(1e-9)

    # Digitize phase once (float arithmetic; values are exact small integers).
    inv_width = jnp.float32(n_bins / (2.0 * math.pi))
    binned = jnp.floor((phase + jnp.float32(math.pi)) * inv_width)
    binned = jnp.clip(binned, 0.0, float(n_bins - 1))      # (F_pha, T)

    # Amp with an appended ones row -> per-bin counts fall out of the same matmul
    # (no HBM-duplicating wrapper concat).
    ampx = jnp.concatenate(
        [amp, jnp.ones((1, T), jnp.float32)], axis=0).astype(mxu_dtype)

    # Stacked one-hot matmul, flipped so the OUTPUT lane dim is n_bins*F_pha
    # (lane-dense), accumulated over lane chunks of the time axis so the mask
    # stays small in VMEM at production sizes.
    row_iota = jax.lax.broadcasted_iota(jnp.float32, (NBF, t_chunk), 0)
    f_pha_f = jnp.float32(f_pha)
    res = jnp.zeros((f_amp + 1, NBF), jnp.float32)
    for c in range(T // t_chunk):
        lo = c * t_chunk
        # mask[r, t] = 1  iff  binned[r % F_pha, t] == r // F_pha   (2-D build,
        # no 3-D reshape relayout; exact in bf16 since values are 0/1).
        b_c = jnp.tile(binned[:, lo:lo + t_chunk], (n_bins, 1))      # (NBF, TC)
        lower = b_c * f_pha_f
        mask = (row_iota >= lower) & (row_iota <= lower + (f_pha_f - 1.0))
        mask = mask.astype(mxu_dtype)
        res = res + jax.lax.dot_general(
            ampx[:, lo:lo + t_chunk], mask, (((1,), (1,)), ((), ())),
            preferred_element_type=jnp.float32)            # (F_amp+1, NBF)

    sums = res[:f_amp, :]                                  # (F_amp, NBF)
    counts = res[f_amp:, :]                                # (1, NBF)
    means = sums / (counts + eps)                          # mean amp per (amp, bin*pha)

    # Bin-wise reductions via one small stacked-identity matmul:
    #   sel[b*F_pha + f, f'] = (f == f')  ->  X @ sel sums over bins per phase row.
    r_i = jax.lax.broadcasted_iota(jnp.int32, (f_pha, f_pha), 0)
    c_i = jax.lax.broadcasted_iota(jnp.int32, (f_pha, f_pha), 1)
    sel = jnp.tile((r_i == c_i).astype(jnp.float32), (n_bins, 1))    # (NBF, F_pha)

    total = jnp.dot(means, sel, preferred_element_type=jnp.float32) + eps
    mlogm = jnp.dot(means * jnp.log(means + eps), sel,
                    preferred_element_type=jnp.float32)              # (F_amp, F_pha)
    # sum_b p log p == (sum_b m log m) / total - log(total)   (exact divisions)
    plogp = mlogm / total - jnp.log(total)

    log_n = jnp.float32(math.log(n_bins))
    mi = (plogp + log_n) * jnp.float32(1.0 / math.log(n_bins))       # (F_amp, F_pha)

    out_ref[0] += mi

    @pl.when(s == n_segments - 1)
    def _fin():
        out_ref[0] = out_ref[0] * jnp.float32(1.0 / n_segments)


def modulation_index(pha, amp, n_bins, mxu_dtype=jnp.bfloat16):
    # pha: (BC, S, F_pha, T), amp: (BC, S, F_amp, T)  ->  (BC, F_pha, F_amp)
    BC, S, F_pha, T = pha.shape
    F_amp = amp.shape[2]
    NBF = n_bins * F_pha

    t_chunk = T
    for cand in (512, 256, 128):
        if T % cand == 0:
            t_chunk = cand
            break

    mm_flops = 2 * BC * S * (F_amp + 1) * T * NBF
    cost = pl.CostEstimate(
        flops=int(mm_flops + 4 * BC * S * F_amp * NBF * F_pha),
        transcendentals=int(BC * S * F_amp * NBF),
        bytes_accessed=int(4 * (BC * S * T * (F_pha + F_amp) + BC * F_pha * F_amp)),
    )
    out = pl.pallas_call(
        partial(_mi_kernel, n_bins=n_bins, n_segments=S, f_pha=F_pha,
                f_amp=F_amp, t_chunk=t_chunk, mxu_dtype=mxu_dtype),
        out_shape=jax.ShapeDtypeStruct((BC, F_amp, F_pha), jnp.float32),
        grid=(BC, S),
        in_specs=[
            pl.BlockSpec((1, 1, F_pha, T), lambda i, s: (i, s, 0, 0)),
            pl.BlockSpec((1, 1, F_amp, T), lambda i, s: (i, s, 0, 0)),
        ],
        out_specs=pl.BlockSpec((1, F_amp, F_pha), lambda i, s: (i, 0, 0)),
        compiler_params=pltpu.CompilerParams(
            dimension_semantics=("parallel", "arbitrary")),
        cost_estimate=cost,
    )(pha, amp)
    # tiny final transpose back to (pha, amp) ordering, done once in the wrapper
    return jnp.transpose(out, (0, 2, 1))


# ----------------------------------------------------------------------------
# Glue: Hilbert transform (FFT-based) in plain JAX
# ----------------------------------------------------------------------------
def hilbert_phase_amp(x):
    """x: (..., T) real. Returns (phase, amplitude) of the analytic signal."""
    # TODO(synk): FFT has no Pallas TPU primitive; Hilbert stays in plain JAX.
    T = x.shape[-1]
    Xf = jnp.fft.fft(x, axis=-1)
    h = np.zeros(T, dtype=np.float32)
    if T % 2 == 0:
        h[0] = 1.0
        h[T // 2] = 1.0
        h[1:T // 2] = 2.0
    else:
        h[0] = 1.0
        h[1:(T + 1) // 2] = 2.0
    analytic = jnp.fft.ifft(Xf * jnp.asarray(h), axis=-1)
    return (jnp.angle(analytic).astype(jnp.float32),
            jnp.abs(analytic).astype(jnp.float32))


# ----------------------------------------------------------------------------
# PAC forward
# ----------------------------------------------------------------------------
def pac_forward(x, *, fs,
                pha_start_hz=2.0, pha_end_hz=20.0, pha_n_bands=100,
                amp_start_hz=60.0, amp_end_hz=160.0, amp_n_bands=100,
                n_bins=18, numtaps=65,
                mi_mxu_dtype=jnp.bfloat16):
    if x.ndim == 3:
        x = x[:, :, None, :]
    assert x.ndim == 4
    assert numtaps % 2 == 1
    B, C, S, T = x.shape
    x2d = x.reshape(B * C * S, T).astype(jnp.float32)

    # --- filter bank taps (deterministic) ---
    bands_pha = calc_bands_pha(pha_start_hz, pha_end_hz, pha_n_bands)
    bands_amp = calc_bands_amp(amp_start_hz, amp_end_hz, amp_n_bands)
    H_pha = np.stack([design_fir_bandpass(l, h, fs, numtaps) for l, h in bands_pha], axis=0)
    H_amp = np.stack([design_fir_bandpass(l, h, fs, numtaps) for l, h in bands_amp], axis=0)
    H = np.concatenate([H_pha, H_amp], axis=0)            # (F_pha + F_amp, L)
    F_pha, F_amp = pha_n_bands, amp_n_bands

    # --- band-pass filter bank (Pallas kernel 1) ---
    filtered = bandpass_filterbank(x2d, H, T, numtaps)     # (NS, F_tot, T), f32
    filtered = filtered.reshape(B * C, S, F_pha + F_amp, T)
    x_pha = filtered[:, :, :F_pha, :]                      # (BC, S, F_pha, T)
    x_amp = filtered[:, :, F_pha:, :]                      # (BC, S, F_amp, T)

    # --- Hilbert: phase of phase-bands, amplitude of amplitude-bands ---
    pha, _ = hilbert_phase_amp(x_pha)
    _, amp = hilbert_phase_amp(x_amp)

    # --- Modulation Index kernel (Pallas kernel 2, mean over segments) ---
    mi = modulation_index(pha, amp, n_bins, mxu_dtype=mi_mxu_dtype)  # (BC, F_pha, F_amp)
    return mi.reshape(B, C, F_pha, F_amp)


if __name__ == "__main__":
    B, C, S, T = 2, 2, 2, 256
    fs = 512.0
    F_pha, F_amp, n_bins, numtaps = 8, 16, 18, 65

    key = jax.random.PRNGKey(0)
    x = jax.random.normal(key, (B, C, S, T), dtype=jnp.float32)

    pac = pac_forward(
        x, fs=fs,
        pha_start_hz=2.0, pha_end_hz=20.0, pha_n_bands=F_pha,
        amp_start_hz=60.0, amp_end_hz=160.0, amp_n_bands=F_amp,
        n_bins=n_bins, numtaps=numtaps)
    pac = jax.block_until_ready(pac)

    assert pac.shape == (B, C, F_pha, F_amp), pac.shape
    assert bool(jnp.all(jnp.isfinite(pac)))
    print("KERNEL_OK")
</pallas_src>

<mosaic_0001>
module attributes {stable_mosaic.version = 11 : i64} {
  func.func @_bandpass_slice_kernel(%arg0: i32, %arg1: memref<8x384xf32, #tpu.memory_space<vmem>>, %arg2: memref<24x128xf32, #tpu.memory_space<vmem>>, %arg3: memref<8x24x256xf32, #tpu.memory_space<vmem>>) attributes {dimension_semantics = [#tpu.dimension_semantics<parallel>], iteration_bounds = array<i64: 1>, scalar_prefetch = 0 : i64, scratch_operands = 0 : i64, tpu.core_type = #tpu.core_type<tc>, window_params = [{transform_indices = @transform_0, window_bounds = array<i64: 8, 384>}, {pipeline_mode = #tpu.pipeline_mode<synchronous>, transform_indices = @transform_1, window_bounds = array<i64: 24, 128>}, {transform_indices = @transform_2, window_bounds = array<i64: 8, 24, 256>}]} {
    %c0 = arith.constant 0 : index
    %c0_0 = arith.constant 0 : index
    %0 = vector.load %arg2[%c0, %c0_0] : memref<24x128xf32, #tpu.memory_space<vmem>>, vector<24x128xf32>
    %c0_1 = arith.constant 0 : index
    %c0_2 = arith.constant 0 : index
    %1 = vector.load %arg1[%c0_1, %c0_2] : memref<8x384xf32, #tpu.memory_space<vmem>>, vector<1x256xf32>
    %c0_3 = arith.constant 0 : index
    %c1 = arith.constant 1 : index
    %2 = vector.load %arg1[%c0_3, %c1] : memref<8x384xf32, #tpu.memory_space<vmem>>, vector<1x256xf32>
    %c0_4 = arith.constant 0 : index
    %c2 = arith.constant 2 : index
    %3 = vector.load %arg1[%c0_4, %c2] : memref<8x384xf32, #tpu.memory_space<vmem>>, vector<1x256xf32>
    %c0_5 = arith.constant 0 : index
    %c3 = arith.constant 3 : index
    %4 = vector.load %arg1[%c0_5, %c3] : memref<8x384xf32, #tpu.memory_space<vmem>>, vector<1x256xf32>
    %c0_6 = arith.constant 0 : index
    %c4 = arith.constant 4 : index
    %5 = vector.load %arg1[%c0_6, %c4] : memref<8x384xf32, #tpu.memory_space<vmem>>, vector<1x256xf32>
    %c0_7 = arith.constant 0 : index
    %c5 = arith.constant 5 : index
    %6 = vector.load %arg1[%c0_7, %c5] : memref<8x384xf32, #tpu.memory_space<vmem>>, vector<1x256xf32>
    %c0_8 = arith.constant 0 : index
    %c6 = arith.constant 6 : index
    %7 = vector.load %arg1[%c0_8, %c6] : memref<8x384xf32, #tpu.memory_space<vmem>>, vector<1x256xf32>
    %c0_9 = arith.constant 0 : index
    %c7 = arith.constant 7 : index
    %8 = vector.load %arg1[%c0_9, %c7] : memref<8x384xf32, #tpu.memory_space<vmem>>, vector<1x256xf32>
    %c0_10 = arith.constant 0 : index
    %c8 = arith.constant 8 : index
    %9 = vector.load %arg1[%c0_10, %c8] : memref<8x384xf32, #tpu.memory_space<vmem>>, vector<1x256xf32>
    %c0_11 = arith.constant 0 : index
    %c9 = arith.constant 9 : index
    %10 = vector.load %arg1[%c0_11, %c9] : memref<8x384xf32, #tpu.memory_space<vmem>>, vector<1x256xf32>
    %c0_12 = arith.constant 0 : index
    %c10 = arith.constant 10 : index
    %11 = vector.load %arg1[%c0_12, %c10] : memref<8x384xf32, #tpu.memory_space<vmem>>, vector<1x256xf32>
    %c0_13 = arith.constant 0 : index
    %c11 = arith.constant 11 : index
    %12 = vector.load %arg1[%c0_13, %c11] : memref<8x384xf32, #tpu.memory_space<vmem>>, vector<1x256xf32>
    %c0_14 = arith.constant 0 : index
    %c12 = arith.constant 12 : index
    %13 = vector.load %arg1[%c0_14, %c12] : memref<8x384xf32, #tpu.memory_space<vmem>>, vector<1x256xf32>
    %c0_15 = arith.constant 0 : index
    %c13 = arith.constant 13 : index
    %14 = vector.load %arg1[%c0_15, %c13] : memref<8x384xf32, #tpu.memory_space<vmem>>, vector<1x256xf32>
    %c0_16 = arith.constant 0 : index
    %c14 = arith.constant 14 : index
    %15 = vector.load %arg1[%c0_16, %c14] : memref<8x384xf32, #tpu.memory_space<vmem>>, vector<1x256xf32>
    %c0_17 = arith.constant 0 : index
    %c15 = arith.constant 15 : index
    %16 = vector.load %arg1[%c0_17, %c15] : memref<8x384xf32, #tpu.memory_space<vmem>>, vector<1x256xf32>
    %c0_18 = arith.constant 0 : index
    %c16 = arith.constant 16 : index
    %17 = vector.load %arg1[%c0_18, %c16] : memref<8x384xf32, #tpu.memory_space<vmem>>, vector<1x256xf32>
    %c0_19 = arith.constant 0 : index
    %c17 = arith.constant 17 : index
    %18 = vector.load %arg1[%c0_19, %c17] : memref<8x384xf32, #tpu.memory_space<vmem>>, vector<1x256xf32>
    %c0_20 = arith.constant 0 : index
    %c18 = arith.constant 18 : index
    %19 = vector.load %arg1[%c0_20, %c18] : memref<8x384xf32, #tpu.memory_space<vmem>>, vector<1x256xf32>
    %c0_21 = arith.constant 0 : index
    %c19 = arith.constant 19 : index
    %20 = vector.load %arg1[%c0_21, %c19] : memref<8x384xf32, #tpu.memory_space<vmem>>, vector<1x256xf32>
    %c0_22 = arith.constant 0 : index
    %c20 = arith.constant 20 : index
    %21 = vector.load %arg1[%c0_22, %c20] : memref<8x384xf32, #tpu.memory_space<vmem>>, vector<1x256xf32>
    %c0_23 = arith.constant 0 : index
    %c21 = arith.constant 21 : index
    %22 = vector.load %arg1[%c0_23, %c21] : memref<8x384xf32, #tpu.memory_space<vmem>>, vector<1x256xf32>
    %c0_24 = arith.constant 0 : index
    %c22 = arith.constant 22 : index
    %23 = vector.load %arg1[%c0_24, %c22] : memref<8x384xf32, #tpu.memory_space<vmem>>, vector<1x256xf32>
    %c0_25 = arith.constant 0 : index
    %c23 = arith.constant 23 : index
    %24 = vector.load %arg1[%c0_25, %c23] : memref<8x384xf32, #tpu.memory_space<vmem>>, vector<1x256xf32>
    %c0_26 = arith.constant 0 : index
    %c24 = arith.constant 24 : index
    %25 = vector.load %arg1[%c0_26, %c24] : memref<8x384xf32, #tpu.memory_space<vmem>>, vector<1x256xf32>
    %c0_27 = arith.constant 0 : index
    %c25 = arith.constant 25 : index
    %26 = vector.load %arg1[%c0_27, %c25] : memref<8x384xf32, #tpu.memory_space<vmem>>, vector<1x256xf32>
    %c0_28 = arith.constant 0 : index
    %c26 = arith.constant 26 : index
    %27 = vector.load %arg1[%c0_28, %c26] : memref<8x384xf32, #tpu.memory_space<vmem>>, vector<1x256xf32>
    %c0_29 = arith.constant 0 : index
    %c27 = arith.constant 27 : index
    %28 = vector.load %arg1[%c0_29, %c27] : memref<8x384xf32, #tpu.memory_space<vmem>>, vector<1x256xf32>
    %c0_30 = arith.constant 0 : index
    %c28 = arith.constant 28 : index
    %29 = vector.load %arg1[%c0_30, %c28] : memref<8x384xf32, #tpu.memory_space<vmem>>, vector<1x256xf32>
    %c0_31 = arith.constant 0 : index
    %c29 = arith.constant 29 : index
    %30 = vector.load %arg1[%c0_31, %c29] : memref<8x384xf32, #tpu.memory_space<vmem>>, vector<1x256xf32>
    %c0_32 = arith.constant 0 : index
    %c30 = arith.constant 30 : index
    %31 = vector.load %arg1[%c0_32, %c30] : memref<8x384xf32, #tpu.memory_space<vmem>>, vector<1x256xf32>
    %c0_33 = arith.constant 0 : index
    %c31 = arith.constant 31 : index
    %32 = vector.load %arg1[%c0_33, %c31] : memref<8x384xf32, #tpu.memory_space<vmem>>, vector<1x256xf32>
    %c0_34 = arith.constant 0 : index
    %c32 = arith.constant 32 : index
    %33 = vector.load %arg1[%c0_34, %c32] : memref<8x384xf32, #tpu.memory_space<vmem>>, vector<1x256xf32>
    %c0_35 = arith.constant 0 : index
    %c33 = arith.constant 33 : index
    %34 = vector.load %arg1[%c0_35, %c33] : memref<8x384xf32, #tpu.memory_space<vmem>>, vector<1x256xf32>
    %c0_36 = arith.constant 0 : index
    %c34 = arith.constant 34 : index
    %35 = vector.load %arg1[%c0_36, %c34] : memref<8x384xf32, #tpu.memory_space<vmem>>, vector<1x256xf32>
    %c0_37 = arith.constant 0 : index
    %c35 = arith.constant 35 : index
    %36 = vector.load %arg1[%c0_37, %c35] : memref<8x384xf32, #tpu.memory_space<vmem>>, vector<1x256xf32>
    %c0_38 = arith.constant 0 : index
    %c36 = arith.constant 36 : index
    %37 = vector.load %arg1[%c0_38, %c36] : memref<8x384xf32, #tpu.memory_space<vmem>>, vector<1x256xf32>
    %c0_39 = arith.constant 0 : index
    %c37 = arith.constant 37 : index
    %38 = vector.load %arg1[%c0_39, %c37] : memref<8x384xf32, #tpu.memory_space<vmem>>, vector<1x256xf32>
    %c0_40 = arith.constant 0 : index
    %c38 = arith.constant 38 : index
    %39 = vector.load %arg1[%c0_40, %c38] : memref<8x384xf32, #tpu.memory_space<vmem>>, vector<1x256xf32>
    %c0_41 = arith.constant 0 : index
    %c39 = arith.constant 39 : index
    %40 = vector.load %arg1[%c0_41, %c39] : memref<8x384xf32, #tpu.memory_space<vmem>>, vector<1x256xf32>
    %c0_42 = arith.constant 0 : index
    %c40 = arith.constant 40 : index
    %41 = vector.load %arg1[%c0_42, %c40] : memref<8x384xf32, #tpu.memory_space<vmem>>, vector<1x256xf32>
    %c0_43 = arith.constant 0 : index
    %c41 = arith.constant 41 : index
    %42 = vector.load %arg1[%c0_43, %c41] : memref<8x384xf32, #tpu.memory_space<vmem>>, vector<1x256xf32>
    %c0_44 = arith.constant 0 : index
    %c42 = arith.constant 42 : index
    %43 = vector.load %arg1[%c0_44, %c42] : memref<8x384xf32, #tpu.memory_space<vmem>>, vector<1x256xf32>
    %c0_45 = arith.constant 0 : index
    %c43 = arith.constant 43 : index
    %44 = vector.load %arg1[%c0_45, %c43] : memref<8x384xf32, #tpu.memory_space<vmem>>, vector<1x256xf32>
    %c0_46 = arith.constant 0 : index
    %c44 = arith.constant 44 : index
    %45 = vector.load %arg1[%c0_46, %c44] : memref<8x384xf32, #tpu.memory_space<vmem>>, vector<1x256xf32>
    %c0_47 = arith.constant 0 : index
    %c45 = arith.constant 45 : index
    %46 = vector.load %arg1[%c0_47, %c45] : memref<8x384xf32, #tpu.memory_space<vmem>>, vector<1x256xf32>
    %c0_48 = arith.constant 0 : index
    %c46 = arith.constant 46 : index
    %47 = vector.load %arg1[%c0_48, %c46] : memref<8x384xf32, #tpu.memory_space<vmem>>, vector<1x256xf32>
    %c0_49 = arith.constant 0 : index
    %c47 = arith.constant 47 : index
    %48 = vector.load %arg1[%c0_49, %c47] : memref<8x384xf32, #tpu.memory_space<vmem>>, vector<1x256xf32>
    %c0_50 = arith.constant 0 : index
    %c48 = arith.constant 48 : index
    %49 = vector.load %arg1[%c0_50, %c48] : memref<8x384xf32, #tpu.memory_space<vmem>>, vector<1x256xf32>
    %c0_51 = arith.constant 0 : index
    %c49 = arith.constant 49 : index
    %50 = vector.load %arg1[%c0_51, %c49] : memref<8x384xf32, #tpu.memory_space<vmem>>, vector<1x256xf32>
    %c0_52 = arith.constant 0 : index
    %c50 = arith.constant 50 : index
    %51 = vector.load %arg1[%c0_52, %c50] : memref<8x384xf32, #tpu.memory_space<vmem>>, vector<1x256xf32>
    %c0_53 = arith.constant 0 : index
    %c51 = arith.constant 51 : index
    %52 = vector.load %arg1[%c0_53, %c51] : memref<8x384xf32, #tpu.memory_space<vmem>>, vector<1x256xf32>
    %c0_54 = arith.constant 0 : index
    %c52 = arith.constant 52 : index
    %53 = vector.load %arg1[%c0_54, %c52] : memref<8x384xf32, #tpu.memory_space<vmem>>, vector<1x256xf32>
    %c0_55 = arith.constant 0 : index
    %c53 = arith.constant 53 : index
    %54 = vector.load %arg1[%c0_55, %c53] : memref<8x384xf32, #tpu.memory_space<vmem>>, vector<1x256xf32>
    %c0_56 = arith.constant 0 : index
    %c54 = arith.constant 54 : index
    %55 = vector.load %arg1[%c0_56, %c54] : memref<8x384xf32, #tpu.memory_space<vmem>>, vector<1x256xf32>
    %c0_57 = arith.constant 0 : index
    %c55 = arith.constant 55 : index
    %56 = vector.load %arg1[%c0_57, %c55] : memref<8x384xf32, #tpu.memory_space<vmem>>, vector<1x256xf32>
    %c0_58 = arith.constant 0 : index
    %c56 = arith.constant 56 : index
    %57 = vector.load %arg1[%c0_58, %c56] : memref<8x384xf32, #tpu.memory_space<vmem>>, vector<1x256xf32>
    %c0_59 = arith.constant 0 : index
    %c57 = arith.constant 57 : index
    %58 = vector.load %arg1[%c0_59, %c57] : memref<8x384xf32, #tpu.memory_space<vmem>>, vector<1x256xf32>
    %c0_60 = arith.constant 0 : index
    %c58 = arith.constant 58 : index
    %59 = vector.load %arg1[%c0_60, %c58] : memref<8x384xf32, #tpu.memory_space<vmem>>, vector<1x256xf32>
    %c0_61 = arith.constant 0 : index
    %c59 = arith.constant 59 : index
    %60 = vector.load %arg1[%c0_61, %c59] : memref<8x384xf32, #tpu.memory_space<vmem>>, vector<1x256xf32>
    %c0_62 = arith.constant 0 : index
    %c60 = arith.constant 60 : index
    %61 = vector.load %arg1[%c0_62, %c60] : memref<8x384xf32, #tpu.memory_space<vmem>>, vector<1x256xf32>
    %c0_63 = arith.constant 0 : index
    %c61 = arith.constant 61 : index
    %62 = vector.load %arg1[%c0_63, %c61] : memref<8x384xf32, #tpu.memory_space<vmem>>, vector<1x256xf32>
    %c0_64 = arith.constant 0 : index
    %c62 = arith.constant 62 : index
    %63 = vector.load %arg1[%c0_64, %c62] : memref<8x384xf32, #tpu.memory_space<vmem>>, vector<1x256xf32>
    %c0_65 = arith.constant 0 : index
    %c63 = arith.constant 63 : index
    %64 = vector.load %arg1[%c0_65, %c63] : memref<8x384xf32, #tpu.memory_space<vmem>>, vector<1x256xf32>
    %c0_66 = arith.constant 0 : index
    %c64 = arith.constant 64 : index
    %65 = vector.load %arg1[%c0_66, %c64] : memref<8x384xf32, #tpu.memory_space<vmem>>, vector<1x256xf32>
    %66 = tpu.concatenate %1, %2, %3, %4, %5, %6, %7, %8, %9, %10, %11, %12, %13, %14, %15, %16 in 0 : vector<1x256xf32>, vector<1x256xf32>, vector<1x256xf32>, vector<1x256xf32>, vector<1x256xf32>, vector<1x256xf32>, vector<1x256xf32>, vector<1x256xf32>, vector<1x256xf32>, vector<1x256xf32>, vector<1x256xf32>, vector<1x256xf32>, vector<1x256xf32>, vector<1x256xf32>, vector<1x256xf32>, vector<1x256xf32> -> vector<16x256xf32>
    %67 = tpu.concatenate %17, %18, %19, %20, %21, %22, %23, %24, %25, %26, %27, %28, %29, %30, %31, %32 in 0 : vector<1x256xf32>, vector<1x256xf32>, vector<1x256xf32>, vector<1x256xf32>, vector<1x256xf32>, vector<1x256xf32>, vector<1x256xf32>, vector<1x256xf32>, vector<1x256xf32>, vector<1x256xf32>, vector<1x256xf32>, vector<1x256xf32>, vector<1x256xf32>, vector<1x256xf32>, vector<1x256xf32>, vector<1x256xf32> -> vector<16x256xf32>
    %68 = tpu.concatenate %33, %34, %35, %36, %37, %38, %39, %40, %41, %42, %43, %44, %45, %46, %47, %48 in 0 : vector<1x256xf32>, vector<1x256xf32>, vector<1x256xf32>, vector<1x256xf32>, vector<1x256xf32>, vector<1x256xf32>, vector<1x256xf32>, vector<1x256xf32>, vector<1x256xf32>, vector<1x256xf32>, vector<1x256xf32>, vector<1x256xf32>, vector<1x256xf32>, vector<1x256xf32>, vector<1x256xf32>, vector<1x256xf32> -> vector<16x256xf32>
    %69 = tpu.concatenate %49, %50, %51, %52, %53, %54, %55, %56, %57, %58, %59, %60, %61, %62, %63, %64 in 0 : vector<1x256xf32>, vector<1x256xf32>, vector<1x256xf32>, vector<1x256xf32>, vector<1x256xf32>, vector<1x256xf32>, vector<1x256xf32>, vector<1x256xf32>, vector<1x256xf32>, vector<1x256xf32>, vector<1x256xf32>, vector<1x256xf32>, vector<1x256xf32>, vector<1x256xf32>, vector<1x256xf32>, vector<1x256xf32> -> vector<16x256xf32>
    %70 = tpu.concatenate %66, %67, %68, %69, %65 in 0 : vector<16x256xf32>, vector<16x256xf32>, vector<16x256xf32>, vector<16x256xf32>, vector<1x256xf32> -> vector<65x256xf32>
    %71 = vector.extract_strided_slice %0 {offsets = [0, 0], sizes = [24, 65], strides = [1, 1]} : vector<24x128xf32> to vector<24x65xf32>
    %cst = arith.constant dense<0.000000e+00> : vector<24x256xf32>
    %72 = tpu.matmul %71, %70, %cst {dimension_numbers = #tpu.dot_dimension_numbers<[1], [0], [0], [1], [0, 0, 1, 1], [], []>} : vector<24x65xf32>, vector<65x256xf32>, vector<24x256xf32> -> vector<24x256xf32>
    %c0_67 = arith.constant 0 : index
    %c0_68 = arith.constant 0 : index
    %c0_69 = arith.constant 0 : index
    %73 = vector.load %arg3[%c0_67, %c0_68, %c0_69] : memref<8x24x256xf32, #tpu.memory_space<vmem>>, vector<1x24x256xf32>
    %74 = vector.shape_cast %73 : vector<1x24x256xf32> to vector<24x256xf32>
    %75 = vector.shape_cast %72 : vector<24x256xf32> to vector<1x24x256xf32>
    tpu.vector_store %arg3[%c0_67, %c0_68, %c0_69], %75 {strides = array<i32>} : memref<8x24x256xf32, #tpu.memory_space<vmem>>, vector<1x24x256xf32>,
    %c1_70 = arith.constant 1 : index
    %c0_71 = arith.constant 0 : index
    %76 = vector.load %arg1[%c1_70, %c0_71] : memref<8x384xf32, #tpu.memory_space<vmem>>, vector<1x256xf32>
    %c1_72 = arith.constant 1 : index
    %c1_73 = arith.constant 1 : index
    %77 = vector.load %arg1[%c1_72, %c1_73] : memref<8x384xf32, #tpu.memory_space<vmem>>, vector<1x256xf32>
    %c1_74 = arith.constant 1 : index
    %c2_75 = arith.constant 2 : index
    %78 = vector.load %arg1[%c1_74, %c2_75] : memref<8x384xf32, #tpu.memory_space<vmem>>, vector<1x256xf32>
    %c1_76 = arith.constant 1 : index
    %c3_77 = arith.constant 3 : index
    %79 = vector.load %arg1[%c1_76, %c3_77] : memref<8x384xf32, #tpu.memory_space<vmem>>, vector<1x256xf32>
    %c1_78 = arith.constant 1 : index
    %c4_79 = arith.constant 4 : index
    %80 = vector.load %arg1[%c1_78, %c4_79] : memref<8x384xf32, #tpu.memory_space<vmem>>, vector<1x256xf32>
    %c1_80 = arith.constant 1 : index
    %c5_81 = arith.constant 5 : index
    %81 = vector.load %arg1[%c1_80, %c5_81] : memref<8x384xf32, #tpu.memory_space<vmem>>, vector<1x256xf32>
    %c1_82 = arith.constant 1 : index
    %c6_83 = arith.constant 6 : index
    %82 = vector.load %arg1[%c1_82, %c6_83] : memref<8x384xf32, #tpu.memory_space<vmem>>, vector<1x256xf32>
    %c1_84 = arith.constant 1 : index
    %c7_85 = arith.constant 7 : index
    %83 = vector.load %arg1[%c1_84, %c7_85] : memref<8x384xf32, #tpu.memory_space<vmem>>, vector<1x256xf32>
    %c1_86 = arith.constant 1 : index
    %c8_87 = arith.constant 8 : index
    %84 = vector.load %arg1[%c1_86, %c8_87] : memref<8x384xf32, #tpu.memory_space<vmem>>, vector<1x256xf32>
    %c1_88 = arith.constant 1 : index
    %c9_89 = arith.constant 9 : index
    %85 = vector.load %arg1[%c1_88, %c9_89] : memref<8x384xf32, #tpu.memory_space<vmem>>, vector<1x256xf32>
    %c1_90 = arith.constant 1 : index
    %c10_91 = arith.constant 10 : index
    %86 = vector.load %arg1[%c1_90, %c10_91] : memref<8x384xf32, #tpu.memory_space<vmem>>, vector<1x256xf32>
    %c1_92 = arith.constant 1 : index
    %c11_93 = arith.constant 11 : index
    %87 = vector.load %arg1[%c1_92, %c11_93] : memref<8x384xf32, #tpu.memory_space<vmem>>, vector<1x256xf32>
    %c1_94 = arith.constant 1 : index
    %c12_95 = arith.constant 12 : index
    %88 = vector.load %arg1[%c1_94, %c12_95] : memref<8x384xf32, #tpu.memory_space<vmem>>, vector<1x256xf32>
    %c1_96 = arith.constant 1 : index
    %c13_97 = arith.constant 13 : index
    %89 = vector.load %arg1[%c1_96, %c13_97] : memref<8x384xf32, #tpu.memory_space<vmem>>, vector<1x256xf32>
    %c1_98 = arith.constant 1 : index
    %c14_99 = arith.constant 14 : index
    %90 = vector.load %arg1[%c1_98, %c14_99] : memref<8x384xf32, #tpu.memory_space<vmem>>, vector<1x256xf32>
    %c1_100 = arith.constant 1 : index
    %c15_101 = arith.constant 15 : index
    %91 = vector.load %arg1[%c1_100, %c15_101] : memref<8x384xf32, #tpu.memory_space<vmem>>, vector<1x256xf32>
    %c1_102 = arith.constant 1 : index
    %c16_103 = arith.constant 16 : index
    %92 = vector.load %arg1[%c1_102, %c16_103] : memref<8x384xf32, #tpu.memory_space<vmem>>, vector<1x256xf32>
    %c1_104 = arith.constant 1 : index
    %c17_105 = arith.constant 17 : index
    %93 = vector.load %arg1[%c1_104, %c17_105] : memref<8x384xf32, #tpu.memory_space<vmem>>, vector<1x256xf32>
    %c1_106 = arith.constant 1 : index
    %c18_107 = arith.constant 18 : index
    %94 = vector.load %arg1[%c1_106, %c18_107] : memref<8x384xf32, #tpu.memory_space<vmem>>, vector<1x256xf32>
    %c1_108 = arith.constant 1 : index
    %c19_109 = arith.constant 19 : index
    %95 = vector.load %arg1[%c1_108, %c19_109] : memref<8x384xf32, #tpu.memory_space<vmem>>, vector<1x256xf32>
    %c1_110 = arith.constant 1 : index
    %c20_111 = arith.constant 20 : index
    %96 = vector.load %arg1[%c1_110, %c20_111] : memref<8x384xf32, #tpu.memory_space<vmem>>, vector<1x256xf32>
    %c1_112 = arith.constant 1 : index
    %c21_113 = arith.constant 21 : index
    %97 = vector.load %arg1[%c1_112, %c21_113] : memref<8x384xf32, #tpu.memory_space<vmem>>, vector<1x256xf32>
    %c1_114 = arith.constant 1 : index
    %c22_115 = arith.constant 22 : index
    %98 = vector.load %arg1[%c1_114, %c22_115] : memref<8x384xf32, #tpu.memory_space<vmem>>, vector<1x256xf32>
    %c1_116 = arith.constant 1 : index
    %c23_117 = arith.constant 23 : index
    %99 = vector.load %arg1[%c1_116, %c23_117] : memref<8x384xf32, #tpu.memory_space<vmem>>, vector<1x256xf32>
    %c1_118 = arith.constant 1 : index
    %c24_119 = arith.constant 24 : index
    %100 = vector.load %arg1[%c1_118, %c24_119] : memref<8x384xf32, #tpu.memory_space<vmem>>, vector<1x256xf32>
    %c1_120 = arith.constant 1 : index
    %c25_121 = arith.constant 25 : index
    %101 = vector.load %arg1[%c1_120, %c25_121] : memref<8x384xf32, #tpu.memory_space<vmem>>, vector<1x256xf32>
    %c1_122 = arith.constant 1 : index
    %c26_123 = arith.constant 26 : index
    %102 = vector.load %arg1[%c1_122, %c26_123] : memref<8x384xf32, #tpu.memory_space<vmem>>, vector<1x256xf32>
    %c1_124 = arith.constant 1 : index
    %c27_125 = arith.constant 27 : index
    %103 = vector.load %arg1[%c1_124, %c27_125] : memref<8x384xf32, #tpu.memory_space<vmem>>, vector<1x256xf32>
    %c1_126 = arith.constant 1 : index
    %c28_127 = arith.constant 28 : index
    %104 = vector.load %arg1[%c1_126, %c28_127] : memref<8x384xf32, #tpu.memory_space<vmem>>, vector<1x256xf32>
    %c1_128 = arith.constant 1 : index
    %c29_129 = arith.constant 29 : index
    %105 = vector.load %arg1[%c1_128, %c29_129] : memref<8x384xf32, #tpu.memory_space<vmem>>, vector<1x256xf32>
    %c1_130 = arith.constant 1 : index
    %c30_131 = arith.constant 30 : index
    %106 = vector.load %arg1[%c1_130, %c30_131] : memref<8x384xf32, #tpu.memory_space<vmem>>, vector<1x256xf32>
    %c1_132 = arith.constant 1 : index
    %c31_133 = arith.constant 31 : index
    %107 = vector.load %arg1[%c1_132, %c31_133] : memref<8x384xf32, #tpu.memory_space<vmem>>, vector<1x256xf32>
    %c1_134 = arith.constant 1 : index
    %c32_135 = arith.constant 32 : index
    %108 = vector.load %arg1[%c1_134, %c32_135] : memref<8x384xf32, #tpu.memory_space<vmem>>, vector<1x256xf32>
    %c1_136 = arith.constant 1 : index
    %c33_137 = arith.constant 33 : index
    %109 = vector.load %arg1[%c1_136, %c33_137] : memref<8x384xf32, #tpu.memory_space<vmem>>, vector<1x256xf32>
    %c1_138 = arith.constant 1 : index
    %c34_139 = arith.constant 34 : index
    %110 = vector.load %arg1[%c1_138, %c34_139] : memref<8x384xf32, #tpu.memory_space<vmem>>, vector<1x256xf32>
    %c1_140 = arith.constant 1 : index
    %c35_141 = arith.constant 35 : index
    %111 = vector.load %arg1[%c1_140, %c35_141] : memref<8x384xf32, #tpu.memory_space<vmem>>, vector<1x256xf32>
    %c1_142 = arith.constant 1 : index
    %c36_143 = arith.constant 36 : index
    %112 = vector.load %arg1[%c1_142, %c36_143] : memref<8x384xf32, #tpu.memory_space<vmem>>, vector<1x256xf32>
    %c1_144 = arith.constant 1 : index
    %c37_145 = arith.constant 37 : index
    %113 = vector.load %arg1[%c1_144, %c37_145] : memref<8x384xf32, #tpu.memory_space<vmem>>, vector<1x256xf32>
    %c1_146 = arith.constant 1 : index
    %c38_147 = arith.constant 38 : index
    %114 = vector.load %arg1[%c1_146, %c38_147] : memref<8x384xf32, #tpu.memory_space<vmem>>, vector<1x256xf32>
    %c1_148 = arith.constant 1 : index
    %c39_149 = arith.constant 39 : index
    %115 = vector.load %arg1[%c1_148, %c39_149] : memref<8x384xf32, #tpu.memory_space<vmem>>, vector<1x256xf32>
    %c1_150 = arith.constant 1 : index
    %c40_151 = arith.constant 40 : index
    %116 = vector.load %arg1[%c1_150, %c40_151] : memref<8x384xf32, #tpu.memory_space<vmem>>, vector<1x256xf32>
    %c1_152 = arith.constant 1 : index
    %c41_153 = arith.constant 41 : index
    %117 = vector.load %arg1[%c1_152, %c41_153] : memref<8x384xf32, #tpu.memory_space<vmem>>, vector<1x256xf32>
    %c1_154 = arith.constant 1 : index
    %c42_155 = arith.constant 42 : index
    %118 = vector.load %arg1[%c1_154, %c42_155] : memref<8x384xf32, #tpu.memory_space<vmem>>, vector<1x256xf32>
    %c1_156 = arith.constant 1 : index
    %c43_157 = arith.constant 43 : index
    %119 = vector.load %arg1[%c1_156, %c43_157] : memref<8x384xf32, #tpu.memory_space<vmem>>, vector<1x256xf32>
    %c1_158 = arith.constant 1 : index
    %c44_159 = arith.constant 44 : index
    %120 = vector.load %arg1[%c1_158, %c44_159] : memref<8x384xf32, #tpu.memory_space<vmem>>, vector<1x256xf32>
    %c1_160 = arith.constant 1 : index
    %c45_161 = arith.constant 45 : index
    %121 = vector.load %arg1[%c1_160, %c45_161] : memref<8x384xf32, #tpu.memory_space<vmem>>, vector<1x256xf32>
    %c1_162 = arith.constant 1 : index
    %c46_163 = arith.constant 46 : index
    %122 = vector.load %arg1[%c1_162, %c46_163] : memref<8x384xf32, #tpu.memory_space<vmem>>, vector<1x256xf32>
    %c1_164 = arith.constant 1 : index
    %c47_165 = arith.constant 47 : index
    %123 = vector.load %arg1[%c1_164, %c47_165] : memref<8x384xf32, #tpu.memory_space<vmem>>, vector<1x256xf32>
    %c1_166 = arith.constant 1 : index
    %c48_167 = arith.constant 48 : index
    %124 = vector.load %arg1[%c1_166, %c48_167] : memref<8x384xf32, #tpu.memory_space<vmem>>, vector<1x256xf32>
    %c1_168 = arith.constant 1 : index
    %c49_169 = arith.constant 49 : index
    %125 = vector.load %arg1[%c1_168, %c49_169] : memref<8x384xf32, #tpu.memory_space<vmem>>, vector<1x256xf32>
    %c1_170 = arith.constant 1 : index
    %c50_171 = arith.constant 50 : index
    %126 = vector.load %arg1[%c1_170, %c50_171] : memref<8x384xf32, #tpu.memory_space<vmem>>, vector<1x256xf32>
    %c1_172 = arith.constant 1 : index
    %c51_173 = arith.constant 51 : index
    %127 = vector.load %arg1[%c1_172, %c51_173] : memref<8x384xf32, #tpu.memory_space<vmem>>, vector<1x256xf32>
    %c1_174 = arith.constant 1 : index
    %c52_175 = arith.constant 52 : index
    %128 = vector.load %arg1[%c1_174, %c52_175] : memref<8x384xf32, #tpu.memory_space<vmem>>, vector<1x256xf32>
    %c1_176 = arith.constant 1 : index
    %c53_177 = arith.constant 53 : index
    %129 = vector.load %arg1[%c1_176, %c53_177] : memref<8x384xf32, #tpu.memory_space<vmem>>, vector<1x256xf32>
    %c1_178 = arith.constant 1 : index
    %c54_179 = arith.constant 54 : index
    %130 = vector.load %arg1[%c1_178, %c54_179] : memref<8x384xf32, #tpu.memory_space<vmem>>, vector<1x256xf32>
    %c1_180 = arith.constant 1 : index
    %c55_181 = arith.constant 55 : index
    %131 = vector.load %arg1[%c1_180, %c55_181] : memref<8x384xf32, #tpu.memory_space<vmem>>, vector<1x256xf32>
    %c1_182 = arith.constant 1 : index
    %c56_183 = arith.constant 56 : index
    %132 = vector.load %arg1[%c1_182, %c56_183] : memref<8x384xf32, #tpu.memory_space<vmem>>, vector<1x256xf32>
    %c1_184 = arith.constant 1 : index
    %c57_185 = arith.constant 57 : index
    %133 = vector.load %arg1[%c1_184, %c57_185] : memref<8x384xf32, #tpu.memory_space<vmem>>, vector<1x256xf32>
    %c1_186 = arith.constant 1 : index
    %c58_187 = arith.constant 58 : index
    %134 = vector.load %arg1[%c1_186, %c58_187] : memref<8x384xf32, #tpu.memory_space<vmem>>, vector<1x256xf32>
    %c1_188 = arith.constant 1 : index
    %c59_189 = arith.constant 59 : index
    %135 = vector.load %arg1[%c1_188, %c59_189] : memref<8x384xf32, #tpu.memory_space<vmem>>, vector<1x256xf32>
    %c1_190 = arith.constant 1 : index
    %c60_191 = arith.constant 60 : index
    %136 = vector.load %arg1[%c1_190, %c60_191] : memref<8x384xf32, #tpu.memory_space<vmem>>, vector<1x256xf32>
    %c1_192 = arith.constant 1 : index
    %c61_193 = arith.constant 61 : index
    %137 = vector.load %arg1[%c1_192, %c61_193] : memref<8x384xf32, #tpu.memory_space<vmem>>, vector<1x256xf32>
    %c1_194 = arith.constant 1 : index
    %c62_195 = arith.constant 62 : index
    %138 = vector.load %arg1[%c1_194, %c62_195] : memref<8x384xf32, #tpu.memory_space<vmem>>, vector<1x256xf32>
    %c1_196 = arith.constant 1 : index
    %c63_197 = arith.constant 63 : index
    %139 = vector.load %arg1[%c1_196, %c63_197] : memref<8x384xf32, #tpu.memory_space<vmem>>, vector<1x256xf32>
    %c1_198 = arith.constant 1 : index
    %c64_199 = arith.constant 64 : index
    %140 = vector.load %arg1[%c1_198, %c64_199] : memref<8x384xf32, #tpu.memory_space<vmem>>, vector<1x256xf32>
    %141 = tpu.concatenate %76, %77, %78, %79, %80, %81, %82, %83, %84, %85, %86, %87, %88, %89, %90, %91 in 0 : vector<1x256xf32>, vector<1x256xf32>, vector<1x256xf32>, vector<1x256xf32>, vector<1x256xf32>, vector<1x256xf32>, vector<1x256xf32>, vector<1x256xf32>, vector<1x256xf32>, vector<1x256xf32>, vector<1x256xf32>, vector<1x256xf32>, vector<1x256xf32>, vector<1x256xf32>, vector<1x256xf32>, vector<1x256xf32> -> vector<16x256xf32>
    %142 = tpu.concatenate %92, %93, %94, %95, %96, %97, %98, %99, %100, %101, %102, %103, %104, %105, %106, %107 in 0 : vector<1x256xf32>, vector<1x256xf32>, vector<1x256xf32>, vector<1x256xf32>, vector<1x256xf32>, vector<1x256xf32>, vector<1x256xf32>, vector<1x256xf32>, vector<1x256xf32>, vector<1x256xf32>, vector<1x256xf32>, vector<1x256xf32>, vector<1x256xf32>, vector<1x256xf32>, vector<1x256xf32>, vector<1x256xf32> -> vector<16x256xf32>
    %143 = tpu.concatenate %108, %109, %110, %111, %112, %113, %114, %115, %116, %117, %118, %119, %120, %121, %122, %123 in 0 : vector<1x256xf32>, vector<1x256xf32>, vector<1x256xf32>, vector<1x256xf32>, vector<1x256xf32>, vector<1x256xf32>, vector<1x256xf32>, vector<1x256xf32>, vector<1x256xf32>, vector<1x256xf32>, vector<1x256xf32>, vector<1x256xf32>, vector<1x256xf32>, vector<1x256xf32>, vector<1x256xf32>, vector<1x256xf32> -> vector<16x256xf32>
    %144 = tpu.concatenate %124, %125, %126, %127, %128, %129, %130, %131, %132, %133, %134, %135, %136, %137, %138, %139 in 0 : vector<1x256xf32>, vector<1x256xf32>, vector<1x256xf32>, vector<1x256xf32>, vector<1x256xf32>, vector<1x256xf32>, vector<1x256xf32>, vector<1x256xf32>, vector<1x256xf32>, vector<1x256xf32>, vector<1x256xf32>, vector<1x256xf32>, vector<1x256xf32>, vector<1x256xf32>, vector<1x256xf32>, vector<1x256xf32> -> vector<16x256xf32>
    %145 = tpu.concatenate %141, %142, %143, %144, %140 in 0 : vector<16x256xf32>, vector<16x256xf32>, vector<16x256xf32>, vector<16x256xf32>, vector<1x256xf32> -> vector<65x256xf32>
    %146 = vector.extract_strided_slice %0 {offsets = [0, 0], sizes = [24, 65], strides = [1, 1]} : vector<24x128xf32> to vector<24x65xf32>
    %cst_200 = arith.constant dense<0.000000e+00> : vector<24x256xf32>
    %147 = tpu.matmul %146, %145, %cst_200 {dimension_numbers = #tpu.dot_dimension_numbers<[1], [0], [0], [1], [0, 0, 1, 1], [], []>} : vector<24x65xf32>, vector<65x256xf32>, vector<24x256xf32> -> vector<24x256xf32>
    %c1_201 = arith.constant 1 : index
    %c0_202 = arith.constant 0 : index
    %c0_203 = arith.constant 0 : index
    %148 = vector.load %arg3[%c1_201, %c0_202, %c0_203] : memref<8x24x256xf32, #tpu.memory_space<vmem>>, vector<1x24x256xf32>
    %149 = vector.shape_cast %148 : vector<1x24x256xf32> to vector<24x256xf32>
    %150 = vector.shape_cast %147 : vector<24x256xf32> to vector<1x24x256xf32>
    tpu.vector_store %arg3[%c1_201, %c0_202, %c0_203], %150 {strides = array<i32>} : memref<8x24x256xf32, #tpu.memory_space<vmem>>, vector<1x24x256xf32>,
    %c2_204 = arith.constant 2 : index
    %c0_205 = arith.constant 0 : index
    %151 = vector.load %arg1[%c2_204, %c0_205] : memref<8x384xf32, #tpu.memory_space<vmem>>, vector<1x256xf32>
    %c2_206 = arith.constant 2 : index
    %c1_207 = arith.constant 1 : index
    %152 = vector.load %arg1[%c2_206, %c1_207] : memref<8x384xf32, #tpu.memory_space<vmem>>, vector<1x256xf32>
    %c2_208 = arith.constant 2 : index
    %c2_209 = arith.constant 2 : index
    %153 = vector.load %arg1[%c2_208, %c2_209] : memref<8x384xf32, #tpu.memory_space<vmem>>, vector<1x256xf32>
    %c2_210 = arith.constant 2 : index
    %c3_211 = arith.constant 3 : index
    %154 = vector.load %arg1[%c2_210, %c3_211] : memref<8x384xf32, #tpu.memory_space<vmem>>, vector<1x256xf32>
    %c2_212 = arith.constant 2 : index
    %c4_213 = arith.constant 4 : index
    %155 = vector.load %arg1[%c2_212, %c4_213] : memref<8x384xf32, #tpu.memory_space<vmem>>, vector<1x256xf32>
    %c2_214 = arith.constant 2 : index
    %c5_215 = arith.constant 5 : index
    %156 = vector.load %arg1[%c2_214, %c5_215] : memref<8x384xf32, #tpu.memory_space<vmem>>, vector<1x256xf32>
    %c2_216 = arith.constant 2 : index
    %c6_217 = arith.constant 6 : index
    %157 = vector.load %arg1[%c2_216, %c6_217] : memref<8x384xf32, #tpu.memory_space<vmem>>, vector<1x256xf32>
    %c2_218 = arith.constant 2 : index
    %c7_219 = arith.constant 7 : index
    %158 = vector.load %arg1[%c2_218, %c7_219] : memref<8x384xf32, #tpu.memory_space<vmem>>, vector<1x256xf32>
    %c2_220 = arith.constant 2 : index
    %c8_221 = arith.constant 8 : index
    %159 = vector.load %arg1[%c2_220, %c8_221] : memref<8x384xf32, #tpu.memory_space<vmem>>, vector<1x256xf32>
    %c2_222 = arith.constant 2 : index
    %c9_223 = arith.constant 9 : index
    %160 = vector.load %arg1[%c2_222, %c9_223] : memref<8x384xf32, #tpu.memory_space<vmem>>, vector<1x256xf32>
    %c2_224 = arith.constant 2 : index
    %c10_225 = arith.constant 10 : index
    %161 = vector.load %arg1[%c2_224, %c10_225] : memref<8x384xf32, #tpu.memory_space<vmem>>, vector<1x256xf32>
    %c2_226 = arith.constant 2 : index
    %c11_227 = arith.constant 11 : index
    %162 = vector.load %arg1[%c2_226, %c11_227] : memref<8x384xf32, #tpu.memory_space<vmem>>, vector<1x256xf32>
    %c2_228 = arith.constant 2 : index
    %c12_229 = arith.constant 12 : index
    %163 = vector.load %arg1[%c2_228, %c12_229] : memref<8x384xf32, #tpu.memory_space<vmem>>, vector<1x256xf32>
    %c2_230 = arith.constant 2 : index
    %c13_231 = arith.constant 13 : index
    %164 = vector.load %arg1[%c2_230, %c13_231] : memref<8x384xf32, #tpu.memory_space<vmem>>, vector<1x256xf32>
    %c2_232 = arith.constant 2 : index
    %c14_233 = arith.constant 14 : index
    %165 = vector.load %arg1[%c2_232, %c14_233] : memref<8x384xf32, #tpu.memory_space<vmem>>, vector<1x256xf32>
    %c2_234 = arith.constant 2 : index
    %c15_235 = arith.constant 15 : index
    %166 = vector.load %arg1[%c2_234, %c15_235] : memref<8x384xf32, #tpu.memory_space<vmem>>, vector<1x256xf32>
    %c2_236 = arith.constant 2 : index
    %c16_237 = arith.constant 16 : index
    %167 = vector.load %arg1[%c2_236, %c16_237] : memref<8x384xf32, #tpu.memory_space<vmem>>, vector<1x256xf32>
    %c2_238 = arith.constant 2 : index
    %c17_239 = arith.constant 17 : index
    %168 = vector.load %arg1[%c2_238, %c17_239] : memref<8x384xf32, #tpu.memory_space<vmem>>, vector<1x256xf32>
    %c2_240 = arith.constant 2 : index
    %c18_241 = arith.constant 18 : index
    %169 = vector.load %arg1[%c2_240, %c18_241] : memref<8x384xf32, #tpu.memory_space<vmem>>, vector<1x256xf32>
    %c2_242 = arith.constant 2 : index
    %c19_243 = arith.constant 19 : index
    %170 = vector.load %arg1[%c2_242, %c19_243] : memref<8x384xf32, #tpu.memory_space<vmem>>, vector<1x256xf32>
    %c2_244 = arith.constant 2 : index
    %c20_245 = arith.constant 20 : index
    %171 = vector.load %arg1[%c2_244, %c20_245] : memref<8x384xf32, #tpu.memory_space<vmem>>, vector<1x256xf32>
    %c2_246 = arith.constant 2 : index
    %c21_247 = arith.constant 21 : index
    %172 = vector.load %arg1[%c2_246, %c21_247] : memref<8x384xf32, #tpu.memory_space<vmem>>, vector<1x256xf32>
    %c2_248 = arith.constant 2 : index
    %c22_249 = arith.constant 22 : index
    %173 = vector.load %arg1[%c2_248, %c22_249] : memref<8x384xf32, #tpu.memory_space<vmem>>, vector<1x256xf32>
    %c2_250 = arith.constant 2 : index
    %c23_251 = arith.constant 23 : index
    %174 = vector.load %arg1[%c2_250, %c23_251] : memref<8x384xf32, #tpu.memory_space<vmem>>, vector<1x256xf32>
    %c2_252 = arith.constant 2 : index
    %c24_253 = arith.constant 24 : index
    %175 = vector.load %arg1[%c2_252, %c24_253] : memref<8x384xf32, #tpu.memory_space<vmem>>, vector<1x256xf32>
    %c2_254 = arith.constant 2 : index
    %c25_255 = arith.constant 25 : index
    %176 = vector.load %arg1[%c2_254, %c25_255] : memref<8x384xf32, #tpu.memory_space<vmem>>, vector<1x256xf32>
    %c2_256 = arith.constant 2 : index
    %c26_257 = arith.constant 26 : index
    %177 = vector.load %arg1[%c2_256, %c26_257] : memref<8x384xf32, #tpu.memory_space<vmem>>, vector<1x256xf32>
    %c2_258 = arith.constant 2 : index
    %c27_259 = arith.constant 27 : index
    %178 = vector.load %arg1[%c2_258, %c27_259] : memref<8x384xf32, #tpu.memory_space<vmem>>, vector<1x256xf32>
    %c2_260 = arith.constant 2 : index
    %c28_261 = arith.constant 28 : index
    %179 = vector.load %arg1[%c2_260, %c28_261] : memref<8x384xf32, #tpu.memory_space<vmem>>, vector<1x256xf32>
    %c2_262 = arith.constant 2 : index
    %c29_263 = arith.constant 29 : index
    %180 = vector.load %arg1[%c2_262, %c29_263] : memref<8x384xf32, #tpu.memory_space<vmem>>, vector<1x256xf32>
    %c2_264 = arith.constant 2 : index
    %c30_265 = arith.constant 30 : index
    %181 = vector.load %arg1[%c2_264, %c30_265] : memref<8x384xf32, #tpu.memory_space<vmem>>, vector<1x256xf32>
    %c2_266 = arith.constant 2 : index
    %c31_267 = arith.constant 31 : index
    %182 = vector.load %arg1[%c2_266, %c31_267] : memref<8x384xf32, #tpu.memory_space<vmem>>, vector<1x256xf32>
    %c2_268 = arith.constant 2 : index
    %c32_269 = arith.constant 32 : index
    %183 = vector.load %arg1[%c2_268, %c32_269] : memref<8x384xf32, #tpu.memory_space<vmem>>, vector<1x256xf32>
    %c2_270 = arith.constant 2 : index
    %c33_271 = arith.constant 33 : index
    %184 = vector.load %arg1[%c2_270, %c33_271] : memref<8x384xf32, #tpu.memory_space<vmem>>, vector<1x256xf32>
    %c2_272 = arith.constant 2 : index
    %c34_273 = arith.constant 34 : index
    %185 = vector.load %arg1[%c2_272, %c34_273] : memref<8x384xf32, #tpu.memory_space<vmem>>, vector<1x256xf32>
    %c2_274 = arith.constant 2 : index
    %c35_275 = arith.constant 35 : index
    %186 = vector.load %arg1[%c2_274, %c35_275] : memref<8x384xf32, #tpu.memory_space<vmem>>, vector<1x256xf32>
    %c2_276 = arith.constant 2 : index
    %c36_277 = arith.constant 36 : index
    %187 = vector.load %arg1[%c2_276, %c36_277] : memref<8x384xf32, #tpu.memory_space<vmem>>, vector<1x256xf32>
    %c2_278 = arith.constant 2 : index
    %c37_279 = arith.constant 37 : index
    %188 = vector.load %arg1[%c2_278, %c37_279] : memref<8x384xf32, #tpu.memory_space<vmem>>, vector<1x256xf32>
    %c2_280 = arith.constant 2 : index
    %c38_281 = arith.constant 38 : index
    %189 = vector.load %arg1[%c2_280, %c38_281] : memref<8x384xf32, #tpu.memory_space<vmem>>, vector<1x256xf32>
    %c2_282 = arith.constant 2 : index
    %c39_283 = arith.constant 39 : index
    %190 = vector.load %arg1[%c2_282, %c39_283] : memref<8x384xf32, #tpu.memory_space<vmem>>, vector<1x256xf32>
    %c2_284 = arith.constant 2 : index
    %c40_285 = arith.constant 40 : index
    %191 = vector.load %arg1[%c2_284, %c40_285] : memref<8x384xf32, #tpu.memory_space<vmem>>, vector<1x256xf32>
    %c2_286 = arith.constant 2 : index
    %c41_287 = arith.constant 41 : index
    %192 = vector.load %arg1[%c2_286, %c41_287] : memref<8x384xf32, #tpu.memory_space<vmem>>, vector<1x256xf32>
    %c2_288 = arith.constant 2 : index
    %c42_289 = arith.constant 42 : index
    %193 = vector.load %arg1[%c2_288, %c42_289] : memref<8x384xf32, #tpu.memory_space<vmem>>, vector<1x256xf32>
    %c2_290 = arith.constant 2 : index
    %c43_291 = arith.constant 43 : index
    %194 = vector.load %arg1[%c2_290, %c43_291] : memref<8x384xf32, #tpu.memory_space<vmem>>, vector<1x256xf32>
    %c2_292 = arith.constant 2 : index
    %c44_293 = arith.constant 44 : index
    %195 = vector.load %arg1[%c2_292, %c44_293] : memref<8x384xf32, #tpu.memory_space<vmem>>, vector<1x256xf32>
    %c2_294 = arith.constant 2 : index
    %c45_295 = arith.constant 45 : index
    %196 = vector.load %arg1[%c2_294, %c45_295] : memref<8x384xf32, #tpu.memory_space<vmem>>, vector<1x256xf32>
    %c2_296 = arith.constant 2 : index
    %c46_297 = arith.constant 46 : index
    %197 = vector.load %arg1[%c2_296, %c46_297] : memref<8x384xf32, #tpu.memory_space<vmem>>, vector<1x256xf32>
    %c2_298 = arith.constant 2 : index
    %c47_299 = arith.constant 47 : index
    %198 = vector.load %arg1[%c2_298, %c47_299] : memref<8x384xf32, #tpu.memory_space<vmem>>, vector<1x256xf32>
    %c2_300 = arith.constant 2 : index
    %c48_301 = arith.constant 48 : index
    %199 = vector.load %arg1[%c2_300, %c48_301] : memref<8x384xf32, #tpu.memory_space<vmem>>, vector<1x256xf32>
    %c2_302 = arith.constant 2 : index
    %c49_303 = arith.constant 49 : index
    %200 = vector.load %arg1[%c2_302, %c49_303] : memref<8x384xf32, #tpu.memory_space<vmem>>, vector<1x256xf32>
    %c2_304 = arith.constant 2 : index
    %c50_305 = arith.constant 50 : index
    %201 = vector.load %arg1[%c2_304, %c50_305] : memref<8x384xf32, #tpu.memory_space<vmem>>, vector<1x256xf32>
    %c2_306 = arith.constant 2 : index
    %c51_307 = arith.constant 51 : index
    %202 = vector.load %arg1[%c2_306, %c51_307] : memref<8x384xf32, #tpu.memory_space<vmem>>, vector<1x256xf32>
    %c2_308 = arith.constant 2 : index
    %c52_309 = arith.constant 52 : index
    %203 = vector.load %arg1[%c2_308, %c52_309] : memref<8x384xf32, #tpu.memory_space<vmem>>, vector<1x256xf32>
    %c2_310 = arith.constant 2 : index
    %c53_311 = arith.constant 53 : index
    %204 = vector.load %arg1[%c2_310, %c53_311] : memref<8x384xf32, #tpu.memory_space<vmem>>, vector<1x256xf32>
    %c2_312 = arith.constant 2 : index
    %c54_313 = arith.constant 54 : index
    %205 = vector.load %arg1[%c2_312, %c54_313] : memref<8x384xf32, #tpu.memory_space<vmem>>, vector<1x256xf32>
    %c2_314 = arith.constant 2 : index
    %c55_315 = arith.constant 55 : index
    %206 = vector.load %arg1[%c2_314, %c55_315] : memref<8x384xf32, #tpu.memory_space<vmem>>, vector<1x256xf32>
    %c2_316 = arith.constant 2 : index
    %c56_317 = arith.constant 56 : index
    %207 = vector.load %arg1[%c2_316, %c56_317] : memref<8x384xf32, #tpu.memory_space<vmem>>, vector<1x256xf32>
    %c2_318 = arith.constant 2 : index
    %c57_319 = arith.constant 57 : index
    %208 = vector.load %arg1[%c2_318, %c57_319] : memref<8x384xf32, #tpu.memory_space<vmem>>, vector<1x256xf32>
    %c2_320 = arith.constant 2 : index
    %c58_321 = arith.constant 58 : index
    %209 = vector.load %arg1[%c2_320, %c58_321] : memref<8x384xf32, #tpu.memory_space<vmem>>, vector<1x256xf32>
    %c2_322 = arith.constant 2 : index
    %c59_323 = arith.constant 59 : index
    %210 = vector.load %arg1[%c2_322, %c59_323] : memref<8x384xf32, #tpu.memory_space<vmem>>, vector<1x256xf32>
    %c2_324 = arith.constant 2 : index
    %c60_325 = arith.constant 60 : index
    %211 = vector.load %arg1[%c2_324, %c60_325] : memref<8x384xf32, #tpu.memory_space<vmem>>, vector<1x256xf32>
    %c2_326 = arith.constant 2 : index
    %c61_327 = arith.constant 61 : index
    %212 = vector.load %arg1[%c2_326, %c61_327] : memref<8x384xf32, #tpu.memory_space<vmem>>, vector<1x256xf32>
    %c2_328 = arith.constant 2 : index
    %c62_329 = arith.constant 62 : index
    %213 = vector.load %arg1[%c2_328, %c62_329] : memref<8x384xf32, #tpu.memory_space<vmem>>, vector<1x256xf32>
    %c2_330 = arith.constant 2 : index
    %c63_331 = arith.constant 63 : index
    %214 = vector.load %arg1[%c2_330, %c63_331] : memref<8x384xf32, #tpu.memory_space<vmem>>, vector<1x256xf32>
    %c2_332 = arith.constant 2 : index
    %c64_333 = arith.constant 64 : index
    %215 = vector.load %arg1[%c2_332, %c64_333] : memref<8x384xf32, #tpu.memory_space<vmem>>, vector<1x256xf32>
    %216 = tpu.concatenate %151, %152, %153, %154, %155, %156, %157, %158, %159, %160, %161, %162, %163, %164, %165, %166 in 0 : vector<1x256xf32>, vector<1x256xf32>, vector<1x256xf32>, vector<1x256xf32>, vector<1x256xf32>, vector<1x256xf32>, vector<1x256xf32>, vector<1x256xf32>, vector<1x256xf32>, vector<1x256xf32>, vector<1x256xf32>, vector<1x256xf32>, vector<1x256xf32>, vector<1x256xf32>, vector<1x256xf32>, vector<1x256xf32> -> vector<16x256xf32>
    %217 = tpu.concatenate %167, %168, %169, %170, %171, %172, %173, %174, %175, %176, %177, %178, %179, %180, %181, %182 in 0 : vector<1x256xf32>, vector<1x256xf32>, vector<1x256xf32>, vector<1x256xf32>, vector<1x256xf32>, vector<1x256xf32>, vector<1x256xf32>, vector<1x256xf32>, vector<1x256xf32>, vector<1x256xf32>, vector<1x256xf32>, vector<1x256xf32>, vector<1x256xf32>, vector<1x256xf32>, vector<1x256xf32>, vector<1x256xf32> -> vector<16x256xf32>
    %218 = tpu.concatenate %183, %184, %185, %186, %187, %188, %189, %190, %191, %192, %193, %194, %195, %196, %197, %198 in 0 : vector<1x256xf32>, vector<1x256xf32>, vector<1x256xf32>, vector<1x256xf32>, vector<1x256xf32>, vector<1x256xf32>, vector<1x256xf32>, vector<1x256xf32>, vector<1x256xf32>, vector<1x256xf32>, vector<1x256xf32>, vector<1x256xf32>, vector<1x256xf32>, vector<1x256xf32>, vector<1x256xf32>, vector<1x256xf32> -> vector<16x256xf32>
    %219 = tpu.concatenate %199, %200, %201, %202, %203, %204, %205, %206, %207, %208, %209, %210, %211, %212, %213, %214 in 0 : vector<1x256xf32>, vector<1x256xf32>, vector<1x256xf32>, vector<1x256xf32>, vector<1x256xf32>, vector<1x256xf32>, vector<1x256xf32>, vector<1x256xf32>, vector<1x256xf32>, vector<1x256xf32>, vector<1x256xf32>, vector<1x256xf32>, vector<1x256xf32>, vector<1x256xf32>, vector<1x256xf32>, vector<1x256xf32> -> vector<16x256xf32>
    %220 = tpu.concatenate %216, %217, %218, %219, %215 in 0 : vector<16x256xf32>, vector<16x256xf32>, vector<16x256xf32>, vector<16x256xf32>, vector<1x256xf32> -> vector<65x256xf32>
    %221 = vector.extract_strided_slice %0 {offsets = [0, 0], sizes = [24, 65], strides = [1, 1]} : vector<24x128xf32> to vector<24x65xf32>
    %cst_334 = arith.constant dense<0.000000e+00> : vector<24x256xf32>
    %222 = tpu.matmul %221, %220, %cst_334 {dimension_numbers = #tpu.dot_dimension_numbers<[1], [0], [0], [1], [0, 0, 1, 1], [], []>} : vector<24x65xf32>, vector<65x256xf32>, vector<24x256xf32> -> vector<24x256xf32>
    %c2_335 = arith.constant 2 : index
    %c0_336 = arith.constant 0 : index
    %c0_337 = arith.constant 0 : index
    %223 = vector.load %arg3[%c2_335, %c0_336, %c0_337] : memref<8x24x256xf32, #tpu.memory_space<vmem>>, vector<1x24x256xf32>
    %224 = vector.shape_cast %223 : vector<1x24x256xf32> to vector<24x256xf32>
    %225 = vector.shape_cast %222 : vector<24x256xf32> to vector<1x24x256xf32>
    tpu.vector_store %arg3[%c2_335, %c0_336, %c0_337], %225 {strides = array<i32>} : memref<8x24x256xf32, #tpu.memory_space<vmem>>, vector<1x24x256xf32>,
    %c3_338 = arith.constant 3 : index
    %c0_339 = arith.constant 0 : index
    %226 = vector.load %arg1[%c3_338, %c0_339] : memref<8x384xf32, #tpu.memory_space<vmem>>, vector<1x256xf32>
    %c3_340 = arith.constant 3 : index
    %c1_341 = arith.constant 1 : index
    %227 = vector.load %arg1[%c3_340, %c1_341] : memref<8x384xf32, #tpu.memory_space<vmem>>, vector<1x256xf32>
    %c3_342 = arith.constant 3 : index
    %c2_343 = arith.constant 2 : index
    %228 = vector.load %arg1[%c3_342, %c2_343] : memref<8x384xf32, #tpu.memory_space<vmem>>, vector<1x256xf32>
    %c3_344 = arith.constant 3 : index
    %c3_345 = arith.constant 3 : index
    %229 = vector.load %arg1[%c3_344, %c3_345] : memref<8x384xf32, #tpu.memory_space<vmem>>, vector<1x256xf32>
    %c3_346 = arith.constant 3 : index
    %c4_347 = arith.constant 4 : index
    %230 = vector.load %arg1[%c3_346, %c4_347] : memref<8x384xf32, #tpu.memory_space<vmem>>, vector<1x256xf32>
    %c3_348 = arith.constant 3 : index
    %c5_349 = arith.constant 5 : index
    %231 = vector.load %arg1[%c3_348, %c5_349] : memref<8x384xf32, #tpu.memory_space<vmem>>, vector<1x256xf32>
    %c3_350 = arith.constant 3 : index
    %c6_351 = arith.constant 6 : index
    %232 = vector.load %arg1[%c3_350, %c6_351] : memref<8x384xf32, #tpu.memory_space<vmem>>, vector<1x256xf32>
    %c3_352 = arith.constant 3 : index
    %c7_353 = arith.constant 7 : index
    %233 = vector.load %arg1[%c3_352, %c7_353] : memref<8x384xf32, #tpu.memory_space<vmem>>, vector<1x256xf32>
    %c3_354 = arith.constant 3 : index
    %c8_355 = arith.constant 8 : index
    %234 = vector.load %arg1[%c3_354, %c8_355] : memref<8x384xf32, #tpu.memory_space<vmem>>, vector<1x256xf32>
    %c3_356 = arith.constant 3 : index
    %c9_357 = arith.constant 9 : index
    %235 = vector.load %arg1[%c3_356, %c9_357] : memref<8x384xf32, #tpu.memory_space<vmem>>, vector<1x256xf32>
    %c3_358 = arith.constant 3 : index
    %c10_359 = arith.constant 10 : index
    %236 = vector.load %arg1[%c3_358, %c10_359] : memref<8x384xf32, #tpu.memory_space<vmem>>, vector<1x256xf32>
    %c3_360 = arith.constant 3 : index
    %c11_361 = arith.constant 11 : index
    %237 = vector.load %arg1[%c3_360, %c11_361] : memref<8x384xf32, #tpu.memory_space<vmem>>, vector<1x256xf32>
    %c3_362 = arith.constant 3 : index
    %c12_363 = arith.constant 12 : index
    %238 = vector.load %arg1[%c3_362, %c12_363] : memref<8x384xf32, #tpu.memory_space<vmem>>, vector<1x256xf32>
    %c3_364 = arith.constant 3 : index
    %c13_365 = arith.constant 13 : index
    %239 = vector.load %arg1[%c3_364, %c13_365] : memref<8x384xf32, #tpu.memory_space<vmem>>, vector<1x256xf32>
    %c3_366 = arith.constant 3 : index
    %c14_367 = arith.constant 14 : index
    %240 = vector.load %arg1[%c3_366, %c14_367] : memref<8x384xf32, #tpu.memory_space<vmem>>, vector<1x256xf32>
    %c3_368 = arith.constant 3 : index
    %c15_369 = arith.constant 15 : index
    %241 = vector.load %arg1[%c3_368, %c15_369] : memref<8x384xf32, #tpu.memory_space<vmem>>, vector<1x256xf32>
    %c3_370 = arith.constant 3 : index
    %c16_371 = arith.constant 16 : index
    %242 = vector.load %arg1[%c3_370, %c16_371] : memref<8x384xf32, #tpu.memory_space<vmem>>, vector<1x256xf32>
    %c3_372 = arith.constant 3 : index
    %c17_373 = arith.constant 17 : index
    %243 = vector.load %arg1[%c3_372, %c17_373] : memref<8x384xf32, #tpu.memory_space<vmem>>, vector<1x256xf32>
    %c3_374 = arith.constant 3 : index
    %c18_375 = arith.constant 18 : index
    %244 = vector.load %arg1[%c3_374, %c18_375] : memref<8x384xf32, #tpu.memory_space<vmem>>, vector<1x256xf32>
    %c3_376 = arith.constant 3 : index
    %c19_377 = arith.constant 19 : index
    %245 = vector.load %arg1[%c3_376, %c19_377] : memref<8x384xf32, #tpu.memory_space<vmem>>, vector<1x256xf32>
    %c3_378 = arith.constant 3 : index
    %c20_379 = arith.constant 20 : index
    %246 = vector.load %arg1[%c3_378, %c20_379] : memref<8x384xf32, #tpu.memory_space<vmem>>, vector<1x256xf32>
    %c3_380 = arith.constant 3 : index
    %c21_381 = arith.constant 21 : index
    %247 = vector.load %arg1[%c3_380, %c21_381] : memref<8x384xf32, #tpu.memory_space<vmem>>, vector<1x256xf32>
    %c3_382 = arith.constant 3 : index
    %c22_383 = arith.constant 22 : index
    %248 = vector.load %arg1[%c3_382, %c22_383] : memref<8x384xf32, #tpu.memory_space<vmem>>, vector<1x256xf32>
    %c3_384 = arith.constant 3 : index
    %c23_385 = arith.constant 23 : index
    %249 = vector.load %arg1[%c3_384, %c23_385] : memref<8x384xf32, #tpu.memory_space<vmem>>, vector<1x256xf32>
    %c3_386 = arith.constant 3 : index
    %c24_387 = arith.constant 24 : index
    %250 = vector.load %arg1[%c3_386, %c24_387] : memref<8x384xf32, #tpu.memory_space<vmem>>, vector<1x256xf32>
    %c3_388 = arith.constant 3 : index
    %c25_389 = arith.constant 25 : index
    %251 = vector.load %arg1[%c3_388, %c25_389] : memref<8x384xf32, #tpu.memory_space<vmem>>, vector<1x256xf32>
    %c3_390 = arith.constant 3 : index
    %c26_391 = arith.constant 26 : index
    %252 = vector.load %arg1[%c3_390, %c26_391] : memref<8x384xf32, #tpu.memory_space<vmem>>, vector<1x256xf32>
    %c3_392 = arith.constant 3 : index
    %c27_393 = arith.constant 27 : index
    %253 = vector.load %arg1[%c3_392, %c27_393] : memref<8x384xf32, #tpu.memory_space<vmem>>, vector<1x256xf32>
    %c3_394 = arith.constant 3 : index
    %c28_395 = arith.constant 28 : index
    %254 = vector.load %arg1[%c3_394, %c28_395] : memref<8x384xf32, #tpu.memory_space<vmem>>, vector<1x256xf32>
    %c3_396 = arith.constant 3 : index
    %c29_397 = arith.constant 29 : index
    %255 = vector.load %arg1[%c3_396, %c29_397] : memref<8x384xf32, #tpu.memory_space<vmem>>, vector<1x256xf32>
    %c3_398 = arith.constant 3 : index
    %c30_399 = arith.constant 30 : index
    %256 = vector.load %arg1[%c3_398, %c30_399] : memref<8x384xf32, #tpu.memory_space<vmem>>, vector<1x256xf32>
    %c3_400 = arith.constant 3 : index
    %c31_401 = arith.constant 31 : index
    %257 = vector.load %arg1[%c3_400, %c31_401] : memref<8x384xf32, #tpu.memory_space<vmem>>, vector<1x256xf32>
    %c3_402 = arith.constant 3 : index
    %c32_403 = arith.constant 32 : index
    %258 = vector.load %arg1[%c3_402, %c32_403] : memref<8x384xf32, #tpu.memory_space<vmem>>, vector<1x256xf32>
    %c3_404 = arith.constant 3 : index
    %c33_405 = arith.constant 33 : index
    %259 = vector.load %arg1[%c3_404, %c33_405] : memref<8x384xf32, #tpu.memory_space<vmem>>, vector<1x256xf32>
    %c3_406 = arith.constant 3 : index
    %c34_407 = arith.constant 34 : index
    %260 = vector.load %arg1[%c3_406, %c34_407] : memref<8x384xf32, #tpu.memory_space<vmem>>, vector<1x256xf32>
    %c3_408 = arith.constant 3 : index
    %c35_409 = arith.constant 35 : index
    %261 = vector.load %arg1[%c3_408, %c35_409] : memref<8x384xf32, #tpu.memory_space<vmem>>, vector<1x256xf32>
    %c3_410 = arith.constant 3 : index
    %c36_411 = arith.constant 36 : index
    %262 = vector.load %arg1[%c3_410, %c36_411] : memref<8x384xf32, #tpu.memory_space<vmem>>, vector<1x256xf32>
    %c3_412 = arith.constant 3 : index
    %c37_413 = arith.constant 37 : index
    %263 = vector.load %arg1[%c3_412, %c37_413] : memref<8x384xf32, #tpu.memory_space<vmem>>, vector<1x256xf32>
    %c3_414 = arith.constant 3 : index
    %c38_415 = arith.constant 38 : index
    %264 = vector.load %arg1[%c3_414, %c38_415] : memref<8x384xf32, #tpu.memory_space<vmem>>, vector<1x256xf32>
    %c3_416 = arith.constant 3 : index
    %c39_417 = arith.constant 39 : index
    %265 = vector.load %arg1[%c3_416, %c39_417] : memref<8x384xf32, #tpu.memory_space<vmem>>, vector<1x256xf32>
    %c3_418 = arith.constant 3 : index
    %c40_419 = arith.constant 40 : index
    %266 = vector.load %arg1[%c3_418, %c40_419] : memref<8x384xf32, #tpu.memory_space<vmem>>, vector<1x256xf32>
    %c3_420 = arith.constant 3 : index
    %c41_421 = arith.constant 41 : index
    %267 = vector.load %arg1[%c3_420, %c41_421] : memref<8x384xf32, #tpu.memory_space<vmem>>, vector<1x256xf32>
    %c3_422 = arith.constant 3 : index
    %c42_423 = arith.constant 42 : index
    %268 = vector.load %arg1[%c3_422, %c42_423] : memref<8x384xf32, #tpu.memory_space<vmem>>, vector<1x256xf32>
    %c3_424 = arith.constant 3 : index
    %c43_425 = arith.constant 43 : index
    %269 = vector.load %arg1[%c3_424, %c43_425] : memref<8x384xf32, #tpu.memory_space<vmem>>, vector<1x256xf32>
    %c3_426 = arith.constant 3 : index
    %c44_427 = arith.constant 44 : index
    %270 = vector.load %arg1[%c3_426, %c44_427] : memref<8x384xf32, #tpu.memory_space<vmem>>, vector<1x256xf32>
    %c3_428 = arith.constant 3 : index
    %c45_429 = arith.constant 45 : index
    %271 = vector.load %arg1[%c3_428, %c45_429] : memref<8x384xf32, #tpu.memory_space<vmem>>, vector<1x256xf32>
    %c3_430 = arith.constant 3 : index
    %c46_431 = arith.constant 46 : index
    %272 = vector.load %arg1[%c3_430, %c46_431] : memref<8x384xf32, #tpu.memory_space<vmem>>, vector<1x256xf32>
    %c3_432 = arith.constant 3 : index
    %c47_433 = arith.constant 47 : index
    %273 = vector.load %arg1[%c3_432, %c47_433] : memref<8x384xf32, #tpu.memory_space<vmem>>, vector<1x256xf32>
    %c3_434 = arith.constant 3 : index
    %c48_435 = arith.constant 48 : index
    %274 = vector.load %arg1[%c3_434, %c48_435] : memref<8x384xf32, #tpu.memory_space<vmem>>, vector<1x256xf32>
    %c3_436 = arith.constant 3 : index
    %c49_437 = arith.constant 49 : index
    %275 = vector.load %arg1[%c3_436, %c49_437] : memref<8x384xf32, #tpu.memory_space<vmem>>, vector<1x256xf32>
    %c3_438 = arith.constant 3 : index
    %c50_439 = arith.constant 50 : index
    %276 = vector.load %arg1[%c3_438, %c50_439] : memref<8x384xf32, #tpu.memory_space<vmem>>, vector<1x256xf32>
    %c3_440 = arith.constant 3 : index
    %c51_441 = arith.constant 51 : index
    %277 = vector.load %arg1[%c3_440, %c51_441] : memref<8x384xf32, #tpu.memory_space<vmem>>, vector<1x256xf32>
    %c3_442 = arith.constant 3 : index
    %c52_443 = arith.constant 52 : index
    %278 = vector.load %arg1[%c3_442, %c52_443] : memref<8x384xf32, #tpu.memory_space<vmem>>, vector<1x256xf32>
    %c3_444 = arith.constant 3 : index
    %c53_445 = arith.constant 53 : index
    %279 = vector.load %arg1[%c3_444, %c53_445] : memref<8x384xf32, #tpu.memory_space<vmem>>, vector<1x256xf32>
    %c3_446 = arith.constant 3 : index
    %c54_447 = arith.constant 54 : index
    %280 = vector.load %arg1[%c3_446, %c54_447] : memref<8x384xf32, #tpu.memory_space<vmem>>, vector<1x256xf32>
    %c3_448 = arith.constant 3 : index
    %c55_449 = arith.constant 55 : index
    %281 = vector.load %arg1[%c3_448, %c55_449] : memref<8x384xf32, #tpu.memory_space<vmem>>, vector<1x256xf32>
    %c3_450 = arith.constant 3 : index
    %c56_451 = arith.constant 56 : index
    %282 = vector.load %arg1[%c3_450, %c56_451] : memref<8x384xf32, #tpu.memory_space<vmem>>, vector<1x256xf32>
    %c3_452 = arith.constant 3 : index
    %c57_453 = arith.constant 57 : index
    %283 = vector.load %arg1[%c3_452, %c57_453] : memref<8x384xf32, #tpu.memory_space<vmem>>, vector<1x256xf32>
    %c3_454 = arith.constant 3 : index
    %c58_455 = arith.constant 58 : index
    %284 = vector.load %arg1[%c3_454, %c58_455] : memref<8x384xf32, #tpu.memory_space<vmem>>, vector<1x256xf32>
    %c3_456 = arith.constant 3 : index
    %c59_457 = arith.constant 59 : index
    %285 = vector.load %arg1[%c3_456, %c59_457] : memref<8x384xf32, #tpu.memory_space<vmem>>, vector<1x256xf32>
    %c3_458 = arith.constant 3 : index
    %c60_459 = arith.constant 60 : index
    %286 = vector.load %arg1[%c3_458, %c60_459] : memref<8x384xf32, #tpu.memory_space<vmem>>, vector<1x256xf32>
    %c3_460 = arith.constant 3 : index
    %c61_461 = arith.constant 61 : index
    %287 = vector.load %arg1[%c3_460, %c61_461] : memref<8x384xf32, #tpu.memory_space<vmem>>, vector<1x256xf32>
    %c3_462 = arith.constant 3 : index
    %c62_463 = arith.constant 62 : index
    %288 = vector.load %arg1[%c3_462, %c62_463] : memref<8x384xf32, #tpu.memory_space<vmem>>, vector<1x256xf32>
    %c3_464 = arith.constant 3 : index
    %c63_465 = arith.constant 63 : index
    %289 = vector.load %arg1[%c3_464, %c63_465] : memref<8x384xf32, #tpu.memory_space<vmem>>, vector<1x256xf32>
    %c3_466 = arith.constant 3 : index
    %c64_467 = arith.constant 64 : index
    %290 = vector.load %arg1[%c3_466, %c64_467] : memref<8x384xf32, #tpu.memory_space<vmem>>, vector<1x256xf32>
    %291 = tpu.concatenate %226, %227, %228, %229, %230, %231, %232, %233, %234, %235, %236, %237, %238, %239, %240, %241 in 0 : vector<1x256xf32>, vector<1x256xf32>, vector<1x256xf32>, vector<1x256xf32>, vector<1x256xf32>, vector<1x256xf32>, vector<1x256xf32>, vector<1x256xf32>, vector<1x256xf32>, vector<1x256xf32>, vector<1x256xf32>, vector<1x256xf32>, vector<1x256xf32>, vector<1x256xf32>, vector<1x256xf32>, vector<1x256xf32> -> vector<16x256xf32>
    %292 = tpu.concatenate %242, %243, %244, %245, %246, %247, %248, %249, %250, %251, %252, %253, %254, %255, %256, %257 in 0 : vector<1x256xf32>, vector<1x256xf32>, vector<1x256xf32>, vector<1x256xf32>, vector<1x256xf32>, vector<1x256xf32>, vector<1x256xf32>, vector<1x256xf32>, vector<1x256xf32>, vector<1x256xf32>, vector<1x256xf32>, vector<1x256xf32>, vector<1x256xf32>, vector<1x256xf32>, vector<1x256xf32>, vector<1x256xf32> -> vector<16x256xf32>
    %293 = tpu.concatenate %258, %259, %260, %261, %262, %263, %264, %265, %266, %267, %268, %269, %270, %271, %272, %273 in 0 : vector<1x256xf32>, vector<1x256xf32>, vector<1x256xf32>, vector<1x256xf32>, vector<1x256xf32>, vector<1x256xf32>, vector<1x256xf32>, vector<1x256xf32>, vector<1x256xf32>, vector<1x256xf32>, vector<1x256xf32>, vector<1x256xf32>, vector<1x256xf32>, vector<1x256xf32>, vector<1x256xf32>, vector<1x256xf32> -> vector<16x256xf32>
    %294 = tpu.concatenate %274, %275, %276, %277, %278, %279, %280, %281, %282, %283, %284, %285, %286, %287, %288, %289 in 0 : vector<1x256xf32>, vector<1x256xf32>, vector<1x256xf32>, vector<1x256xf32>, vector<1x256xf32>, vector<1x256xf32>, vector<1x256xf32>, vector<1x256xf32>, vector<1x256xf32>, vector<1x256xf32>, vector<1x256xf32>, vector<1x256xf32>, vector<1x256xf32>, vector<1x256xf32>, vector<1x256xf32>, vector<1x256xf32> -> vector<16x256xf32>
    %295 = tpu.concatenate %291, %292, %293, %294, %290 in 0 : vector<16x256xf32>, vector<16x256xf32>, vector<16x256xf32>, vector<16x256xf32>, vector<1x256xf32> -> vector<65x256xf32>
    %296 = vector.extract_strided_slice %0 {offsets = [0, 0], sizes = [24, 65], strides = [1, 1]} : vector<24x128xf32> to vector<24x65xf32>
    %cst_468 = arith.constant dense<0.000000e+00> : vector<24x256xf32>
    %297 = tpu.matmul %296, %295, %cst_468 {dimension_numbers = #tpu.dot_dimension_numbers<[1], [0], [0], [1], [0, 0, 1, 1], [], []>} : vector<24x65xf32>, vector<65x256xf32>, vector<24x256xf32> -> vector<24x256xf32>
    %c3_469 = arith.constant 3 : index
    %c0_470 = arith.constant 0 : index
    %c0_471 = arith.constant 0 : index
    %298 = vector.load %arg3[%c3_469, %c0_470, %c0_471] : memref<8x24x256xf32, #tpu.memory_space<vmem>>, vector<1x24x256xf32>
    %299 = vector.shape_cast %298 : vector<1x24x256xf32> to vector<24x256xf32>
    %300 = vector.shape_cast %297 : vector<24x256xf32> to vector<1x24x256xf32>
    tpu.vector_store %arg3[%c3_469, %c0_470, %c0_471], %300 {strides = array<i32>} : memref<8x24x256xf32, #tpu.memory_space<vmem>>, vector<1x24x256xf32>,
    %c4_472 = arith.constant 4 : index
    %c0_473 = arith.constant 0 : index
    %301 = vector.load %arg1[%c4_472, %c0_473] : memref<8x384xf32, #tpu.memory_space<vmem>>, vector<1x256xf32>
    %c4_474 = arith.constant 4 : index
    %c1_475 = arith.constant 1 : index
    %302 = vector.load %arg1[%c4_474, %c1_475] : memref<8x384xf32, #tpu.memory_space<vmem>>, vector<1x256xf32>
    %c4_476 = arith.constant 4 : index
    %c2_477 = arith.constant 2 : index
    %303 = vector.load %arg1[%c4_476, %c2_477] : memref<8x384xf32, #tpu.memory_space<vmem>>, vector<1x256xf32>
    %c4_478 = arith.constant 4 : index
    %c3_479 = arith.constant 3 : index
    %304 = vector.load %arg1[%c4_478, %c3_479] : memref<8x384xf32, #tpu.memory_space<vmem>>, vector<1x256xf32>
    %c4_480 = arith.constant 4 : index
    %c4_481 = arith.constant 4 : index
    %305 = vector.load %arg1[%c4_480, %c4_481] : memref<8x384xf32, #tpu.memory_space<vmem>>, vector<1x256xf32>
    %c4_482 = arith.constant 4 : index
    %c5_483 = arith.constant 5 : index
    %306 = vector.load %arg1[%c4_482, %c5_483] : memref<8x384xf32, #tpu.memory_space<vmem>>, vector<1x256xf32>
    %c4_484 = arith.constant 4 : index
    %c6_485 = arith.constant 6 : index
    %307 = vector.load %arg1[%c4_484, %c6_485] : memref<8x384xf32, #tpu.memory_space<vmem>>, vector<1x256xf32>
    %c4_486 = arith.constant 4 : index
    %c7_487 = arith.constant 7 : index
    %308 = vector.load %arg1[%c4_486, %c7_487] : memref<8x384xf32, #tpu.memory_space<vmem>>, vector<1x256xf32>
    %c4_488 = arith.constant 4 : index
    %c8_489 = arith.constant 8 : index
    %309 = vector.load %arg1[%c4_488, %c8_489] : memref<8x384xf32, #tpu.memory_space<vmem>>, vector<1x256xf32>
    %c4_490 = arith.constant 4 : index
    %c9_491 = arith.constant 9 : index
    %310 = vector.load %arg1[%c4_490, %c9_491] : memref<8x384xf32, #tpu.memory_space<vmem>>, vector<1x256xf32>
    %c4_492 = arith.constant 4 : index
    %c10_493 = arith.constant 10 : index
    %311 = vector.load %arg1[%c4_492, %c10_493] : memref<8x384xf32, #tpu.memory_space<vmem>>, vector<1x256xf32>
    %c4_494 = arith.constant 4 : index
    %c11_495 = arith.constant 11 : index
    %312 = vector.load %arg1[%c4_494, %c11_495] : memref<8x384xf32, #tpu.memory_space<vmem>>, vector<1x256xf32>
    %c4_496 = arith.constant 4 : index
    %c12_497 = arith.constant 12 : index
    %313 = vector.load %arg1[%c4_496, %c12_497] : memref<8x384xf32, #tpu.memory_space<vmem>>, vector<1x256xf32>
    %c4_498 = arith.constant 4 : index
    %c13_499 = arith.constant 13 : index
    %314 = vector.load %arg1[%c4_498, %c13_499] : memref<8x384xf32, #tpu.memory_space<vmem>>, vector<1x256xf32>
    %c4_500 = arith.constant 4 : index
    %c14_501 = arith.constant 14 : index
    %315 = vector.load %arg1[%c4_500, %c14_501] : memref<8x384xf32, #tpu.memory_space<vmem>>, vector<1x256xf32>
    %c4_502 = arith.constant 4 : index
    %c15_503 = arith.constant 15 : index
    %316 = vector.load %arg1[%c4_502, %c15_503] : memref<8x384xf32, #tpu.memory_space<vmem>>, vector<1x256xf32>
    %c4_504 = arith.constant 4 : index
    %c16_505 = arith.constant 16 : index
    %317 = vector.load %arg1[%c4_504, %c16_505] : memref<8x384xf32, #tpu.memory_space<vmem>>, vector<1x256xf32>
    %c4_506 = arith.constant 4 : index
    %c17_507 = arith.constant 17 : index
    %318 = vector.load %arg1[%c4_506, %c17_507] : memref<8x384xf32, #tpu.memory_space<vmem>>, vector<1x256xf32>
    %c4_508 = arith.constant 4 : index
    %c18_509 = arith.constant 18 : index
    %319 = vector.load %arg1[%c4_508, %c18_509] : memref<8x384xf32, #tpu.memory_space<vmem>>, vector<1x256xf32>
    %c4_510 = arith.constant 4 : index
    %c19_511 = arith.constant 19 : index
    %320 = vector.load %arg1[%c4_510, %c19_511] : memref<8x384xf32, #tpu.memory_space<vmem>>, vector<1x256xf32>
    %c4_512 = arith.constant 4 : index
    %c20_513 = arith.constant 20 : index
    %321 = vector.load %arg1[%c4_512, %c20_513] : memref<8x384xf32, #tpu.memory_space<vmem>>, vector<1x256xf32>
    %c4_514 = arith.constant 4 : index
    %c21_515 = arith.constant 21 : index
    %322 = vector.load %arg1[%c4_514, %c21_515] : memref<8x384xf32, #tpu.memory_space<vmem>>, vector<1x256xf32>
    %c4_516 = arith.constant 4 : index
    %c22_517 = arith.constant 22 : index
    %323 = vector.load %arg1[%c4_516, %c22_517] : memref<8x384xf32, #tpu.memory_space<vmem>>, vector<1x256xf32>
    %c4_518 = arith.constant 4 : index
    %c23_519 = arith.constant 23 : index
    %324 = vector.load %arg1[%c4_518, %c23_519] : memref<8x384xf32, #tpu.memory_space<vmem>>, vector<1x256xf32>
    %c4_520 = arith.constant 4 : index
    %c24_521 = arith.constant 24 : index
    %325 = vector.load %arg1[%c4_520, %c24_521] : memref<8x384xf32, #tpu.memory_space<vmem>>, vector<1x256xf32>
    %c4_522 = arith.constant 4 : index
    %c25_523 = arith.constant 25 : index
    %326 = vector.load %arg1[%c4_522, %c25_523] : memref<8x384xf32, #tpu.memory_space<vmem>>, vector<1x256xf32>
    %c4_524 = arith.constant 4 : index
    %c26_525 = arith.constant 26 : index
    %327 = vector.load %arg1[%c4_524, %c26_525] : memref<8x384xf32, #tpu.memory_space<vmem>>, vector<1x256xf32>
    %c4_526 = arith.constant 4 : index
    %c27_527 = arith.constant 27 : index
    %328 = vector.load %arg1[%c4_526, %c27_527] : memref<8x384xf32, #tpu.memory_space<vmem>>, vector<1x256xf32>
    %c4_528 = arith.constant 4 : index
    %c28_529 = arith.constant 28 : index
    %329 = vector.load %arg1[%c4_528, %c28_529] : memref<8x384xf32, #tpu.memory_space<vmem>>, vector<1x256xf32>
    %c4_530 = arith.constant 4 : index
    %c29_531 = arith.constant 29 : index
    %330 = vector.load %arg1[%c4_530, %c29_531] : memref<8x384xf32, #tpu.memory_space<vmem>>, vector<1x256xf32>
    %c4_532 = arith.constant 4 : index
    %c30_533 = arith.constant 30 : index
    %331 = vector.load %arg1[%c4_532, %c30_533] : memref<8x384xf32, #tpu.memory_space<vmem>>, vector<1x256xf32>
    %c4_534 = arith.constant 4 : index
    %c31_535 = arith.constant 31 : index
    %332 = vector.load %arg1[%c4_534, %c31_535] : memref<8x384xf32, #tpu.memory_space<vmem>>, vector<1x256xf32>
    %c4_536 = arith.constant 4 : index
    %c32_537 = arith.constant 32 : index
    %333 = vector.load %arg1[%c4_536, %c32_537] : memref<8x384xf32, #tpu.memory_space<vmem>>, vector<1x256xf32>
    %c4_538 = arith.constant 4 : index
    %c33_539 = arith.constant 33 : index
    %334 = vector.load %arg1[%c4_538, %c33_539] : memref<8x384xf32, #tpu.memory_space<vmem>>, vector<1x256xf32>
    %c4_540 = arith.constant 4 : index
    %c34_541 = arith.constant 34 : index
    %335 = vector.load %arg1[%c4_540, %c34_541] : memref<8x384xf32, #tpu.memory_space<vmem>>, vector<1x256xf32>
    %c4_542 = arith.constant 4 : index
    %c35_543 = arith.constant 35 : index
    %336 = vector.load %arg1[%c4_542, %c35_543] : memref<8x384xf32, #tpu.memory_space<vmem>>, vector<1x256xf32>
    %c4_544 = arith.constant 4 : index
    %c36_545 = arith.constant 36 : index
    %337 = vector.load %arg1[%c4_544, %c36_545] : memref<8x384xf32, #tpu.memory_space<vmem>>, vector<1x256xf32>
    %c4_546 = arith.constant 4 : index
    %c37_547 = arith.constant 37 : index
    %338 = vector.load %arg1[%c4_546, %c37_547] : memref<8x384xf32, #tpu.memory_space<vmem>>, vector<1x256xf32>
    %c4_548 = arith.constant 4 : index
    %c38_549 = arith.constant 38 : index
    %339 = vector.load %arg1[%c4_548, %c38_549] : memref<8x384xf32, #tpu.memory_space<vmem>>, vector<1x256xf32>
    %c4_550 = arith.constant 4 : index
    %c39_551 = arith.constant 39 : index
    %340 = vector.load %arg1[%c4_550, %c39_551] : memref<8x384xf32, #tpu.memory_space<vmem>>, vector<1x256xf32>
    %c4_552 = arith.constant 4 : index
    %c40_553 = arith.constant 40 : index
    %341 = vector.load %arg1[%c4_552, %c40_553] : memref<8x384xf32, #tpu.memory_space<vmem>>, vector<1x256xf32>
    %c4_554 = arith.constant 4 : index
    %c41_555 = arith.constant 41 : index
    %342 = vector.load %arg1[%c4_554, %c41_555] : memref<8x384xf32, #tpu.memory_space<vmem>>, vector<1x256xf32>
    %c4_556 = arith.constant 4 : index
    %c42_557 = arith.constant 42 : index
    %343 = vector.load %arg1[%c4_556, %c42_557] : memref<8x384xf32, #tpu.memory_space<vmem>>, vector<1x256xf32>
    %c4_558 = arith.constant 4 : index
    %c43_559 = arith.constant 43 : index
    %344 = vector.load %arg1[%c4_558, %c43_559] : memref<8x384xf32, #tpu.memory_space<vmem>>, vector<1x256xf32>
    %c4_560 = arith.constant 4 : index
    %c44_561 = arith.constant 44 : index
    %345 = vector.load %arg1[%c4_560, %c44_561] : memref<8x384xf32, #tpu.memory_space<vmem>>, vector<1x256xf32>
    %c4_562 = arith.constant 4 : index
    %c45_563 = arith.constant 45 : index
    %346 = vector.load %arg1[%c4_562, %c45_563] : memref<8x384xf32, #tpu.memory_space<vmem>>, vector<1x256xf32>
    %c4_564 = arith.constant 4 : index
    %c46_565 = arith.constant 46 : index
    %347 = vector.load %arg1[%c4_564, %c46_565] : memref<8x384xf32, #tpu.memory_space<vmem>>, vector<1x256xf32>
    %c4_566 = arith.constant 4 : index
    %c47_567 = arith.constant 47 : index
    %348 = vector.load %arg1[%c4_566, %c47_567] : memref<8x384xf32, #tpu.memory_space<vmem>>, vector<1x256xf32>
    %c4_568 = arith.constant 4 : index
    %c48_569 = arith.constant 48 : index
    %349 = vector.load %arg1[%c4_568, %c48_569] : memref<8x384xf32, #tpu.memory_space<vmem>>, vector<1x256xf32>
    %c4_570 = arith.constant 4 : index
    %c49_571 = arith.constant 49 : index
    %350 = vector.load %arg1[%c4_570, %c49_571] : memref<8x384xf32, #tpu.memory_space<vmem>>, vector<1x256xf32>
    %c4_572 = arith.constant 4 : index
    %c50_573 = arith.constant 50 : index
    %351 = vector.load %arg1[%c4_572, %c50_573] : memref<8x384xf32, #tpu.memory_space<vmem>>, vector<1x256xf32>
    %c4_574 = arith.constant 4 : index
    %c51_575 = arith.constant 51 : index
    %352 = vector.load %arg1[%c4_574, %c51_575] : memref<8x384xf32, #tpu.memory_space<vmem>>, vector<1x256xf32>
    %c4_576 = arith.constant 4 : index
    %c52_577 = arith.constant 52 : index
    %353 = vector.load %arg1[%c4_576, %c52_577] : memref<8x384xf32, #tpu.memory_space<vmem>>, vector<1x256xf32>
    %c4_578 = arith.constant 4 : index
    %c53_579 = arith.constant 53 : index
    %354 = vector.load %arg1[%c4_578, %c53_579] : memref<8x384xf32, #tpu.memory_space<vmem>>, vector<1x256xf32>
    %c4_580 = arith.constant 4 : index
    %c54_581 = arith.constant 54 : index
    %355 = vector.load %arg1[%c4_580, %c54_581] : memref<8x384xf32, #tpu.memory_space<vmem>>, vector<1x256xf32>
    %c4_582 = arith.constant 4 : index
    %c55_583 = arith.constant 55 : index
    %356 = vector.load %arg1[%c4_582, %c55_583] : memref<8x384xf32, #tpu.memory_space<vmem>>, vector<1x256xf32>
    %c4_584 = arith.constant 4 : index
    %c56_585 = arith.constant 56 : index
    %357 = vector.load %arg1[%c4_584, %c56_585] : memref<8x384xf32, #tpu.memory_space<vmem>>, vector<1x256xf32>
    %c4_586 = arith.constant 4 : index
    %c57_587 = arith.constant 57 : index
    %358 = vector.load %arg1[%c4_586, %c57_587] : memref<8x384xf32, #tpu.memory_space<vmem>>, vector<1x256xf32>
    %c4_588 = arith.constant 4 : index
    %c58_589 = arith.constant 58 : index
    %359 = vector.load %arg1[%c4_588, %c58_589] : memref<8x384xf32, #tpu.memory_space<vmem>>, vector<1x256xf32>
    %c4_590 = arith.constant 4 : index
    %c59_591 = arith.constant 59 : index
    %360 = vector.load %arg1[%c4_590, %c59_591] : memref<8x384xf32, #tpu.memory_space<vmem>>, vector<1x256xf32>
    %c4_592 = arith.constant 4 : index
    %c60_593 = arith.constant 60 : index
    %361 = vector.load %arg1[%c4_592, %c60_593] : memref<8x384xf32, #tpu.memory_space<vmem>>, vector<1x256xf32>
    %c4_594 = arith.constant 4 : index
    %c61_595 = arith.constant 61 : index
    %362 = vector.load %arg1[%c4_594, %c61_595] : memref<8x384xf32, #tpu.memory_space<vmem>>, vector<1x256xf32>
    %c4_596 = arith.constant 4 : index
    %c62_597 = arith.constant 62 : index
    %363 = vector.load %arg1[%c4_596, %c62_597] : memref<8x384xf32, #tpu.memory_space<vmem>>, vector<1x256xf32>
    %c4_598 = arith.constant 4 : index
    %c63_599 = arith.constant 63 : index
    %364 = vector.load %arg1[%c4_598, %c63_599] : memref<8x384xf32, #tpu.memory_space<vmem>>, vector<1x256xf32>
    %c4_600 = arith.constant 4 : index
    %c64_601 = arith.constant 64 : index
    %365 = vector.load %arg1[%c4_600, %c64_601] : memref<8x384xf32, #tpu.memory_space<vmem>>, vector<1x256xf32>
    %366 = tpu.concatenate %301, %302, %303, %304, %305, %306, %307, %308, %309, %310, %311, %312, %313, %314, %315, %316 in 0 : vector<1x256xf32>, vector<1x256xf32>, vector<1x256xf32>, vector<1x256xf32>, vector<1x256xf32>, vector<1x256xf32>, vector<1x256xf32>, vector<1x256xf32>, vector<1x256xf32>, vector<1x256xf32>, vector<1x256xf32>, vector<1x256xf32>, vector<1x256xf32>, vector<1x256xf32>, vector<1x256xf32>, vector<1x256xf32> -> vector<16x256xf32>
    %367 = tpu.concatenate %317, %318, %319, %320, %321, %322, %323, %324, %325, %326, %327, %328, %329, %330, %331, %332 in 0 : vector<1x256xf32>, vector<1x256xf32>, vector<1x256xf32>, vector<1x256xf32>, vector<1x256xf32>, vector<1x256xf32>, vector<1x256xf32>, vector<1x256xf32>, vector<1x256xf32>, vector<1x256xf32>, vector<1x256xf32>, vector<1x256xf32>, vector<1x256xf32>, vector<1x256xf32>, vector<1x256xf32>, vector<1x256xf32> -> vector<16x256xf32>
    %368 = tpu.concatenate %333, %334, %335, %336, %337, %338, %339, %340, %341, %342, %343, %344, %345, %346, %347, %348 in 0 : vector<1x256xf32>, vector<1x256xf32>, vector<1x256xf32>, vector<1x256xf32>, vector<1x256xf32>, vector<1x256xf32>, vector<1x256xf32>, vector<1x256xf32>, vector<1x256xf32>, vector<1x256xf32>, vector<1x256xf32>, vector<1x256xf32>, vector<1x256xf32>, vector<1x256xf32>, vector<1x256xf32>, vector<1x256xf32> -> vector<16x256xf32>
    %369 = tpu.concatenate %349, %350, %351, %352, %353, %354, %355, %356, %357, %358, %359, %360, %361, %362, %363, %364 in 0 : vector<1x256xf32>, vector<1x256xf32>, vector<1x256xf32>, vector<1x256xf32>, vector<1x256xf32>, vector<1x256xf32>, vector<1x256xf32>, vector<1x256xf32>, vector<1x256xf32>, vector<1x256xf32>, vector<1x256xf32>, vector<1x256xf32>, vector<1x256xf32>, vector<1x256xf32>, vector<1x256xf32>, vector<1x256xf32> -> vector<16x256xf32>
    %370 = tpu.concatenate %366, %367, %368, %369, %365 in 0 : vector<16x256xf32>, vector<16x256xf32>, vector<16x256xf32>, vector<16x256xf32>, vector<1x256xf32> -> vector<65x256xf32>
    %371 = vector.extract_strided_slice %0 {offsets = [0, 0], sizes = [24, 65], strides = [1, 1]} : vector<24x128xf32> to vector<24x65xf32>
    %cst_602 = arith.constant dense<0.000000e+00> : vector<24x256xf32>
    %372 = tpu.matmul %371, %370, %cst_602 {dimension_numbers = #tpu.dot_dimension_numbers<[1], [0], [0], [1], [0, 0, 1, 1], [], []>} : vector<24x65xf32>, vector<65x256xf32>, vector<24x256xf32> -> vector<24x256xf32>
    %c4_603 = arith.constant 4 : index
    %c0_604 = arith.constant 0 : index
    %c0_605 = arith.constant 0 : index
    %373 = vector.load %arg3[%c4_603, %c0_604, %c0_605] : memref<8x24x256xf32, #tpu.memory_space<vmem>>, vector<1x24x256xf32>
    %374 = vector.shape_cast %373 : vector<1x24x256xf32> to vector<24x256xf32>
    %375 = vector.shape_cast %372 : vector<24x256xf32> to vector<1x24x256xf32>
    tpu.vector_store %arg3[%c4_603, %c0_604, %c0_605], %375 {strides = array<i32>} : memref<8x24x256xf32, #tpu.memory_space<vmem>>, vector<1x24x256xf32>,
    %c5_606 = arith.constant 5 : index
    %c0_607 = arith.constant 0 : index
    %376 = vector.load %arg1[%c5_606, %c0_607] : memref<8x384xf32, #tpu.memory_space<vmem>>, vector<1x256xf32>
    %c5_608 = arith.constant 5 : index
    %c1_609 = arith.constant 1 : index
    %377 = vector.load %arg1[%c5_608, %c1_609] : memref<8x384xf32, #tpu.memory_space<vmem>>, vector<1x256xf32>
    %c5_610 = arith.constant 5 : index
    %c2_611 = arith.constant 2 : index
    %378 = vector.load %arg1[%c5_610, %c2_611] : memref<8x384xf32, #tpu.memory_space<vmem>>, vector<1x256xf32>
    %c5_612 = arith.constant 5 : index
    %c3_613 = arith.constant 3 : index
    %379 = vector.load %arg1[%c5_612, %c3_613] : memref<8x384xf32, #tpu.memory_space<vmem>>, vector<1x256xf32>
    %c5_614 = arith.constant 5 : index
    %c4_615 = arith.constant 4 : index
    %380 = vector.load %arg1[%c5_614, %c4_615] : memref<8x384xf32, #tpu.memory_space<vmem>>, vector<1x256xf32>
    %c5_616 = arith.constant 5 : index
    %c5_617 = arith.constant 5 : index
    %381 = vector.load %arg1[%c5_616, %c5_617] : memref<8x384xf32, #tpu.memory_space<vmem>>, vector<1x256xf32>
    %c5_618 = arith.constant 5 : index
    %c6_619 = arith.constant 6 : index
    %382 = vector.load %arg1[%c5_618, %c6_619] : memref<8x384xf32, #tpu.memory_space<vmem>>, vector<1x256xf32>
    %c5_620 = arith.constant 5 : index
    %c7_621 = arith.constant 7 : index
    %383 = vector.load %arg1[%c5_620, %c7_621] : memref<8x384xf32, #tpu.memory_space<vmem>>, vector<1x256xf32>
    %c5_622 = arith.constant 5 : index
    %c8_623 = arith.constant 8 : index
    %384 = vector.load %arg1[%c5_622, %c8_623] : memref<8x384xf32, #tpu.memory_space<vmem>>, vector<1x256xf32>
    %c5_624 = arith.constant 5 : index
    %c9_625 = arith.constant 9 : index
    %385 = vector.load %arg1[%c5_624, %c9_625] : memref<8x384xf32, #tpu.memory_space<vmem>>, vector<1x256xf32>
    %c5_626 = arith.constant 5 : index
    %c10_627 = arith.constant 10 : index
    %386 = vector.load %arg1[%c5_626, %c10_627] : memref<8x384xf32, #tpu.memory_space<vmem>>, vector<1x256xf32>
    %c5_628 = arith.constant 5 : index
    %c11_629 = arith.constant 11 : index
    %387 = vector.load %arg1[%c5_628, %c11_629] : memref<8x384xf32, #tpu.memory_space<vmem>>, vector<1x256xf32>
    %c5_630 = arith.constant 5 : index
    %c12_631 = arith.constant 12 : index
    %388 = vector.load %arg1[%c5_630, %c12_631] : memref<8x384xf32, #tpu.memory_space<vmem>>, vector<1x256xf32>
    %c5_632 = arith.constant 5 : index
    %c13_633 = arith.constant 13 : index
    %389 = vector.load %arg1[%c5_632, %c13_633] : memref<8x384xf32, #tpu.memory_space<vmem>>, vector<1x256xf32>
    %c5_634 = arith.constant 5 : index
    %c14_635 = arith.constant 14 : index
    %390 = vector.load %arg1[%c5_634, %c14_635] : memref<8x384xf32, #tpu.memory_space<vmem>>, vector<1x256xf32>
    %c5_636 = arith.constant 5 : index
    %c15_637 = arith.constant 15 : index
    %391 = vector.load %arg1[%c5_636, %c15_637] : memref<8x384xf32, #tpu.memory_space<vmem>>, vector<1x256xf32>
    %c5_638 = arith.constant 5 : index
    %c16_639 = arith.constant 16 : index
    %392 = vector.load %arg1[%c5_638, %c16_639] : memref<8x384xf32, #tpu.memory_space<vmem>>, vector<1x256xf32>
    %c5_640 = arith.constant 5 : index
    %c17_641 = arith.constant 17 : index
    %393 = vector.load %arg1[%c5_640, %c17_641] : memref<8x384xf32, #tpu.memory_space<vmem>>, vector<1x256xf32>
    %c5_642 = arith.constant 5 : index
    %c18_643 = arith.constant 18 : index
    %394 = vector.load %arg1[%c5_642, %c18_643] : memref<8x384xf32, #tpu.memory_space<vmem>>, vector<1x256xf32>
    %c5_644 = arith.constant 5 : index
    %c19_645 = arith.constant 19 : index
    %395 = vector.load %arg1[%c5_644, %c19_645] : memref<8x384xf32, #tpu.memory_space<vmem>>, vector<1x256xf32>
    %c5_646 = arith.constant 5 : index
    %c20_647 = arith.constant 20 : index
    %396 = vector.load %arg1[%c5_646, %c20_647] : memref<8x384xf32, #tpu.memory_space<vmem>>, vector<1x256xf32>
    %c5_648 = arith.constant 5 : index
    %c21_649 = arith.constant 21 : index
    %397 = vector.load %arg1[%c5_648, %c21_649] : memref<8x384xf32, #tpu.memory_space<vmem>>, vector<1x256xf32>
    %c5_650 = arith.constant 5 : index
    %c22_651 = arith.constant 22 : index
    %398 = vector.load %arg1[%c5_650, %c22_651] : memref<8x384xf32, #tpu.memory_space<vmem>>, vector<1x256xf32>
    %c5_652 = arith.constant 5 : index
    %c23_653 = arith.constant 23 : index
    %399 = vector.load %arg1[%c5_652, %c23_653] : memref<8x384xf32, #tpu.memory_space<vmem>>, vector<1x256xf32>
    %c5_654 = arith.constant 5 : index
    %c24_655 = arith.constant 24 : index
    %400 = vector.load %arg1[%c5_654, %c24_655] : memref<8x384xf32, #tpu.memory_space<vmem>>, vector<1x256xf32>
    %c5_656 = arith.constant 5 : index
    %c25_657 = arith.constant 25 : index
    %401 = vector.load %arg1[%c5_656, %c25_657] : memref<8x384xf32, #tpu.memory_space<vmem>>, vector<1x256xf32>
    %c5_658 = arith.constant 5 : index
    %c26_659 = arith.constant 26 : index
    %402 = vector.load %arg1[%c5_658, %c26_659] : memref<8x384xf32, #tpu.memory_space<vmem>>, vector<1x256xf32>
    %c5_660 = arith.constant 5 : index
    %c27_661 = arith.constant 27 : index
    %403 = vector.load %arg1[%c5_660, %c27_661] : memref<8x384xf32, #tpu.memory_space<vmem>>, vector<1x256xf32>
    %c5_662 = arith.constant 5 : index
    %c28_663 = arith.constant 28 : index
    %404 = vector.load %arg1[%c5_662, %c28_663] : memref<8x384xf32, #tpu.memory_space<vmem>>, vector<1x256xf32>
    %c5_664 = arith.constant 5 : index
    %c29_665 = arith.constant 29 : index
    %405 = vector.load %arg1[%c5_664, %c29_665] : memref<8x384xf32, #tpu.memory_space<vmem>>, vector<1x256xf32>
    %c5_666 = arith.constant 5 : index
    %c30_667 = arith.constant 30 : index
    %406 = vector.load %arg1[%c5_666, %c30_667] : memref<8x384xf32, #tpu.memory_space<vmem>>, vector<1x256xf32>
    %c5_668 = arith.constant 5 : index
    %c31_669 = arith.constant 31 : index
    %407 = vector.load %arg1[%c5_668, %c31_669] : memref<8x384xf32, #tpu.memory_space<vmem>>, vector<1x256xf32>
    %c5_670 = arith.constant 5 : index
    %c32_671 = arith.constant 32 : index
    %408 = vector.load %arg1[%c5_670, %c32_671] : memref<8x384xf32, #tpu.memory_space<vmem>>, vector<1x256xf32>
    %c5_672 = arith.constant 5 : index
    %c33_673 = arith.constant 33 : index
    %409 = vector.load %arg1[%c5_672, %c33_673] : memref<8x384xf32, #tpu.memory_space<vmem>>, vector<1x256xf32>
    %c5_674 = arith.constant 5 : index
    %c34_675 = arith.constant 34 : index
    %410 = vector.load %arg1[%c5_674, %c34_675] : memref<8x384xf32, #tpu.memory_space<vmem>>, vector<1x256xf32>
    %c5_676 = arith.constant 5 : index
    %c35_677 = arith.constant 35 : index
    %411 = vector.load %arg1[%c5_676, %c35_677] : memref<8x384xf32, #tpu.memory_space<vmem>>, vector<1x256xf32>
    %c5_678 = arith.constant 5 : index
    %c36_679 = arith.constant 36 : index
    %412 = vector.load %arg1[%c5_678, %c36_679] : memref<8x384xf32, #tpu.memory_space<vmem>>, vector<1x256xf32>
    %c5_680 = arith.constant 5 : index
    %c37_681 = arith.constant 37 : index
    %413 = vector.load %arg1[%c5_680, %c37_681] : memref<8x384xf32, #tpu.memory_space<vmem>>, vector<1x256xf32>
    %c5_682 = arith.constant 5 : index
    %c38_683 = arith.constant 38 : index
    %414 = vector.load %arg1[%c5_682, %c38_683] : memref<8x384xf32, #tpu.memory_space<vmem>>, vector<1x256xf32>
    %c5_684 = arith.constant 5 : index
    %c39_685 = arith.constant 39 : index
    %415 = vector.load %arg1[%c5_684, %c39_685] : memref<8x384xf32, #tpu.memory_space<vmem>>, vector<1x256xf32>
    %c5_686 = arith.constant 5 : index
    %c40_687 = arith.constant 40 : index
    %416 = vector.load %arg1[%c5_686, %c40_687] : memref<8x384xf32, #tpu.memory_space<vmem>>, vector<1x256xf32>
    %c5_688 = arith.constant 5 : index
    %c41_689 = arith.constant 41 : index
    %417 = vector.load %arg1[%c5_688, %c41_689] : memref<8x384xf32, #tpu.memory_space<vmem>>, vector<1x256xf32>
    %c5_690 = arith.constant 5 : index
    %c42_691 = arith.constant 42 : index
    %418 = vector.load %arg1[%c5_690, %c42_691] : memref<8x384xf32, #tpu.memory_space<vmem>>, vector<1x256xf32>
    %c5_692 = arith.constant 5 : index
    %c43_693 = arith.constant 43 : index
    %419 = vector.load %arg1[%c5_692, %c43_693] : memref<8x384xf32, #tpu.memory_space<vmem>>, vector<1x256xf32>
    %c5_694 = arith.constant 5 : index
    %c44_695 = arith.constant 44 : index
    %420 = vector.load %arg1[%c5_694, %c44_695] : memref<8x384xf32, #tpu.memory_space<vmem>>, vector<1x256xf32>
    %c5_696 = arith.constant 5 : index
    %c45_697 = arith.constant 45 : index
    %421 = vector.load %arg1[%c5_696, %c45_697] : memref<8x384xf32, #tpu.memory_space<vmem>>, vector<1x256xf32>
    %c5_698 = arith.constant 5 : index
    %c46_699 = arith.constant 46 : index
    %422 = vector.load %arg1[%c5_698, %c46_699] : memref<8x384xf32, #tpu.memory_space<vmem>>, vector<1x256xf32>
    %c5_700 = arith.constant 5 : index
    %c47_701 = arith.constant 47 : index
    %423 = vector.load %arg1[%c5_700, %c47_701] : memref<8x384xf32, #tpu.memory_space<vmem>>, vector<1x256xf32>
    %c5_702 = arith.constant 5 : index
    %c48_703 = arith.constant 48 : index
    %424 = vector.load %arg1[%c5_702, %c48_703] : memref<8x384xf32, #tpu.memory_space<vmem>>, vector<1x256xf32>
    %c5_704 = arith.constant 5 : index
    %c49_705 = arith.constant 49 : index
    %425 = vector.load %arg1[%c5_704, %c49_705] : memref<8x384xf32, #tpu.memory_space<vmem>>, vector<1x256xf32>
    %c5_706 = arith.constant 5 : index
    %c50_707 = arith.constant 50 : index
    %426 = vector.load %arg1[%c5_706, %c50_707] : memref<8x384xf32, #tpu.memory_space<vmem>>, vector<1x256xf32>
    %c5_708 = arith.constant 5 : index
    %c51_709 = arith.constant 51 : index
    %427 = vector.load %arg1[%c5_708, %c51_709] : memref<8x384xf32, #tpu.memory_space<vmem>>, vector<1x256xf32>
    %c5_710 = arith.constant 5 : index
    %c52_711 = arith.constant 52 : index
    %428 = vector.load %arg1[%c5_710, %c52_711] : memref<8x384xf32, #tpu.memory_space<vmem>>, vector<1x256xf32>
    %c5_712 = arith.constant 5 : index
    %c53_713 = arith.constant 53 : index
    %429 = vector.load %arg1[%c5_712, %c53_713] : memref<8x384xf32, #tpu.memory_space<vmem>>, vector<1x256xf32>
    %c5_714 = arith.constant 5 : index
    %c54_715 = arith.constant 54 : index
    %430 = vector.load %arg1[%c5_714, %c54_715] : memref<8x384xf32, #tpu.memory_space<vmem>>, vector<1x256xf32>
    %c5_716 = arith.constant 5 : index
    %c55_717 = arith.constant 55 : index
    %431 = vector.load %arg1[%c5_716, %c55_717] : memref<8x384xf32, #tpu.memory_space<vmem>>, vector<1x256xf32>
    %c5_718 = arith.constant 5 : index
    %c56_719 = arith.constant 56 : index
    %432 = vector.load %arg1[%c5_718, %c56_719] : memref<8x384xf32, #tpu.memory_space<vmem>>, vector<1x256xf32>
    %c5_720 = arith.constant 5 : index
    %c57_721 = arith.constant 57 : index
    %433 = vector.load %arg1[%c5_720, %c57_721] : memref<8x384xf32, #tpu.memory_space<vmem>>, vector<1x256xf32>
    %c5_722 = arith.constant 5 : index
    %c58_723 = arith.constant 58 : index
    %434 = vector.load %arg1[%c5_722, %c58_723] : memref<8x384xf32, #tpu.memory_space<vmem>>, vector<1x256xf32>
    %c5_724 = arith.constant 5 : index
    %c59_725 = arith.constant 59 : index
    %435 = vector.load %arg1[%c5_724, %c59_725] : memref<8x384xf32, #tpu.memory_space<vmem>>, vector<1x256xf32>
    %c5_726 = arith.constant 5 : index
    %c60_727 = arith.constant 60 : index
    %436 = vector.load %arg1[%c5_726, %c60_727] : memref<8x384xf32, #tpu.memory_space<vmem>>, vector<1x256xf32>
    %c5_728 = arith.constant 5 : index
    %c61_729 = arith.constant 61 : index
    %437 = vector.load %arg1[%c5_728, %c61_729] : memref<8x384xf32, #tpu.memory_space<vmem>>, vector<1x256xf32>
    %c5_730 = arith.constant 5 : index
    %c62_731 = arith.constant 62 : index
    %438 = vector.load %arg1[%c5_730, %c62_731] : memref<8x384xf32, #tpu.memory_space<vmem>>, vector<1x256xf32>
    %c5_732 = arith.constant 5 : index
    %c63_733 = arith.constant 63 : index
    %439 = vector.load %arg1[%c5_732, %c63_733] : memref<8x384xf32, #tpu.memory_space<vmem>>, vector<1x256xf32>
    %c5_734 = arith.constant 5 : index
    %c64_735 = arith.constant 64 : index
    %440 = vector.load %arg1[%c5_734, %c64_735] : memref<8x384xf32, #tpu.memory_space<vmem>>, vector<1x256xf32>
    %441 = tpu.concatenate %376, %377, %378, %379, %380, %381, %382, %383, %384, %385, %386, %387, %388, %389, %390, %391 in 0 : vector<1x256xf32>, vector<1x256xf32>, vector<1x256xf32>, vector<1x256xf32>, vector<1x256xf32>, vector<1x256xf32>, vector<1x256xf32>, vector<1x256xf32>, vector<1x256xf32>, vector<1x256xf32>, vector<1x256xf32>, vector<1x256xf32>, vector<1x256xf32>, vector<1x256xf32>, vector<1x256xf32>, vector<1x256xf32> -> vector<16x256xf32>
    %442 = tpu.concatenate %392, %393, %394, %395, %396, %397, %398, %399, %400, %401, %402, %403, %404, %405, %406, %407 in 0 : vector<1x256xf32>, vector<1x256xf32>, vector<1x256xf32>, vector<1x256xf32>, vector<1x256xf32>, vector<1x256xf32>, vector<1x256xf32>, vector<1x256xf32>, vector<1x256xf32>, vector<1x256xf32>, vector<1x256xf32>, vector<1x256xf32>, vector<1x256xf32>, vector<1x256xf32>, vector<1x256xf32>, vector<1x256xf32> -> vector<16x256xf32>
    %443 = tpu.concatenate %408, %409, %410, %411, %412, %413, %414, %415, %416, %417, %418, %419, %420, %421, %422, %423 in 0 : vector<1x256xf32>, vector<1x256xf32>, vector<1x256xf32>, vector<1x256xf32>, vector<1x256xf32>, vector<1x256xf32>, vector<1x256xf32>, vector<1x256xf32>, vector<1x256xf32>, vector<1x256xf32>, vector<1x256xf32>, vector<1x256xf32>, vector<1x256xf32>, vector<1x256xf32>, vector<1x256xf32>, vector<1x256xf32> -> vector<16x256xf32>
    %444 = tpu.concatenate %424, %425, %426, %427, %428, %429, %430, %431, %432, %433, %434, %435, %436, %437, %438, %439 in 0 : vector<1x256xf32>, vector<1x256xf32>, vector<1x256xf32>, vector<1x256xf32>, vector<1x256xf32>, vector<1x256xf32>, vector<1x256xf32>, vector<1x256xf32>, vector<1x256xf32>, vector<1x256xf32>, vector<1x256xf32>, vector<1x256xf32>, vector<1x256xf32>, vector<1x256xf32>, vector<1x256xf32>, vector<1x256xf32> -> vector<16x256xf32>
    %445 = tpu.concatenate %441, %442, %443, %444, %440 in 0 : vector<16x256xf32>, vector<16x256xf32>, vector<16x256xf32>, vector<16x256xf32>, vector<1x256xf32> -> vector<65x256xf32>
    %446 = vector.extract_strided_slice %0 {offsets = [0, 0], sizes = [24, 65], strides = [1, 1]} : vector<24x128xf32> to vector<24x65xf32>
    %cst_736 = arith.constant dense<0.000000e+00> : vector<24x256xf32>
    %447 = tpu.matmul %446, %445, %cst_736 {dimension_numbers = #tpu.dot_dimension_numbers<[1], [0], [0], [1], [0, 0, 1, 1], [], []>} : vector<24x65xf32>, vector<65x256xf32>, vector<24x256xf32> -> vector<24x256xf32>
    %c5_737 = arith.constant 5 : index
    %c0_738 = arith.constant 0 : index
    %c0_739 = arith.constant 0 : index
    %448 = vector.load %arg3[%c5_737, %c0_738, %c0_739] : memref<8x24x256xf32, #tpu.memory_space<vmem>>, vector<1x24x256xf32>
    %449 = vector.shape_cast %448 : vector<1x24x256xf32> to vector<24x256xf32>
    %450 = vector.shape_cast %447 : vector<24x256xf32> to vector<1x24x256xf32>
    tpu.vector_store %arg3[%c5_737, %c0_738, %c0_739], %450 {strides = array<i32>} : memref<8x24x256xf32, #tpu.memory_space<vmem>>, vector<1x24x256xf32>,
    %c6_740 = arith.constant 6 : index
    %c0_741 = arith.constant 0 : index
    %451 = vector.load %arg1[%c6_740, %c0_741] : memref<8x384xf32, #tpu.memory_space<vmem>>, vector<1x256xf32>
    %c6_742 = arith.constant 6 : index
    %c1_743 = arith.constant 1 : index
    %452 = vector.load %arg1[%c6_742, %c1_743] : memref<8x384xf32, #tpu.memory_space<vmem>>, vector<1x256xf32>
    %c6_744 = arith.constant 6 : index
    %c2_745 = arith.constant 2 : index
    %453 = vector.load %arg1[%c6_744, %c2_745] : memref<8x384xf32, #tpu.memory_space<vmem>>, vector<1x256xf32>
    %c6_746 = arith.constant 6 : index
    %c3_747 = arith.constant 3 : index
    %454 = vector.load %arg1[%c6_746, %c3_747] : memref<8x384xf32, #tpu.memory_space<vmem>>, vector<1x256xf32>
    %c6_748 = arith.constant 6 : index
    %c4_749 = arith.constant 4 : index
    %455 = vector.load %arg1[%c6_748, %c4_749] : memref<8x384xf32, #tpu.memory_space<vmem>>, vector<1x256xf32>
    %c6_750 = arith.constant 6 : index
    %c5_751 = arith.constant 5 : index
    %456 = vector.load %arg1[%c6_750, %c5_751] : memref<8x384xf32, #tpu.memory_space<vmem>>, vector<1x256xf32>
    %c6_752 = arith.constant 6 : index
    %c6_753 = arith.constant 6 : index
    %457 = vector.load %arg1[%c6_752, %c6_753] : memref<8x384xf32, #tpu.memory_space<vmem>>, vector<1x256xf32>
    %c6_754 = arith.constant 6 : index
    %c7_755 = arith.constant 7 : index
    %458 = vector.load %arg1[%c6_754, %c7_755] : memref<8x384xf32, #tpu.memory_space<vmem>>, vector<1x256xf32>
    %c6_756 = arith.constant 6 : index
    %c8_757 = arith.constant 8 : index
    %459 = vector.load %arg1[%c6_756, %c8_757] : memref<8x384xf32, #tpu.memory_space<vmem>>, vector<1x256xf32>
    %c6_758 = arith.constant 6 : index
    %c9_759 = arith.constant 9 : index
    %460 = vector.load %arg1[%c6_758, %c9_759] : memref<8x384xf32, #tpu.memory_space<vmem>>, vector<1x256xf32>
    %c6_760 = arith.constant 6 : index
    %c10_761 = arith.constant 10 : index
    %461 = vector.load %arg1[%c6_760, %c10_761] : memref<8x384xf32, #tpu.memory_space<vmem>>, vector<1x256xf32>
    %c6_762 = arith.constant 6 : index
    %c11_763 = arith.constant 11 : index
    %462 = vector.load %arg1[%c6_762, %c11_763] : memref<8x384xf32, #tpu.memory_space<vmem>>, vector<1x256xf32>
    %c6_764 = arith.constant 6 : index
    %c12_765 = arith.constant 12 : index
    %463 = vector.load %arg1[%c6_764, %c12_765] : memref<8x384xf32, #tpu.memory_space<vmem>>, vector<1x256xf32>
    %c6_766 = arith.constant 6 : index
    %c13_767 = arith.constant 13 : index
    %464 = vector.load %arg1[%c6_766, %c13_767] : memref<8x384xf32, #tpu.memory_space<vmem>>, vector<1x256xf32>
    %c6_768 = arith.constant 6 : index
    %c14_769 = arith.constant 14 : index
    %465 = vector.load %arg1[%c6_768, %c14_769] : memref<8x384xf32, #tpu.memory_space<vmem>>, vector<1x256xf32>
    %c6_770 = arith.constant 6 : index
    %c15_771 = arith.constant 15 : index
    %466 = vector.load %arg1[%c6_770, %c15_771] : memref<8x384xf32, #tpu.memory_space<vmem>>, vector<1x256xf32>
    %c6_772 = arith.constant 6 : index
    %c16_773 = arith.constant 16 : index
    %467 = vector.load %arg1[%c6_772, %c16_773] : memref<8x384xf32, #tpu.memory_space<vmem>>, vector<1x256xf32>
    %c6_774 = arith.constant 6 : index
    %c17_775 = arith.constant 17 : index
    %468 = vector.load %arg1[%c6_774, %c17_775] : memref<8x384xf32, #tpu.memory_space<vmem>>, vector<1x256xf32>
    %c6_776 = arith.constant 6 : index
    %c18_777 = arith.constant 18 : index
    %469 = vector.load %arg1[%c6_776, %c18_777] : memref<8x384xf32, #tpu.memory_space<vmem>>, vector<1x256xf32>
    %c6_778 = arith.constant 6 : index
    %c19_779 = arith.constant 19 : index
    %470 = vector.load %arg1[%c6_778, %c19_779] : memref<8x384xf32, #tpu.memory_space<vmem>>, vector<1x256xf32>
    %c6_780 = arith.constant 6 : index
    %c20_781 = arith.constant 20 : index
    %471 = vector.load %arg1[%c6_780, %c20_781] : memref<8x384xf32, #tpu.memory_space<vmem>>, vector<1x256xf32>
    %c6_782 = arith.constant 6 : index
    %c21_783 = arith.constant 21 : index
    %472 = vector.load %arg1[%c6_782, %c21_783] : memref<8x384xf32, #tpu.memory_space<vmem>>, vector<1x256xf32>
    %c6_784 = arith.constant 6 : index
    %c22_785 = arith.constant 22 : index
    %473 = vector.load %arg1[%c6_784, %c22_785] : memref<8x384xf32, #tpu.memory_space<vmem>>, vector<1x256xf32>
    %c6_786 = arith.constant 6 : index
    %c23_787 = arith.constant 23 : index
    %474 = vector.load %arg1[%c6_786, %c23_787] : memref<8x384xf32, #tpu.memory_space<vmem>>, vector<1x256xf32>
    %c6_788 = arith.constant 6 : index
    %c24_789 = arith.constant 24 : index
    %475 = vector.load %arg1[%c6_788, %c24_789] : memref<8x384xf32, #tpu.memory_space<vmem>>, vector<1x256xf32>
    %c6_790 = arith.constant 6 : index
    %c25_791 = arith.constant 25 : index
    %476 = vector.load %arg1[%c6_790, %c25_791] : memref<8x384xf32, #tpu.memory_space<vmem>>, vector<1x256xf32>
    %c6_792 = arith.constant 6 : index
    %c26_793 = arith.constant 26 : index
    %477 = vector.load %arg1[%c6_792, %c26_793] : memref<8x384xf32, #tpu.memory_space<vmem>>, vector<1x256xf32>
    %c6_794 = arith.constant 6 : index
    %c27_795 = arith.constant 27 : index
    %478 = vector.load %arg1[%c6_794, %c27_795] : memref<8x384xf32, #tpu.memory_space<vmem>>, vector<1x256xf32>
    %c6_796 = arith.constant 6 : index
    %c28_797 = arith.constant 28 : index
    %479 = vector.load %arg1[%c6_796, %c28_797] : memref<8x384xf32, #tpu.memory_space<vmem>>, vector<1x256xf32>
    %c6_798 = arith.constant 6 : index
    %c29_799 = arith.constant 29 : index
    %480 = vector.load %arg1[%c6_798, %c29_799] : memref<8x384xf32, #tpu.memory_space<vmem>>, vector<1x256xf32>
    %c6_800 = arith.constant 6 : index
    %c30_801 = arith.constant 30 : index
    %481 = vector.load %arg1[%c6_800, %c30_801] : memref<8x384xf32, #tpu.memory_space<vmem>>, vector<1x256xf32>
    %c6_802 = arith.constant 6 : index
    %c31_803 = arith.constant 31 : index
    %482 = vector.load %arg1[%c6_802, %c31_803] : memref<8x384xf32, #tpu.memory_space<vmem>>, vector<1x256xf32>
    %c6_804 = arith.constant 6 : index
    %c32_805 = arith.constant 32 : index
    %483 = vector.load %arg1[%c6_804, %c32_805] : memref<8x384xf32, #tpu.memory_space<vmem>>, vector<1x256xf32>
    %c6_806 = arith.constant 6 : index
    %c33_807 = arith.constant 33 : index
    %484 = vector.load %arg1[%c6_806, %c33_807] : memref<8x384xf32, #tpu.memory_space<vmem>>, vector<1x256xf32>
    %c6_808 = arith.constant 6 : index
    %c34_809 = arith.constant 34 : index
    %485 = vector.load %arg1[%c6_808, %c34_809] : memref<8x384xf32, #tpu.memory_space<vmem>>, vector<1x256xf32>
    %c6_810 = arith.constant 6 : index
    %c35_811 = arith.constant 35 : index
    %486 = vector.load %arg1[%c6_810, %c35_811] : memref<8x384xf32, #tpu.memory_space<vmem>>, vector<1x256xf32>
    %c6_812 = arith.constant 6 : index
    %c36_813 = arith.constant 36 : index
    %487 = vector.load %arg1[%c6_812, %c36_813] : memref<8x384xf32, #tpu.memory_space<vmem>>, vector<1x256xf32>
    %c6_814 = arith.constant 6 : index
    %c37_815 = arith.constant 37 : index
    %488 = vector.load %arg1[%c6_814, %c37_815] : memref<8x384xf32, #tpu.memory_space<vmem>>, vector<1x256xf32>
    %c6_816 = arith.constant 6 : index
    %c38_817 = arith.constant 38 : index
    %489 = vector.load %arg1[%c6_816, %c38_817] : memref<8x384xf32, #tpu.memory_space<vmem>>, vector<1x256xf32>
    %c6_818 = arith.constant 6 : index
    %c39_819 = arith.constant 39 : index
    %490 = vector.load %arg1[%c6_818, %c39_819] : memref<8x384xf32, #tpu.memory_space<vmem>>, vector<1x256xf32>
    %c6_820 = arith.constant 6 : index
    %c40_821 = arith.constant 40 : index
    %491 = vector.load %arg1[%c6_820, %c40_821] : memref<8x384xf32, #tpu.memory_space<vmem>>, vector<1x256xf32>
    %c6_822 = arith.constant 6 : index
    %c41_823 = arith.constant 41 : index
    %492 = vector.load %arg1[%c6_822, %c41_823] : memref<8x384xf32, #tpu.memory_space<vmem>>, vector<1x256xf32>
    %c6_824 = arith.constant 6 : index
    %c42_825 = arith.constant 42 : index
    %493 = vector.load %arg1[%c6_824, %c42_825] : memref<8x384xf32, #tpu.memory_space<vmem>>, vector<1x256xf32>
    %c6_826 = arith.constant 6 : index
    %c43_827 = arith.constant 43 : index
    %494 = vector.load %arg1[%c6_826, %c43_827] : memref<8x384xf32, #tpu.memory_space<vmem>>, vector<1x256xf32>
    %c6_828 = arith.constant 6 : index
    %c44_829 = arith.constant 44 : index
    %495 = vector.load %arg1[%c6_828, %c44_829] : memref<8x384xf32, #tpu.memory_space<vmem>>, vector<1x256xf32>
    %c6_830 = arith.constant 6 : index
    %c45_831 = arith.constant 45 : index
    %496 = vector.load %arg1[%c6_830, %c45_831] : memref<8x384xf32, #tpu.memory_space<vmem>>, vector<1x256xf32>
    %c6_832 = arith.constant 6 : index
    %c46_833 = arith.constant 46 : index
    %497 = vector.load %arg1[%c6_832, %c46_833] : memref<8x384xf32, #tpu.memory_space<vmem>>, vector<1x256xf32>
    %c6_834 = arith.constant 6 : index
    %c47_835 = arith.constant 47 : index
    %498 = vector.load %arg1[%c6_834, %c47_835] : memref<8x384xf32, #tpu.memory_space<vmem>>, vector<1x256xf32>
    %c6_836 = arith.constant 6 : index
    %c48_837 = arith.constant 48 : index
    %499 = vector.load %arg1[%c6_836, %c48_837] : memref<8x384xf32, #tpu.memory_space<vmem>>, vector<1x256xf32>
    %c6_838 = arith.constant 6 : index
    %c49_839 = arith.constant 49 : index
    %500 = vector.load %arg1[%c6_838, %c49_839] : memref<8x384xf32, #tpu.memory_space<vmem>>, vector<1x256xf32>
    %c6_840 = arith.constant 6 : index
    %c50_841 = arith.constant 50 : index
    %501 = vector.load %arg1[%c6_840, %c50_841] : memref<8x384xf32, #tpu.memory_space<vmem>>, vector<1x256xf32>
    %c6_842 = arith.constant 6 : index
    %c51_843 = arith.constant 51 : index
    %502 = vector.load %arg1[%c6_842, %c51_843] : memref<8x384xf32, #tpu.memory_space<vmem>>, vector<1x256xf32>
    %c6_844 = arith.constant 6 : index
    %c52_845 = arith.constant 52 : index
    %503 = vector.load %arg1[%c6_844, %c52_845] : memref<8x384xf32, #tpu.memory_space<vmem>>, vector<1x256xf32>
    %c6_846 = arith.constant 6 : index
    %c53_847 = arith.constant 53 : index
    %504 = vector.load %arg1[%c6_846, %c53_847] : memref<8x384xf32, #tpu.memory_space<vmem>>, vector<1x256xf32>
    %c6_848 = arith.constant 6 : index
    %c54_849 = arith.constant 54 : index
    %505 = vector.load %arg1[%c6_848, %c54_849] : memref<8x384xf32, #tpu.memory_space<vmem>>, vector<1x256xf32>
    %c6_850 = arith.constant 6 : index
    %c55_851 = arith.constant 55 : index
    %506 = vector.load %arg1[%c6_850, %c55_851] : memref<8x384xf32, #tpu.memory_space<vmem>>, vector<1x256xf32>
    %c6_852 = arith.constant 6 : index
    %c56_853 = arith.constant 56 : index
    %507 = vector.load %arg1[%c6_852, %c56_853] : memref<8x384xf32, #tpu.memory_space<vmem>>, vector<1x256xf32>
    %c6_854 = arith.constant 6 : index
    %c57_855 = arith.constant 57 : index
    %508 = vector.load %arg1[%c6_854, %c57_855] : memref<8x384xf32, #tpu.memory_space<vmem>>, vector<1x256xf32>
    %c6_856 = arith.constant 6 : index
    %c58_857 = arith.constant 58 : index
    %509 = vector.load %arg1[%c6_856, %c58_857] : memref<8x384xf32, #tpu.memory_space<vmem>>, vector<1x256xf32>
    %c6_858 = arith.constant 6 : index
    %c59_859 = arith.constant 59 : index
    %510 = vector.load %arg1[%c6_858, %c59_859] : memref<8x384xf32, #tpu.memory_space<vmem>>, vector<1x256xf32>
    %c6_860 = arith.constant 6 : index
    %c60_861 = arith.constant 60 : index
    %511 = vector.load %arg1[%c6_860, %c60_861] : memref<8x384xf32, #tpu.memory_space<vmem>>, vector<1x256xf32>
    %c6_862 = arith.constant 6 : index
    %c61_863 = arith.constant 61 : index
    %512 = vector.load %arg1[%c6_862, %c61_863] : memref<8x384xf32, #tpu.memory_space<vmem>>, vector<1x256xf32>
    %c6_864 = arith.constant 6 : index
    %c62_865 = arith.constant 62 : index
    %513 = vector.load %arg1[%c6_864, %c62_865] : memref<8x384xf32, #tpu.memory_space<vmem>>, vector<1x256xf32>
    %c6_866 = arith.constant 6 : index
    %c63_867 = arith.constant 63 : index
    %514 = vector.load %arg1[%c6_866, %c63_867] : memref<8x384xf32, #tpu.memory_space<vmem>>, vector<1x256xf32>
    %c6_868 = arith.constant 6 : index
    %c64_869 = arith.constant 64 : index
    %515 = vector.load %arg1[%c6_868, %c64_869] : memref<8x384xf32, #tpu.memory_space<vmem>>, vector<1x256xf32>
    %516 = tpu.concatenate %451, %452, %453, %454, %455, %456, %457, %458, %459, %460, %461, %462, %463, %464, %465, %466 in 0 : vector<1x256xf32>, vector<1x256xf32>, vector<1x256xf32>, vector<1x256xf32>, vector<1x256xf32>, vector<1x256xf32>, vector<1x256xf32>, vector<1x256xf32>, vector<1x256xf32>, vector<1x256xf32>, vector<1x256xf32>, vector<1x256xf32>, vector<1x256xf32>, vector<1x256xf32>, vector<1x256xf32>, vector<1x256xf32> -> vector<16x256xf32>
    %517 = tpu.concatenate %467, %468, %469, %470, %471, %472, %473, %474, %475, %476, %477, %478, %479, %480, %481, %482 in 0 : vector<1x256xf32>, vector<1x256xf32>, vector<1x256xf32>, vector<1x256xf32>, vector<1x256xf32>, vector<1x256xf32>, vector<1x256xf32>, vector<1x256xf32>, vector<1x256xf32>, vector<1x256xf32>, vector<1x256xf32>, vector<1x256xf32>, vector<1x256xf32>, vector<1x256xf32>, vector<1x256xf32>, vector<1x256xf32> -> vector<16x256xf32>
    %518 = tpu.concatenate %483, %484, %485, %486, %487, %488, %489, %490, %491, %492, %493, %494, %495, %496, %497, %498 in 0 : vector<1x256xf32>, vector<1x256xf32>, vector<1x256xf32>, vector<1x256xf32>, vector<1x256xf32>, vector<1x256xf32>, vector<1x256xf32>, vector<1x256xf32>, vector<1x256xf32>, vector<1x256xf32>, vector<1x256xf32>, vector<1x256xf32>, vector<1x256xf32>, vector<1x256xf32>, vector<1x256xf32>, vector<1x256xf32> -> vector<16x256xf32>
    %519 = tpu.concatenate %499, %500, %501, %502, %503, %504, %505, %506, %507, %508, %509, %510, %511, %512, %513, %514 in 0 : vector<1x256xf32>, vector<1x256xf32>, vector<1x256xf32>, vector<1x256xf32>, vector<1x256xf32>, vector<1x256xf32>, vector<1x256xf32>, vector<1x256xf32>, vector<1x256xf32>, vector<1x256xf32>, vector<1x256xf32>, vector<1x256xf32>, vector<1x256xf32>, vector<1x256xf32>, vector<1x256xf32>, vector<1x256xf32> -> vector<16x256xf32>
    %520 = tpu.concatenate %516, %517, %518, %519, %515 in 0 : vector<16x256xf32>, vector<16x256xf32>, vector<16x256xf32>, vector<16x256xf32>, vector<1x256xf32> -> vector<65x256xf32>
    %521 = vector.extract_strided_slice %0 {offsets = [0, 0], sizes = [24, 65], strides = [1, 1]} : vector<24x128xf32> to vector<24x65xf32>
    %cst_870 = arith.constant dense<0.000000e+00> : vector<24x256xf32>
    %522 = tpu.matmul %521, %520, %cst_870 {dimension_numbers = #tpu.dot_dimension_numbers<[1], [0], [0], [1], [0, 0, 1, 1], [], []>} : vector<24x65xf32>, vector<65x256xf32>, vector<24x256xf32> -> vector<24x256xf32>
    %c6_871 = arith.constant 6 : index
    %c0_872 = arith.constant 0 : index
    %c0_873 = arith.constant 0 : index
    %523 = vector.load %arg3[%c6_871, %c0_872, %c0_873] : memref<8x24x256xf32, #tpu.memory_space<vmem>>, vector<1x24x256xf32>
    %524 = vector.shape_cast %523 : vector<1x24x256xf32> to vector<24x256xf32>
    %525 = vector.shape_cast %522 : vector<24x256xf32> to vector<1x24x256xf32>
    tpu.vector_store %arg3[%c6_871, %c0_872, %c0_873], %525 {strides = array<i32>} : memref<8x24x256xf32, #tpu.memory_space<vmem>>, vector<1x24x256xf32>,
    %c7_874 = arith.constant 7 : index
    %c0_875 = arith.constant 0 : index
    %526 = vector.load %arg1[%c7_874, %c0_875] : memref<8x384xf32, #tpu.memory_space<vmem>>, vector<1x256xf32>
    %c7_876 = arith.constant 7 : index
    %c1_877 = arith.constant 1 : index
    %527 = vector.load %arg1[%c7_876, %c1_877] : memref<8x384xf32, #tpu.memory_space<vmem>>, vector<1x256xf32>
    %c7_878 = arith.constant 7 : index
    %c2_879 = arith.constant 2 : index
    %528 = vector.load %arg1[%c7_878, %c2_879] : memref<8x384xf32, #tpu.memory_space<vmem>>, vector<1x256xf32>
    %c7_880 = arith.constant 7 : index
    %c3_881 = arith.constant 3 : index
    %529 = vector.load %arg1[%c7_880, %c3_881] : memref<8x384xf32, #tpu.memory_space<vmem>>, vector<1x256xf32>
    %c7_882 = arith.constant 7 : index
    %c4_883 = arith.constant 4 : index
    %530 = vector.load %arg1[%c7_882, %c4_883] : memref<8x384xf32, #tpu.memory_space<vmem>>, vector<1x256xf32>
    %c7_884 = arith.constant 7 : index
    %c5_885 = arith.constant 5 : index
    %531 = vector.load %arg1[%c7_884, %c5_885] : memref<8x384xf32, #tpu.memory_space<vmem>>, vector<1x256xf32>
    %c7_886 = arith.constant 7 : index
    %c6_887 = arith.constant 6 : index
    %532 = vector.load %arg1[%c7_886, %c6_887] : memref<8x384xf32, #tpu.memory_space<vmem>>, vector<1x256xf32>
    %c7_888 = arith.constant 7 : index
    %c7_889 = arith.constant 7 : index
    %533 = vector.load %arg1[%c7_888, %c7_889] : memref<8x384xf32, #tpu.memory_space<vmem>>, vector<1x256xf32>
    %c7_890 = arith.constant 7 : index
    %c8_891 = arith.constant 8 : index
    %534 = vector.load %arg1[%c7_890, %c8_891] : memref<8x384xf32, #tpu.memory_space<vmem>>, vector<1x256xf32>
    %c7_892 = arith.constant 7 : index
    %c9_893 = arith.constant 9 : index
    %535 = vector.load %arg1[%c7_892, %c9_893] : memref<8x384xf32, #tpu.memory_space<vmem>>, vector<1x256xf32>
    %c7_894 = arith.constant 7 : index
    %c10_895 = arith.constant 10 : index
    %536 = vector.load %arg1[%c7_894, %c10_895] : memref<8x384xf32, #tpu.memory_space<vmem>>, vector<1x256xf32>
    %c7_896 = arith.constant 7 : index
    %c11_897 = arith.constant 11 : index
    %537 = vector.load %arg1[%c7_896, %c11_897] : memref<8x384xf32, #tpu.memory_space<vmem>>, vector<1x256xf32>
    %c7_898 = arith.constant 7 : index
    %c12_899 = arith.constant 12 : index
    %538 = vector.load %arg1[%c7_898, %c12_899] : memref<8x384xf32, #tpu.memory_space<vmem>>, vector<1x256xf32>
    %c7_900 = arith.constant 7 : index
    %c13_901 = arith.constant 13 : index
    %539 = vector.load %arg1[%c7_900, %c13_901] : memref<8x384xf32, #tpu.memory_space<vmem>>, vector<1x256xf32>
    %c7_902 = arith.constant 7 : index
    %c14_903 = arith.constant 14 : index
    %540 = vector.load %arg1[%c7_902, %c14_903] : memref<8x384xf32, #tpu.memory_space<vmem>>, vector<1x256xf32>
    %c7_904 = arith.constant 7 : index
    %c15_905 = arith.constant 15 : index
    %541 = vector.load %arg1[%c7_904, %c15_905] : memref<8x384xf32, #tpu.memory_space<vmem>>, vector<1x256xf32>
    %c7_906 = arith.constant 7 : index
    %c16_907 = arith.constant 16 : index
    %542 = vector.load %arg1[%c7_906, %c16_907] : memref<8x384xf32, #tpu.memory_space<vmem>>, vector<1x256xf32>
    %c7_908 = arith.constant 7 : index
    %c17_909 = arith.constant 17 : index
    %543 = vector.load %arg1[%c7_908, %c17_909] : memref<8x384xf32, #tpu.memory_space<vmem>>, vector<1x256xf32>
    %c7_910 = arith.constant 7 : index
    %c18_911 = arith.constant 18 : index
    %544 = vector.load %arg1[%c7_910, %c18_911] : memref<8x384xf32, #tpu.memory_space<vmem>>, vector<1x256xf32>
    %c7_912 = arith.constant 7 : index
    %c19_913 = arith.constant 19 : index
    %545 = vector.load %arg1[%c7_912, %c19_913] : memref<8x384xf32, #tpu.memory_space<vmem>>, vector<1x256xf32>
    %c7_914 = arith.constant 7 : index
    %c20_915 = arith.constant 20 : index
    %546 = vector.load %arg1[%c7_914, %c20_915] : memref<8x384xf32, #tpu.memory_space<vmem>>, vector<1x256xf32>
    %c7_916 = arith.constant 7 : index
    %c21_917 = arith.constant 21 : index
    %547 = vector.load %arg1[%c7_916, %c21_917] : memref<8x384xf32, #tpu.memory_space<vmem>>, vector<1x256xf32>
    %c7_918 = arith.constant 7 : index
    %c22_919 = arith.constant 22 : index
    %548 = vector.load %arg1[%c7_918, %c22_919] : memref<8x384xf32, #tpu.memory_space<vmem>>, vector<1x256xf32>
    %c7_920 = arith.constant 7 : index
    %c23_921 = arith.constant 23 : index
    %549 = vector.load %arg1[%c7_920, %c23_921] : memref<8x384xf32, #tpu.memory_space<vmem>>, vector<1x256xf32>
    %c7_922 = arith.constant 7 : index
    %c24_923 = arith.constant 24 : index
    %550 = vector.load %arg1[%c7_922, %c24_923] : memref<8x384xf32, #tpu.memory_space<vmem>>, vector<1x256xf32>
    %c7_924 = arith.constant 7 : index
    %c25_925 = arith.constant 25 : index
    %551 = vector.load %arg1[%c7_924, %c25_925] : memref<8x384xf32, #tpu.memory_space<vmem>>, vector<1x256xf32>
    %c7_926 = arith.constant 7 : index
    %c26_927 = arith.constant 26 : index
    %552 = vector.load %arg1[%c7_926, %c26_927] : memref<8x384xf32, #tpu.memory_space<vmem>>, vector<1x256xf32>
    %c7_928 = arith.constant 7 : index
    %c27_929 = arith.constant 27 : index
    %553 = vector.load %arg1[%c7_928, %c27_929] : memref<8x384xf32, #tpu.memory_space<vmem>>, vector<1x256xf32>
    %c7_930 = arith.constant 7 : index
    %c28_931 = arith.constant 28 : index
    %554 = vector.load %arg1[%c7_930, %c28_931] : memref<8x384xf32, #tpu.memory_space<vmem>>, vector<1x256xf32>
    %c7_932 = arith.constant 7 : index
    %c29_933 = arith.constant 29 : index
    %555 = vector.load %arg1[%c7_932, %c29_933] : memref<8x384xf32, #tpu.memory_space<vmem>>, vector<1x256xf32>
    %c7_934 = arith.constant 7 : index
    %c30_935 = arith.constant 30 : index
    %556 = vector.load %arg1[%c7_934, %c30_935] : memref<8x384xf32, #tpu.memory_space<vmem>>, vector<1x256xf32>
    %c7_936 = arith.constant 7 : index
    %c31_937 = arith.constant 31 : index
    %557 = vector.load %arg1[%c7_936, %c31_937] : memref<8x384xf32, #tpu.memory_space<vmem>>, vector<1x256xf32>
    %c7_938 = arith.constant 7 : index
    %c32_939 = arith.constant 32 : index
    %558 = vector.load %arg1[%c7_938, %c32_939] : memref<8x384xf32, #tpu.memory_space<vmem>>, vector<1x256xf32>
    %c7_940 = arith.constant 7 : index
    %c33_941 = arith.constant 33 : index
    %559 = vector.load %arg1[%c7_940, %c33_941] : memref<8x384xf32, #tpu.memory_space<vmem>>, vector<1x256xf32>
    %c7_942 = arith.constant 7 : index
    %c34_943 = arith.constant 34 : index
    %560 = vector.load %arg1[%c7_942, %c34_943] : memref<8x384xf32, #tpu.memory_space<vmem>>, vector<1x256xf32>
    %c7_944 = arith.constant 7 : index
    %c35_945 = arith.constant 35 : index
    %561 = vector.load %arg1[%c7_944, %c35_945] : memref<8x384xf32, #tpu.memory_space<vmem>>, vector<1x256xf32>
    %c7_946 = arith.constant 7 : index
    %c36_947 = arith.constant 36 : index
    %562 = vector.load %arg1[%c7_946, %c36_947] : memref<8x384xf32, #tpu.memory_space<vmem>>, vector<1x256xf32>
    %c7_948 = arith.constant 7 : index
    %c37_949 = arith.constant 37 : index
    %563 = vector.load %arg1[%c7_948, %c37_949] : memref<8x384xf32, #tpu.memory_space<vmem>>, vector<1x256xf32>
    %c7_950 = arith.constant 7 : index
    %c38_951 = arith.constant 38 : index
    %564 = vector.load %arg1[%c7_950, %c38_951] : memref<8x384xf32, #tpu.memory_space<vmem>>, vector<1x256xf32>
    %c7_952 = arith.constant 7 : index
    %c39_953 = arith.constant 39 : index
    %565 = vector.load %arg1[%c7_952, %c39_953] : memref<8x384xf32, #tpu.memory_space<vmem>>, vector<1x256xf32>
    %c7_954 = arith.constant 7 : index
    %c40_955 = arith.constant 40 : index
    %566 = vector.load %arg1[%c7_954, %c40_955] : memref<8x384xf32, #tpu.memory_space<vmem>>, vector<1x256xf32>
    %c7_956 = arith.constant 7 : index
    %c41_957 = arith.constant 41 : index
    %567 = vector.load %arg1[%c7_956, %c41_957] : memref<8x384xf32, #tpu.memory_space<vmem>>, vector<1x256xf32>
    %c7_958 = arith.constant 7 : index
    %c42_959 = arith.constant 42 : index
    %568 = vector.load %arg1[%c7_958, %c42_959] : memref<8x384xf32, #tpu.memory_space<vmem>>, vector<1x256xf32>
    %c7_960 = arith.constant 7 : index
    %c43_961 = arith.constant 43 : index
    %569 = vector.load %arg1[%c7_960, %c43_961] : memref<8x384xf32, #tpu.memory_space<vmem>>, vector<1x256xf32>
    %c7_962 = arith.constant 7 : index
    %c44_963 = arith.constant 44 : index
    %570 = vector.load %arg1[%c7_962, %c44_963] : memref<8x384xf32, #tpu.memory_space<vmem>>, vector<1x256xf32>
    %c7_964 = arith.constant 7 : index
    %c45_965 = arith.constant 45 : index
    %571 = vector.load %arg1[%c7_964, %c45_965] : memref<8x384xf32, #tpu.memory_space<vmem>>, vector<1x256xf32>
    %c7_966 = arith.constant 7 : index
    %c46_967 = arith.constant 46 : index
    %572 = vector.load %arg1[%c7_966, %c46_967] : memref<8x384xf32, #tpu.memory_space<vmem>>, vector<1x256xf32>
    %c7_968 = arith.constant 7 : index
    %c47_969 = arith.constant 47 : index
    %573 = vector.load %arg1[%c7_968, %c47_969] : memref<8x384xf32, #tpu.memory_space<vmem>>, vector<1x256xf32>
    %c7_970 = arith.constant 7 : index
    %c48_971 = arith.constant 48 : index
    %574 = vector.load %arg1[%c7_970, %c48_971] : memref<8x384xf32, #tpu.memory_space<vmem>>, vector<1x256xf32>
    %c7_972 = arith.constant 7 : index
    %c49_973 = arith.constant 49 : index
    %575 = vector.load %arg1[%c7_972, %c49_973] : memref<8x384xf32, #tpu.memory_space<vmem>>, vector<1x256xf32>
    %c7_974 = arith.constant 7 : index
    %c50_975 = arith.constant 50 : index
    %576 = vector.load %arg1[%c7_974, %c50_975] : memref<8x384xf32, #tpu.memory_space<vmem>>, vector<1x256xf32>
    %c7_976 = arith.constant 7 : index
    %c51_977 = arith.constant 51 : index
    %577 = vector.load %arg1[%c7_976, %c51_977] : memref<8x384xf32, #tpu.memory_space<vmem>>, vector<1x256xf32>
    %c7_978 = arith.constant 7 : index
    %c52_979 = arith.constant 52 : index
    %578 = vector.load %arg1[%c7_978, %c52_979] : memref<8x384xf32, #tpu.memory_space<vmem>>, vector<1x256xf32>
    %c7_980 = arith.constant 7 : index
    %c53_981 = arith.constant 53 : index
    %579 = vector.load %arg1[%c7_980, %c53_981] : memref<8x384xf32, #tpu.memory_space<vmem>>, vector<1x256xf32>
    %c7_982 = arith.constant 7 : index
    %c54_983 = arith.constant 54 : index
    %580 = vector.load %arg1[%c7_982, %c54_983] : memref<8x384xf32, #tpu.memory_space<vmem>>, vector<1x256xf32>
    %c7_984 = arith.constant 7 : index
    %c55_985 = arith.constant 55 : index
    %581 = vector.load %arg1[%c7_984, %c55_985] : memref<8x384xf32, #tpu.memory_space<vmem>>, vector<1x256xf32>
    %c7_986 = arith.constant 7 : index
    %c56_987 = arith.constant 56 : index
    %582 = vector.load %arg1[%c7_986, %c56_987] : memref<8x384xf32, #tpu.memory_space<vmem>>, vector<1x256xf32>
    %c7_988 = arith.constant 7 : index
    %c57_989 = arith.constant 57 : index
    %583 = vector.load %arg1[%c7_988, %c57_989] : memref<8x384xf32, #tpu.memory_space<vmem>>, vector<1x256xf32>
    %c7_990 = arith.constant 7 : index
    %c58_991 = arith.constant 58 : index
    %584 = vector.load %arg1[%c7_990, %c58_991] : memref<8x384xf32, #tpu.memory_space<vmem>>, vector<1x256xf32>
    %c7_992 = arith.constant 7 : index
    %c59_993 = arith.constant 59 : index
    %585 = vector.load %arg1[%c7_992, %c59_993] : memref<8x384xf32, #tpu.memory_space<vmem>>, vector<1x256xf32>
    %c7_994 = arith.constant 7 : index
    %c60_995 = arith.constant 60 : index
    %586 = vector.load %arg1[%c7_994, %c60_995] : memref<8x384xf32, #tpu.memory_space<vmem>>, vector<1x256xf32>
    %c7_996 = arith.constant 7 : index
    %c61_997 = arith.constant 61 : index
    %587 = vector.load %arg1[%c7_996, %c61_997] : memref<8x384xf32, #tpu.memory_space<vmem>>, vector<1x256xf32>
    %c7_998 = arith.constant 7 : index
    %c62_999 = arith.constant 62 : index
    %588 = vector.load %arg1[%c7_998, %c62_999] : memref<8x384xf32, #tpu.memory_space<vmem>>, vector<1x256xf32>
    %c7_1000 = arith.constant 7 : index
    %c63_1001 = arith.constant 63 : index
    %589 = vector.load %arg1[%c7_1000, %c63_1001] : memref<8x384xf32, #tpu.memory_space<vmem>>, vector<1x256xf32>
    %c7_1002 = arith.constant 7 : index
    %c64_1003 = arith.constant 64 : index
    %590 = vector.load %arg1[%c7_1002, %c64_1003] : memref<8x384xf32, #tpu.memory_space<vmem>>, vector<1x256xf32>
    %591 = tpu.concatenate %526, %527, %528, %529, %530, %531, %532, %533, %534, %535, %536, %537, %538, %539, %540, %541 in 0 : vector<1x256xf32>, vector<1x256xf32>, vector<1x256xf32>, vector<1x256xf32>, vector<1x256xf32>, vector<1x256xf32>, vector<1x256xf32>, vector<1x256xf32>, vector<1x256xf32>, vector<1x256xf32>, vector<1x256xf32>, vector<1x256xf32>, vector<1x256xf32>, vector<1x256xf32>, vector<1x256xf32>, vector<1x256xf32> -> vector<16x256xf32>
    %592 = tpu.concatenate %542, %543, %544, %545, %546, %547, %548, %549, %550, %551, %552, %553, %554, %555, %556, %557 in 0 : vector<1x256xf32>, vector<1x256xf32>, vector<1x256xf32>, vector<1x256xf32>, vector<1x256xf32>, vector<1x256xf32>, vector<1x256xf32>, vector<1x256xf32>, vector<1x256xf32>, vector<1x256xf32>, vector<1x256xf32>, vector<1x256xf32>, vector<1x256xf32>, vector<1x256xf32>, vector<1x256xf32>, vector<1x256xf32> -> vector<16x256xf32>
    %593 = tpu.concatenate %558, %559, %560, %561, %562, %563, %564, %565, %566, %567, %568, %569, %570, %571, %572, %573 in 0 : vector<1x256xf32>, vector<1x256xf32>, vector<1x256xf32>, vector<1x256xf32>, vector<1x256xf32>, vector<1x256xf32>, vector<1x256xf32>, vector<1x256xf32>, vector<1x256xf32>, vector<1x256xf32>, vector<1x256xf32>, vector<1x256xf32>, vector<1x256xf32>, vector<1x256xf32>, vector<1x256xf32>, vector<1x256xf32> -> vector<16x256xf32>
    %594 = tpu.concatenate %574, %575, %576, %577, %578, %579, %580, %581, %582, %583, %584, %585, %586, %587, %588, %589 in 0 : vector<1x256xf32>, vector<1x256xf32>, vector<1x256xf32>, vector<1x256xf32>, vector<1x256xf32>, vector<1x256xf32>, vector<1x256xf32>, vector<1x256xf32>, vector<1x256xf32>, vector<1x256xf32>, vector<1x256xf32>, vector<1x256xf32>, vector<1x256xf32>, vector<1x256xf32>, vector<1x256xf32>, vector<1x256xf32> -> vector<16x256xf32>
    %595 = tpu.concatenate %591, %592, %593, %594, %590 in 0 : vector<16x256xf32>, vector<16x256xf32>, vector<16x256xf32>, vector<16x256xf32>, vector<1x256xf32> -> vector<65x256xf32>
    %596 = vector.extract_strided_slice %0 {offsets = [0, 0], sizes = [24, 65], strides = [1, 1]} : vector<24x128xf32> to vector<24x65xf32>
    %cst_1004 = arith.constant dense<0.000000e+00> : vector<24x256xf32>
    %597 = tpu.matmul %596, %595, %cst_1004 {dimension_numbers = #tpu.dot_dimension_numbers<[1], [0], [0], [1], [0, 0, 1, 1], [], []>} : vector<24x65xf32>, vector<65x256xf32>, vector<24x256xf32> -> vector<24x256xf32>
    %c7_1005 = arith.constant 7 : index
    %c0_1006 = arith.constant 0 : index
    %c0_1007 = arith.constant 0 : index
    %598 = vector.load %arg3[%c7_1005, %c0_1006, %c0_1007] : memref<8x24x256xf32, #tpu.memory_space<vmem>>, vector<1x24x256xf32>
    %599 = vector.shape_cast %598 : vector<1x24x256xf32> to vector<24x256xf32>
    %600 = vector.shape_cast %597 : vector<24x256xf32> to vector<1x24x256xf32>
    tpu.vector_store %arg3[%c7_1005, %c0_1006, %c0_1007], %600 {strides = array<i32>} : memref<8x24x256xf32, #tpu.memory_space<vmem>>, vector<1x24x256xf32>,
    return
  }
  func.func @transform_0(%arg0: i32) -> (i32, i32) {
    %c0_i32 = arith.constant 0 : i32
    %c0_i32_0 = arith.constant 0 : i32
    return %arg0, %c0_i32 : i32, i32
  }
  func.func @transform_1(%arg0: i32) -> (i32, i32) {
    %c0_i32 = arith.constant 0 : i32
    %c0_i32_0 = arith.constant 0 : i32
    %c0_i32_1 = arith.constant 0 : i32
    return %c0_i32, %c0_i32_0 : i32, i32
  }
  func.func @transform_2(%arg0: i32) -> (i32, i32, i32) {
    %c0_i32 = arith.constant 0 : i32
    %c0_i32_0 = arith.constant 0 : i32
    %c0_i32_1 = arith.constant 0 : i32
    return %arg0, %c0_i32, %c0_i32_0 : i32, i32, i32
  }
}

</mosaic_0001>

<llo_original>
// kernel: tpu_custom_call.1
$region0: #{tpu_custom_call.1}
  #allocation0 [shape = 'u32[]', space=smem, size = 0x4, offset = 0x4, fixed_abs, tag = 'smem constant byte address 0x4 - core index']
  #allocation1 [shape = 'u32[144,128]{1,0:T(1,128)}', space=vmem, size = 0x12000, scoped, tag = 'internal scratch']
  %s0 = inlined_call_operand.hbm [shape: f32[8,384], index: 0, kind: input, shape index: {}]
  %s1 = inlined_call_operand.hbm [shape: f32[24,128], index: 1, kind: input, shape index: {}]
  %s2 = inlined_call_operand.hbm [shape: f32[8,24,256], index: 2, kind: output, shape index: {}]
  %s3 = sld [smem:[#allocation0]]
  $region26: #{tpu_custom_call.1} parent=0
    _
  %s5 = ssub.s32 1, %s3
  %s6 = scalar_select 0, %s5, %s3
  $region1: #{tpu_custom_call.1} parent=0
    #allocation2 [shape = 'u8[12288]{0}', space=vmem, size = 0x3000, scoped, tag = 'input window, operand 0, single buffered']
    #allocation3 [shape = 's32[1]{0}', space=sflag, size = 0x4, scoped, tag = 'scoped memory for tpu_custom_call.1']
    #allocation4 [shape = 's32[1]{0}', space=sflag, size = 0x4, scoped, tag = 'scoped memory for tpu_custom_call.1']
    #allocation5 [shape = 'u8[12288]{0}', space=vmem, size = 0x3000, scoped, tag = 'input window, operand 1, single buffered']
    #allocation6 [shape = 's32[1]{0}', space=sflag, size = 0x4, scoped, tag = 'scoped memory for tpu_custom_call.1']
    #allocation7 [shape = 'u8[196608]{0}', space=vmem, size = 0x30000, scoped, tag = 'output window, operand 0, single buffered']
    %7 = vsyncpa [#allocation3], 0
    %8 = vsyncpa [#allocation6], 0
    %9 = vsyncpa [#allocation4], 0
    // Predicated region
    $region2: #{tpu_custom_call.1} parent=1 // pred_check
      _
    $region3: #{tpu_custom_call.1} parent=1 // pred_check_branch
      %11 = sbr.rel (0) target = $region5
    $region4: #{tpu_custom_call.1} parent=1 // pred_region
      %s13 = ssub.s32 384, 384
      %14 = vsyncadd [#allocation3], %s13
      %s16 = sshll.u32 [#allocation2], 4
      %s17 = int_to_ptr.vmem [resolvable:$true] %s16
      %19 = dma.hbm_to_vmem [thread:$0]  %s0, 384, %s17, [#allocation3]
    $region5: #{tpu_custom_call.1} parent=1 // pred_fallthru
      _
    // Predicated region
    $region6: #{tpu_custom_call.1} parent=1 // pred_check
      _
    $region7: #{tpu_custom_call.1} parent=1 // pred_check_branch
      %21 = sbr.rel (0) target = $region9
    $region8: #{tpu_custom_call.1} parent=1 // pred_region
      %s23 = ssub.s32 384, 384
      %24 = vsyncadd [#allocation6], %s23
      %s25 = sshll.u32 [#allocation5], 4
      %s26 = int_to_ptr.vmem [resolvable:$true] %s25
      %31 = dma.hbm_to_vmem [thread:$0]  %s1, 384, %s26, [#allocation6], 128, 128, 8
    $region9: #{tpu_custom_call.1} parent=1 // pred_fallthru
      _
    // Predicated region
    $region10: #{tpu_custom_call.1} parent=1 // pred_check
      _
    $region11: #{tpu_custom_call.1} parent=1 // pred_check_branch
      %33 = sbr.rel (0) target = $region13
    $region12: #{tpu_custom_call.1} parent=1 // pred_region
      %34 = dma.done [#allocation3], 384
    $region13: #{tpu_custom_call.1} parent=1 // pred_fallthru
      _
    // Predicated region
    $region14: #{tpu_custom_call.1} parent=1 // pred_check
      _
    $region15: #{tpu_custom_call.1} parent=1 // pred_check_branch
      %36 = sbr.rel (0) target = $region17
    $region16: #{tpu_custom_call.1} parent=1 // pred_region
      %37 = dma.done [#allocation6], 384
    $region17: #{tpu_custom_call.1} parent=1 // pred_fallthru
      _
    %v38 = vld [vmem:[#allocation5] sm:$0xff]
    %v39 = vld [vmem:[#allocation5 + $0x8] sm:$0xff]
    %v40 = vld [vmem:[#allocation5 + $0x10] sm:$0xff]
    %v41 = vld [vmem:[#allocation2] ss:$8 sm:$0x3]
    %v42 = vld [vmem:[#allocation2] ss:$8 sm:$0x7]
    %v44 = vlaneseq
    %v45 = vshrl.u32 %v44, 7
    %v46 = vsub.s32 0, %v45
    %v47 = vrot.slane %v41, %v46
    %v48 = vlaneseq
    %v49 = vshrl.u32 %v48, 7
    %v50 = vsub.s32 1, %v49
    %v51 = vrot.slane %v41, %v50
    %v55 = vlaneseq
    %v56 = vshrl.u32 %v55, 7
    %v57 = vsub.s32 0, %v56
    %v58 = vrot.slane %v42, %v57
    %v59 = vlaneseq
    %v60 = vshrl.u32 %v59, 7
    %v61 = vsub.s32 1, %v60
    %v62 = vrot.slane %v42, %v61
    %v63 = vlaneseq
    %v64 = vshrl.u32 %v63, 7
    %v65 = vsub.s32 2, %v64
    %v66 = vrot.slane %v42, %v65
    %67 = vrot.lane.b32.xlu0 %v58, 127
    %v68 = vpop.permute.xlu0 %67
    %69 = vrot.lane.b32.xlu0 %v62, 127
    %v70 = vpop.permute.xlu0 %69
    %71 = vrot.lane.b32.xlu0 %v66, 127
    %v72 = vpop.permute.xlu0 %71
    %vm73 = vcmask 1039360
    %v74 = vsel %vm73, %v68, %v70
    %v75 = vsel %vm73, %v70, %v72
    %78 = vrot.lane.b32.xlu0 %v58, 126
    %v79 = vpop.permute.xlu0 %78
    %80 = vrot.lane.b32.xlu0 %v62, 126
    %v81 = vpop.permute.xlu0 %80
    %82 = vrot.lane.b32.xlu0 %v66, 126
    %v83 = vpop.permute.xlu0 %82
    %vm84 = vcmask 1031168
    %v85 = vsel %vm84, %v79, %v81
    %v86 = vsel %vm84, %v81, %v83
    %89 = vrot.lane.b32.xlu0 %v58, 125
    %v90 = vpop.permute.xlu0 %89
    %91 = vrot.lane.b32.xlu0 %v62, 125
    %v92 = vpop.permute.xlu0 %91
    %93 = vrot.lane.b32.xlu0 %v66, 125
    %v94 = vpop.permute.xlu0 %93
    %vm95 = vcmask 1022976
    %v96 = vsel %vm95, %v90, %v92
    %v97 = vsel %vm95, %v92, %v94
    %100 = vrot.lane.b32.xlu0 %v58, 124
    %v101 = vpop.permute.xlu0 %100
    %102 = vrot.lane.b32.xlu0 %v62, 124
    %v103 = vpop.permute.xlu0 %102
    %104 = vrot.lane.b32.xlu0 %v66, 124
    %v105 = vpop.permute.xlu0 %104
    %vm106 = vcmask 1014784
    %v107 = vsel %vm106, %v101, %v103
    %v108 = vsel %vm106, %v103, %v105
    %111 = vrot.lane.b32.xlu0 %v58, 123
    %v112 = vpop.permute.xlu0 %111
    %113 = vrot.lane.b32.xlu0 %v62, 123
    %v114 = vpop.permute.xlu0 %113
    %115 = vrot.lane.b32.xlu0 %v66, 123
    %v116 = vpop.permute.xlu0 %115
    %vm117 = vcmask 1006592
    %v118 = vsel %vm117, %v112, %v114
    %v119 = vsel %vm117, %v114, %v116
    %122 = vrot.lane.b32.xlu0 %v58, 122
    %v123 = vpop.permute.xlu0 %122
    %124 = vrot.lane.b32.xlu0 %v62, 122
    %v125 = vpop.permute.xlu0 %124
    %126 = vrot.lane.b32.xlu0 %v66, 122
    %v127 = vpop.permute.xlu0 %126
    %vm128 = vcmask 998400
    %v129 = vsel %vm128, %v123, %v125
    %v130 = vsel %vm128, %v125, %v127
    %133 = vrot.lane.b32.xlu0 %v58, 121
    %v134 = vpop.permute.xlu0 %133
    %135 = vrot.lane.b32.xlu0 %v62, 121
    %v136 = vpop.permute.xlu0 %135
    %137 = vrot.lane.b32.xlu0 %v66, 121
    %v138 = vpop.permute.xlu0 %137
    %vm139 = vcmask 990208
    %v140 = vsel %vm139, %v134, %v136
    %v141 = vsel %vm139, %v136, %v138
    %144 = vrot.lane.b32.xlu0 %v58, 120
    %v145 = vpop.permute.xlu0 %144
    %146 = vrot.lane.b32.xlu0 %v62, 120
    %v147 = vpop.permute.xlu0 %146
    %148 = vrot.lane.b32.xlu0 %v66, 120
    %v149 = vpop.permute.xlu0 %148
    %vm150 = vcmask 982016
    %v151 = vsel %vm150, %v145, %v147
    %v152 = vsel %vm150, %v147, %v149
    %155 = vrot.lane.b32.xlu0 %v58, 119
    %v156 = vpop.permute.xlu0 %155
    %157 = vrot.lane.b32.xlu0 %v62, 119
    %v158 = vpop.permute.xlu0 %157
    %159 = vrot.lane.b32.xlu0 %v66, 119
    %v160 = vpop.permute.xlu0 %159
    %vm161 = vcmask 973824
    %v162 = vsel %vm161, %v156, %v158
    %v163 = vsel %vm161, %v158, %v160
    %166 = vrot.lane.b32.xlu0 %v58, 118
    %v167 = vpop.permute.xlu0 %166
    %168 = vrot.lane.b32.xlu0 %v62, 118
    %v169 = vpop.permute.xlu0 %168
    %170 = vrot.lane.b32.xlu0 %v66, 118
    %v171 = vpop.permute.xlu0 %170
    %vm172 = vcmask 965632
    %v173 = vsel %vm172, %v167, %v169
    %v174 = vsel %vm172, %v169, %v171
    %177 = vrot.lane.b32.xlu0 %v58, 117
    %v178 = vpop.permute.xlu0 %177
    %179 = vrot.lane.b32.xlu0 %v62, 117
    %v180 = vpop.permute.xlu0 %179
    %181 = vrot.lane.b32.xlu0 %v66, 117
    %v182 = vpop.permute.xlu0 %181
    %vm183 = vcmask 957440
    %v184 = vsel %vm183, %v178, %v180
    %v185 = vsel %vm183, %v180, %v182
    %188 = vrot.lane.b32.xlu0 %v58, 116
    %v189 = vpop.permute.xlu0 %188
    %190 = vrot.lane.b32.xlu0 %v62, 116
    %v191 = vpop.permute.xlu0 %190
    %192 = vrot.lane.b32.xlu0 %v66, 116
    %v193 = vpop.permute.xlu0 %192
    %vm194 = vcmask 949248
    %v195 = vsel %vm194, %v189, %v191
    %v196 = vsel %vm194, %v191, %v193
    %199 = vrot.lane.b32.xlu0 %v58, 115
    %v200 = vpop.permute.xlu0 %199
    %201 = vrot.lane.b32.xlu0 %v62, 115
    %v202 = vpop.permute.xlu0 %201
    %203 = vrot.lane.b32.xlu0 %v66, 115
    %v204 = vpop.permute.xlu0 %203
    %vm205 = vcmask 941056
    %v206 = vsel %vm205, %v200, %v202
    %v207 = vsel %vm205, %v202, %v204
    %210 = vrot.lane.b32.xlu0 %v58, 114
    %v211 = vpop.permute.xlu0 %210
    %212 = vrot.lane.b32.xlu0 %v62, 114
    %v213 = vpop.permute.xlu0 %212
    %214 = vrot.lane.b32.xlu0 %v66, 114
    %v215 = vpop.permute.xlu0 %214
    %vm216 = vcmask 932864
    %v217 = vsel %vm216, %v211, %v213
    %v218 = vsel %vm216, %v213, %v215
    %221 = vrot.lane.b32.xlu0 %v58, 113
    %v222 = vpop.permute.xlu0 %221
    %223 = vrot.lane.b32.xlu0 %v62, 113
    %v224 = vpop.permute.xlu0 %223
    %225 = vrot.lane.b32.xlu0 %v66, 113
    %v226 = vpop.permute.xlu0 %225
    %vm227 = vcmask 924672
    %v228 = vsel %vm227, %v222, %v224
    %v229 = vsel %vm227, %v224, %v226
    %vm232 = vcmask 1040384
    %v233 = vsel %vm232, %v47, %v74
    %v234 = vsel %vm232, %v51, %v75
    %vm235 = vcmask 1041408
    %v236 = vsel %vm235, %v233, %v85
    %v237 = vsel %vm235, %v234, %v86
    %vm238 = vcmask 1042432
    %v239 = vsel %vm238, %v236, %v96
    %v240 = vsel %vm238, %v237, %v97
    %vm241 = vcmask 1043456
    %v242 = vsel %vm241, %v239, %v107
    %v243 = vsel %vm241, %v240, %v108
    %vm244 = vcmask 1044480
    %v245 = vsel %vm244, %v242, %v118
    %v246 = vsel %vm244, %v243, %v119
    %vm247 = vcmask 1045504
    %v248 = vsel %vm247, %v245, %v129
    %v249 = vsel %vm247, %v246, %v130
    %vm250 = vcmask 1046528
    %v251 = vsel %vm250, %v248, %v140
    %v252 = vsel %vm250, %v249, %v141
    %v253 = vsel %vm232, %v151, %v162
    %v254 = vsel %vm232, %v152, %v163
    %v255 = vsel %vm235, %v253, %v173
    %v256 = vsel %vm235, %v254, %v174
    %v257 = vsel %vm238, %v255, %v184
    %v258 = vsel %vm238, %v256, %v185
    %v259 = vsel %vm241, %v257, %v195
    %v260 = vsel %vm241, %v258, %v196
    %v261 = vsel %vm244, %v259, %v206
    %v262 = vsel %vm244, %v260, %v207
    %v263 = vsel %vm247, %v261, %v217
    %v264 = vsel %vm247, %v262, %v218
    %v265 = vsel %vm250, %v263, %v228
    %v266 = vsel %vm250, %v264, %v229
    %v285 = vsel %vm232, %v58, %v74
    %v286 = vsel %vm232, %v62, %v75
    %v287 = vsel %vm232, %v66, %v72
    %v288 = vsel %vm235, %v285, %v85
    %v289 = vsel %vm235, %v286, %v86
    %v290 = vsel %vm235, %v287, %v83
    %v291 = vsel %vm238, %v288, %v96
    %v292 = vsel %vm238, %v289, %v97
    %v293 = vsel %vm238, %v290, %v94
    %v294 = vsel %vm241, %v291, %v107
    %v295 = vsel %vm241, %v292, %v108
    %v296 = vsel %vm241, %v293, %v105
    %v297 = vsel %vm244, %v294, %v118
    %v298 = vsel %vm244, %v295, %v119
    %v299 = vsel %vm244, %v296, %v116
    %v300 = vsel %vm247, %v297, %v129
    %v301 = vsel %vm247, %v298, %v130
    %v302 = vsel %vm247, %v299, %v127
    %v303 = vsel %vm250, %v300, %v140
    %v304 = vsel %vm250, %v301, %v141
    %v305 = vsel %vm250, %v302, %v138
    %v306 = vsel %vm232, %v149, %v160
    %v307 = vsel %vm235, %v306, %v171
    %v308 = vsel %vm238, %v307, %v182
    %v309 = vsel %vm241, %v308, %v193
    %v310 = vsel %vm244, %v309, %v204
    %v311 = vsel %vm247, %v310, %v215
    %v312 = vsel %vm250, %v311, %v226
    %319 = vrot.lane.b32.xlu0 %v303, 112
    %v320 = vpop.permute.xlu0 %319
    %321 = vrot.lane.b32.xlu0 %v304, 112
    %v322 = vpop.permute.xlu0 %321
    %323 = vrot.lane.b32.xlu0 %v305, 112
    %v324 = vpop.permute.xlu0 %323
    %325 = vrot.lane.b32.xlu0 %v265, 112
    %v326 = vpop.permute.xlu0 %325
    %327 = vrot.lane.b32.xlu0 %v266, 112
    %v328 = vpop.permute.xlu0 %327
    %329 = vrot.lane.b32.xlu0 %v312, 112
    %v330 = vpop.permute.xlu0 %329
    %vm331 = vcmask 916480
    %v332 = vsel %vm331, %v320, %v322
    %v333 = vsel %vm331, %v322, %v324
    %v334 = vsel %vm331, %v326, %v328
    %v335 = vsel %vm331, %v328, %v330
    %340 = vrot.lane.b32.xlu0 %v303, 96
    %v341 = vpop.permute.xlu0 %340
    %342 = vrot.lane.b32.xlu0 %v304, 96
    %v343 = vpop.permute.xlu0 %342
    %344 = vrot.lane.b32.xlu0 %v305, 96
    %v345 = vpop.permute.xlu0 %344
    %346 = vrot.lane.b32.xlu0 %v265, 96
    %v347 = vpop.permute.xlu0 %346
    %348 = vrot.lane.b32.xlu0 %v266, 96
    %v349 = vpop.permute.xlu0 %348
    %350 = vrot.lane.b32.xlu0 %v312, 96
    %v351 = vpop.permute.xlu0 %350
    %vm352 = vcmask 785408
    %v353 = vsel %vm352, %v341, %v343
    %v354 = vsel %vm352, %v343, %v345
    %v355 = vsel %vm352, %v347, %v349
    %v356 = vsel %vm352, %v349, %v351
    %361 = vrot.lane.b32.xlu0 %v303, 80
    %v362 = vpop.permute.xlu0 %361
    %363 = vrot.lane.b32.xlu0 %v304, 80
    %v364 = vpop.permute.xlu0 %363
    %365 = vrot.lane.b32.xlu0 %v305, 80
    %v366 = vpop.permute.xlu0 %365
    %367 = vrot.lane.b32.xlu0 %v265, 80
    %v368 = vpop.permute.xlu0 %367
    %369 = vrot.lane.b32.xlu0 %v266, 80
    %v370 = vpop.permute.xlu0 %369
    %371 = vrot.lane.b32.xlu0 %v312, 80
    %v372 = vpop.permute.xlu0 %371
    %vm373 = vcmask 654336
    %v374 = vsel %vm373, %v362, %v364
    %v375 = vsel %vm373, %v364, %v366
    %v376 = vsel %vm373, %v368, %v370
    %v377 = vsel %vm373, %v370, %v372
    %382 = vrot.lane.b32.xlu0 %v58, 64
    %v383 = vpop.permute.xlu0 %382
    %384 = vrot.lane.b32.xlu0 %v62, 64
    %v385 = vpop.permute.xlu0 %384
    %386 = vrot.lane.b32.xlu0 %v66, 64
    %v387 = vpop.permute.xlu0 %386
    %vm388 = vcmask 523264
    %v389 = vsel %vm388, %v383, %v385
    %v390 = vsel %vm388, %v385, %v387
    %vm391 = vcmask 531456
    %v393 = vsel %vm391, %v38, 0
    %v396 = vsel %vm391, %v39, 0
    %v399 = vsel %vm391, %v40, 0
    %v401 = vsel %vm232, %v389, 0
    %v403 = vsel %vm232, %v390, 0
    %405 = vmatprep.subr.mxu0 %v252
    %406 = vmatpush1.msra.mxu0 %v251
    %407 = vmatprep.subr.mxu0 %v266
    %408 = vmatpush1.msra.mxu0 %v265
    %409 = vmatprep.subr.mxu0 %v333
    %410 = vmatpush1.msra.mxu0 %v332
    %411 = vmatprep.subr.mxu0 %v335
    %412 = vmatpush1.msra.mxu0 %v334
    %413 = vmatprep.subr.mxu0 %v354
    %414 = vmatpush1.msra.mxu0 %v353
    %415 = vmatprep.subr.mxu0 %v356
    %416 = vmatpush1.msra.mxu0 %v355
    %417 = vmatprep.subr.mxu0 %v375
    %418 = vmatpush1.msra.mxu0 %v374
    %419 = vmatprep.subr.mxu0 %v377
    %420 = vmatpush1.msra.mxu0 %v376
    %421 = vmatprep.subr.mxu0 %v403
    %422 = vmatpush1.msra.mxu0 %v401
    %423 = vmatprep.subr.mxu0 0.0
    %424 = vmatpush1.msra.mxu0 0.0
    %425 = vmatprep.subr.mxu0 0.0
    %426 = vmatpush1.msra.mxu0 0.0
    %427 = vmatprep.subr.mxu0 0.0
    %428 = vmatpush1.msra.mxu0 0.0
    %429 = vmatprep.subr.mxu0 0.0
    %430 = vmatpush1.msra.mxu0 0.0
    %431 = vmatprep.subr.mxu0 0.0
    %432 = vmatpush1.msra.mxu0 0.0
    %433 = vmatprep.subr.mxu0 0.0
    %434 = vmatpush1.msra.mxu0 0.0
    %435 = vmatprep.subr.mxu0 0.0
    %436 = vmatpush1.msra.mxu0 0.0
    %437 = vmatprep.subr.mxu0 0.0
    %438 = vmatpush1.msra.mxu0 0.0
    %439 = vmatprep.subr.mxu0 0.0
    %440 = vmatpush1.msra.mxu0 0.0
    %441 = vmatprep.subr.mxu0 0.0
    %442 = vmatpush1.msra.mxu0 0.0
    %443 = vmatprep.subr.mxu0 0.0
    %444 = vmatpush1.msra.mxu0 0.0
    %445 = vmatprep.subr.mxu0 0.0
    %446 = vmatpush1.msra.mxu0 0.0
    %447 = vmatprep.subr.mxu0 0.0
    %448 = vmatpush1.msra.mxu0 0.0
    %449 = vmatprep.subr.mxu0 0.0
    %450 = vmatpush1.msra.mxu0 0.0
    %451 = vmatprep.subr.mxu0 0.0
    %452 = vmatpush1.msra.mxu0 0.0
    %453 = vmatprep.subr.mxu0 0.0
    %454 = vmatpush1.msra.mxu0 0.0
    %455 = vmatprep.subr.mxu0 0.0
    %456 = vmatpush1.msra.mxu0 0.0
    %457 = vmatprep.subr.mxu0 0.0
    %458 = vmatpush1.msra.mxu0 0.0
    %459 = vmatprep.subr.mxu0 0.0
    %460 = vmatpush1.msra.mxu0 0.0
    %461 = vmatprep.subr.mxu0 0.0
    %462 = vmatpush1.msra.mxu0 0.0
    %463 = vmatprep.subr.mxu0 0.0
    %464 = vmatpush1.msra.mxu0 0.0
    %465 = vmatprep.subr.mxu0 0.0
    %466 = vmatpush1.msra.mxu0 0.0
    %467 = vmatprep.subr.mxu0 0.0
    %468 = vmatpush1.msra.mxu0 0.0
    %469 = vmatprep.mubr.f32.mxu0 0.0
    %470 = vmatmul.mubr.f32.gmra.mrb[0].mxu0 %v393
    %v471 = vpop.f32.mrb[0].mxu0
    %v472 = vadd.f32 0.0, %v471
    %v473 = vpop.f32.mrb[0].mxu0
    %v474 = vadd.f32 0.0, %v473
    %475 = vmatprep.mubr.f32.mxu0 0.0
    %476 = vmatmul.mubr.f32.gmra.mrb[0].mxu0 %v396
    %v477 = vpop.f32.mrb[0].mxu0
    %v478 = vadd.f32 0.0, %v477
    %v479 = vpop.f32.mrb[0].mxu0
    %v480 = vadd.f32 0.0, %v479
    %481 = vmatprep.mubr.f32.mxu0 0.0
    %482 = vmatmul.mubr.f32.gmra.mrb[0].mxu0 %v399
    %v483 = vpop.f32.mrb[0].mxu0
    %v484 = vadd.f32 0.0, %v483
    %v485 = vpop.f32.mrb[0].mxu0
    %v486 = vadd.f32 0.0, %v485
    %487 = vdwg.mxu0
    %488 = vst [vmem:[#allocation7] sm:$0xff] %v472
    %489 = vst [vmem:[#allocation7 + $0x8] sm:$0xff] %v474
    %490 = vst [vmem:[#allocation7 + $0x10] sm:$0xff] %v478
    %491 = vst [vmem:[#allocation7 + $0x18] sm:$0xff] %v480
    %492 = vst [vmem:[#allocation7 + $0x20] sm:$0xff] %v484
    %493 = vst [vmem:[#allocation7 + $0x28] sm:$0xff] %v486
    %s494 = scalar_lea.vmem [#allocation2], 1
    %v495 = vld [vmem:[%s494] ss:$8 sm:$0x3]
    %s496 = scalar_lea.vmem [#allocation2], 1
    %v497 = vld [vmem:[%s496] ss:$8 sm:$0x7]
    %v499 = vlaneseq
    %v500 = vshrl.u32 %v499, 7
    %v501 = vsub.s32 0, %v500
    %v502 = vrot.slane %v495, %v501
    %v503 = vlaneseq
    %v504 = vshrl.u32 %v503, 7
    %v505 = vsub.s32 1, %v504
    %v506 = vrot.slane %v495, %v505
    %v510 = vlaneseq
    %v511 = vshrl.u32 %v510, 7
    %v512 = vsub.s32 0, %v511
    %v513 = vrot.slane %v497, %v512
    %v514 = vlaneseq
    %v515 = vshrl.u32 %v514, 7
    %v516 = vsub.s32 1, %v515
    %v517 = vrot.slane %v497, %v516
    %v518 = vlaneseq
    %v519 = vshrl.u32 %v518, 7
    %v520 = vsub.s32 2, %v519
    %v521 = vrot.slane %v497, %v520
    %522 = vrot.lane.b32.xlu0 %v513, 127
    %v523 = vpop.permute.xlu0 %522
    %524 = vrot.lane.b32.xlu0 %v517, 127
    %v525 = vpop.permute.xlu0 %524
    %526 = vrot.lane.b32.xlu0 %v521, 127
    %v527 = vpop.permute.xlu0 %526
    %v528 = vsel %vm73, %v523, %v525
    %v529 = vsel %vm73, %v525, %v527
    %532 = vrot.lane.b32.xlu0 %v513, 126
    %v533 = vpop.permute.xlu0 %532
    %534 = vrot.lane.b32.xlu0 %v517, 126
    %v535 = vpop.permute.xlu0 %534
    %536 = vrot.lane.b32.xlu0 %v521, 126
    %v537 = vpop.permute.xlu0 %536
    %v538 = vsel %vm84, %v533, %v535
    %v539 = vsel %vm84, %v535, %v537
    %542 = vrot.lane.b32.xlu0 %v513, 125
    %v543 = vpop.permute.xlu0 %542
    %544 = vrot.lane.b32.xlu0 %v517, 125
    %v545 = vpop.permute.xlu0 %544
    %546 = vrot.lane.b32.xlu0 %v521, 125
    %v547 = vpop.permute.xlu0 %546
    %v548 = vsel %vm95, %v543, %v545
    %v549 = vsel %vm95, %v545, %v547
    %552 = vrot.lane.b32.xlu0 %v513, 124
    %v553 = vpop.permute.xlu0 %552
    %554 = vrot.lane.b32.xlu0 %v517, 124
    %v555 = vpop.permute.xlu0 %554
    %556 = vrot.lane.b32.xlu0 %v521, 124
    %v557 = vpop.permute.xlu0 %556
    %v558 = vsel %vm106, %v553, %v555
    %v559 = vsel %vm106, %v555, %v557
    %562 = vrot.lane.b32.xlu0 %v513, 123
    %v563 = vpop.permute.xlu0 %562
    %564 = vrot.lane.b32.xlu0 %v517, 123
    %v565 = vpop.permute.xlu0 %564
    %566 = vrot.lane.b32.xlu0 %v521, 123
    %v567 = vpop.permute.xlu0 %566
    %v568 = vsel %vm117, %v563, %v565
    %v569 = vsel %vm117, %v565, %v567
    %572 = vrot.lane.b32.xlu0 %v513, 122
    %v573 = vpop.permute.xlu0 %572
    %574 = vrot.lane.b32.xlu0 %v517, 122
    %v575 = vpop.permute.xlu0 %574
    %576 = vrot.lane.b32.xlu0 %v521, 122
    %v577 = vpop.permute.xlu0 %576
    %v578 = vsel %vm128, %v573, %v575
    %v579 = vsel %vm128, %v575, %v577
    %582 = vrot.lane.b32.xlu0 %v513, 121
    %v583 = vpop.permute.xlu0 %582
    %584 = vrot.lane.b32.xlu0 %v517, 121
    %v585 = vpop.permute.xlu0 %584
    %586 = vrot.lane.b32.xlu0 %v521, 121
    %v587 = vpop.permute.xlu0 %586
    %v588 = vsel %vm139, %v583, %v585
    %v589 = vsel %vm139, %v585, %v587
    %592 = vrot.lane.b32.xlu0 %v513, 120
    %v593 = vpop.permute.xlu0 %592
    %594 = vrot.lane.b32.xlu0 %v517, 120
    %v595 = vpop.permute.xlu0 %594
    %596 = vrot.lane.b32.xlu0 %v521, 120
    %v597 = vpop.permute.xlu0 %596
    %v598 = vsel %vm150, %v593, %v595
    %v599 = vsel %vm150, %v595, %v597
    %602 = vrot.lane.b32.xlu0 %v513, 119
    %v603 = vpop.permute.xlu0 %602
    %604 = vrot.lane.b32.xlu0 %v517, 119
    %v605 = vpop.permute.xlu0 %604
    %606 = vrot.lane.b32.xlu0 %v521, 119
    %v607 = vpop.permute.xlu0 %606
    %v608 = vsel %vm161, %v603, %v605
    %v609 = vsel %vm161, %v605, %v607
    %612 = vrot.lane.b32.xlu0 %v513, 118
    %v613 = vpop.permute.xlu0 %612
    %614 = vrot.lane.b32.xlu0 %v517, 118
    %v615 = vpop.permute.xlu0 %614
    %616 = vrot.lane.b32.xlu0 %v521, 118
    %v617 = vpop.permute.xlu0 %616
    %v618 = vsel %vm172, %v613, %v615
    %v619 = vsel %vm172, %v615, %v617
    %622 = vrot.lane.b32.xlu0 %v513, 117
    %v623 = vpop.permute.xlu0 %622
    %624 = vrot.lane.b32.xlu0 %v517, 117
    %v625 = vpop.permute.xlu0 %624
    %626 = vrot.lane.b32.xlu0 %v521, 117
    %v627 = vpop.permute.xlu0 %626
    %v628 = vsel %vm183, %v623, %v625
    %v629 = vsel %vm183, %v625, %v627
    %632 = vrot.lane.b32.xlu0 %v513, 116
    %v633 = vpop.permute.xlu0 %632
    %634 = vrot.lane.b32.xlu0 %v517, 116
    %v635 = vpop.permute.xlu0 %634
    %636 = vrot.lane.b32.xlu0 %v521, 116
    %v637 = vpop.permute.xlu0 %636
    %v638 = vsel %vm194, %v633, %v635
    %v639 = vsel %vm194, %v635, %v637
    %642 = vrot.lane.b32.xlu0 %v513, 115
    %v643 = vpop.permute.xlu0 %642
    %644 = vrot.lane.b32.xlu0 %v517, 115
    %v645 = vpop.permute.xlu0 %644
    %646 = vrot.lane.b32.xlu0 %v521, 115
    %v647 = vpop.permute.xlu0 %646
    %v648 = vsel %vm205, %v643, %v645
    %v649 = vsel %vm205, %v645, %v647
    %652 = vrot.lane.b32.xlu0 %v513, 114
    %v653 = vpop.permute.xlu0 %652
    %654 = vrot.lane.b32.xlu0 %v517, 114
    %v655 = vpop.permute.xlu0 %654
    %656 = vrot.lane.b32.xlu0 %v521, 114
    %v657 = vpop.permute.xlu0 %656
    %v658 = vsel %vm216, %v653, %v655
    %v659 = vsel %vm216, %v655, %v657
    %662 = vrot.lane.b32.xlu0 %v513, 113
    %v663 = vpop.permute.xlu0 %662
    %664 = vrot.lane.b32.xlu0 %v517, 113
    %v665 = vpop.permute.xlu0 %664
    %666 = vrot.lane.b32.xlu0 %v521, 113
    %v667 = vpop.permute.xlu0 %666
    %v668 = vsel %vm227, %v663, %v665
    %v669 = vsel %vm227, %v665, %v667
    %v672 = vsel %vm232, %v502, %v528
    %v673 = vsel %vm232, %v506, %v529
    %v674 = vsel %vm235, %v672, %v538
    %v675 = vsel %vm235, %v673, %v539
    %v676 = vsel %vm238, %v674, %v548
    %v677 = vsel %vm238, %v675, %v549
    %v678 = vsel %vm241, %v676, %v558
    %v679 = vsel %vm241, %v677, %v559
    %v680 = vsel %vm244, %v678, %v568
    %v681 = vsel %vm244, %v679, %v569
    %v682 = vsel %vm247, %v680, %v578
    %v683 = vsel %vm247, %v681, %v579
    %v684 = vsel %vm250, %v682, %v588
    %v685 = vsel %vm250, %v683, %v589
    %v686 = vsel %vm232, %v598, %v608
    %v687 = vsel %vm232, %v599, %v609
    %v688 = vsel %vm235, %v686, %v618
    %v689 = vsel %vm235, %v687, %v619
    %v690 = vsel %vm238, %v688, %v628
    %v691 = vsel %vm238, %v689, %v629
    %v692 = vsel %vm241, %v690, %v638
    %v693 = vsel %vm241, %v691, %v639
    %v694 = vsel %vm244, %v692, %v648
    %v695 = vsel %vm244, %v693, %v649
    %v696 = vsel %vm247, %v694, %v658
    %v697 = vsel %vm247, %v695, %v659
    %v698 = vsel %vm250, %v696, %v668
    %v699 = vsel %vm250, %v697, %v669
    %v718 = vsel %vm232, %v513, %v528
    %v719 = vsel %vm232, %v517, %v529
    %v720 = vsel %vm232, %v521, %v527
    %v721 = vsel %vm235, %v718, %v538
    %v722 = vsel %vm235, %v719, %v539
    %v723 = vsel %vm235, %v720, %v537
    %v724 = vsel %vm238, %v721, %v548
    %v725 = vsel %vm238, %v722, %v549
    %v726 = vsel %vm238, %v723, %v547
    %v727 = vsel %vm241, %v724, %v558
    %v728 = vsel %vm241, %v725, %v559
    %v729 = vsel %vm241, %v726, %v557
    %v730 = vsel %vm244, %v727, %v568
    %v731 = vsel %vm244, %v728, %v569
    %v732 = vsel %vm244, %v729, %v567
    %v733 = vsel %vm247, %v730, %v578
    %v734 = vsel %vm247, %v731, %v579
    %v735 = vsel %vm247, %v732, %v577
    %v736 = vsel %vm250, %v733, %v588
    %v737 = vsel %vm250, %v734, %v589
    %v738 = vsel %vm250, %v735, %v587
    %v739 = vsel %vm232, %v597, %v607
    %v740 = vsel %vm235, %v739, %v617
    %v741 = vsel %vm238, %v740, %v627
    %v742 = vsel %vm241, %v741, %v637
    %v743 = vsel %vm244, %v742, %v647
    %v744 = vsel %vm247, %v743, %v657
    %v745 = vsel %vm250, %v744, %v667
    %752 = vrot.lane.b32.xlu0 %v736, 112
    %v753 = vpop.permute.xlu0 %752
    %754 = vrot.lane.b32.xlu0 %v737, 112
    %v755 = vpop.permute.xlu0 %754
    %756 = vrot.lane.b32.xlu0 %v738, 112
    %v757 = vpop.permute.xlu0 %756
    %758 = vrot.lane.b32.xlu0 %v698, 112
    %v759 = vpop.permute.xlu0 %758
    %760 = vrot.lane.b32.xlu0 %v699, 112
    %v761 = vpop.permute.xlu0 %760
    %762 = vrot.lane.b32.xlu0 %v745, 112
    %v763 = vpop.permute.xlu0 %762
    %v764 = vsel %vm331, %v753, %v755
    %v765 = vsel %vm331, %v755, %v757
    %v766 = vsel %vm331, %v759, %v761
    %v767 = vsel %vm331, %v761, %v763
    %772 = vrot.lane.b32.xlu0 %v736, 96
    %v773 = vpop.permute.xlu0 %772
    %774 = vrot.lane.b32.xlu0 %v737, 96
    %v775 = vpop.permute.xlu0 %774
    %776 = vrot.lane.b32.xlu0 %v738, 96
    %v777 = vpop.permute.xlu0 %776
    %778 = vrot.lane.b32.xlu0 %v698, 96
    %v779 = vpop.permute.xlu0 %778
    %780 = vrot.lane.b32.xlu0 %v699, 96
    %v781 = vpop.permute.xlu0 %780
    %782 = vrot.lane.b32.xlu0 %v745, 96
    %v783 = vpop.permute.xlu0 %782
    %v784 = vsel %vm352, %v773, %v775
    %v785 = vsel %vm352, %v775, %v777
    %v786 = vsel %vm352, %v779, %v781
    %v787 = vsel %vm352, %v781, %v783
    %792 = vrot.lane.b32.xlu0 %v736, 80
    %v793 = vpop.permute.xlu0 %792
    %794 = vrot.lane.b32.xlu0 %v737, 80
    %v795 = vpop.permute.xlu0 %794
    %796 = vrot.lane.b32.xlu0 %v738, 80
    %v797 = vpop.permute.xlu0 %796
    %798 = vrot.lane.b32.xlu0 %v698, 80
    %v799 = vpop.permute.xlu0 %798
    %800 = vrot.lane.b32.xlu0 %v699, 80
    %v801 = vpop.permute.xlu0 %800
    %802 = vrot.lane.b32.xlu0 %v745, 80
    %v803 = vpop.permute.xlu0 %802
    %v804 = vsel %vm373, %v793, %v795
    %v805 = vsel %vm373, %v795, %v797
    %v806 = vsel %vm373, %v799, %v801
    %v807 = vsel %vm373, %v801, %v803
    %812 = vrot.lane.b32.xlu0 %v513, 64
    %v813 = vpop.permute.xlu0 %812
    %814 = vrot.lane.b32.xlu0 %v517, 64
    %v815 = vpop.permute.xlu0 %814
    %816 = vrot.lane.b32.xlu0 %v521, 64
    %v817 = vpop.permute.xlu0 %816
    %v818 = vsel %vm388, %v813, %v815
    %v819 = vsel %vm388, %v815, %v817
    %v820 = vsel %vm232, %v818, 0
    %v822 = vsel %vm232, %v819, 0
    %824 = vmatprep.subr.mxu0 %v685
    %825 = vmatpush1.msra.mxu0 %v684
    %826 = vmatprep.subr.mxu0 %v699
    %827 = vmatpush1.msra.mxu0 %v698
    %828 = vmatprep.subr.mxu0 %v765
    %829 = vmatpush1.msra.mxu0 %v764
    %830 = vmatprep.subr.mxu0 %v767
    %831 = vmatpush1.msra.mxu0 %v766
    %832 = vmatprep.subr.mxu0 %v785
    %833 = vmatpush1.msra.mxu0 %v784
    %834 = vmatprep.subr.mxu0 %v787
    %835 = vmatpush1.msra.mxu0 %v786
    %836 = vmatprep.subr.mxu0 %v805
    %837 = vmatpush1.msra.mxu0 %v804
    %838 = vmatprep.subr.mxu0 %v807
    %839 = vmatpush1.msra.mxu0 %v806
    %840 = vmatprep.subr.mxu0 %v822
    %841 = vmatpush1.msra.mxu0 %v820
    %842 = vmatprep.subr.mxu0 0.0
    %843 = vmatpush1.msra.mxu0 0.0
    %844 = vmatprep.subr.mxu0 0.0
    %845 = vmatpush1.msra.mxu0 0.0
    %846 = vmatprep.subr.mxu0 0.0
    %847 = vmatpush1.msra.mxu0 0.0
    %848 = vmatprep.subr.mxu0 0.0
    %849 = vmatpush1.msra.mxu0 0.0
    %850 = vmatprep.subr.mxu0 0.0
    %851 = vmatpush1.msra.mxu0 0.0
    %852 = vmatprep.subr.mxu0 0.0
    %853 = vmatpush1.msra.mxu0 0.0
    %854 = vmatprep.subr.mxu0 0.0
    %855 = vmatpush1.msra.mxu0 0.0
    %856 = vmatprep.subr.mxu0 0.0
    %857 = vmatpush1.msra.mxu0 0.0
    %858 = vmatprep.subr.mxu0 0.0
    %859 = vmatpush1.msra.mxu0 0.0
    %860 = vmatprep.subr.mxu0 0.0
    %861 = vmatpush1.msra.mxu0 0.0
    %862 = vmatprep.subr.mxu0 0.0
    %863 = vmatpush1.msra.mxu0 0.0
    %864 = vmatprep.subr.mxu0 0.0
    %865 = vmatpush1.msra.mxu0 0.0
    %866 = vmatprep.subr.mxu0 0.0
    %867 = vmatpush1.msra.mxu0 0.0
    %868 = vmatprep.subr.mxu0 0.0
    %869 = vmatpush1.msra.mxu0 0.0
    %870 = vmatprep.subr.mxu0 0.0
    %871 = vmatpush1.msra.mxu0 0.0
    %872 = vmatprep.subr.mxu0 0.0
    %873 = vmatpush1.msra.mxu0 0.0
    %874 = vmatprep.subr.mxu0 0.0
    %875 = vmatpush1.msra.mxu0 0.0
    %876 = vmatprep.subr.mxu0 0.0
    %877 = vmatpush1.msra.mxu0 0.0
    %878 = vmatprep.subr.mxu0 0.0
    %879 = vmatpush1.msra.mxu0 0.0
    %880 = vmatprep.subr.mxu0 0.0
    %881 = vmatpush1.msra.mxu0 0.0
    %882 = vmatprep.subr.mxu0 0.0
    %883 = vmatpush1.msra.mxu0 0.0
    %884 = vmatprep.subr.mxu0 0.0
    %885 = vmatpush1.msra.mxu0 0.0
    %886 = vmatprep.subr.mxu0 0.0
    %887 = vmatpush1.msra.mxu0 0.0
    %888 = vmatprep.mubr.f32.mxu0 0.0
    %889 = vmatmul.mubr.f32.gmra.mrb[0].mxu0 %v393
    %v890 = vpop.f32.mrb[0].mxu0
    %v891 = vadd.f32 0.0, %v890
    %v892 = vpop.f32.mrb[0].mxu0
    %v893 = vadd.f32 0.0, %v892
    %894 = vmatprep.mubr.f32.mxu0 0.0
    %895 = vmatmul.mubr.f32.gmra.mrb[0].mxu0 %v396
    %v896 = vpop.f32.mrb[0].mxu0
    %v897 = vadd.f32 0.0, %v896
    %v898 = vpop.f32.mrb[0].mxu0
    %v899 = vadd.f32 0.0, %v898
    %900 = vmatprep.mubr.f32.mxu0 0.0
    %901 = vmatmul.mubr.f32.gmra.mrb[0].mxu0 %v399
    %v902 = vpop.f32.mrb[0].mxu0
    %v903 = vadd.f32 0.0, %v902
    %v904 = vpop.f32.mrb[0].mxu0
    %v905 = vadd.f32 0.0, %v904
    %906 = vdwg.mxu0
    %s907 = scalar_lea.vmem [#allocation7], 48
    %908 = vst [vmem:[%s907] sm:$0xff] %v891
    %909 = vst [vmem:[%s907 + $0x8] sm:$0xff] %v893
    %910 = vst [vmem:[%s907 + $0x10] sm:$0xff] %v897
    %911 = vst [vmem:[%s907 + $0x18] sm:$0xff] %v899
    %912 = vst [vmem:[%s907 + $0x20] sm:$0xff] %v903
    %913 = vst [vmem:[%s907 + $0x28] sm:$0xff] %v905
    %s914 = scalar_lea.vmem [#allocation2], 2
    %v915 = vld [vmem:[%s914] ss:$8 sm:$0x3]
    %s916 = scalar_lea.vmem [#allocation2], 2
    %v917 = vld [vmem:[%s916] ss:$8 sm:$0x7]
    %v919 = vlaneseq
    %v920 = vshrl.u32 %v919, 7
    %v921 = vsub.s32 0, %v920
    %v922 = vrot.slane %v915, %v921
    %v923 = vlaneseq
    %v924 = vshrl.u32 %v923, 7
    %v925 = vsub.s32 1, %v924
    %v926 = vrot.slane %v915, %v925
    %v930 = vlaneseq
    %v931 = vshrl.u32 %v930, 7
    %v932 = vsub.s32 0, %v931
    %v933 = vrot.slane %v917, %v932
    %v934 = vlaneseq
    %v935 = vshrl.u32 %v934, 7
    %v936 = vsub.s32 1, %v935
    %v937 = vrot.slane %v917, %v936
    %v938 = vlaneseq
    %v939 = vshrl.u32 %v938, 7
    %v940 = vsub.s32 2, %v939
    %v941 = vrot.slane %v917, %v940
    %942 = vrot.lane.b32.xlu0 %v933, 127
    %v943 = vpop.permute.xlu0 %942
    %944 = vrot.lane.b32.xlu0 %v937, 127
    %v945 = vpop.permute.xlu0 %944
    %946 = vrot.lane.b32.xlu0 %v941, 127
    %v947 = vpop.permute.xlu0 %946
    %v948 = vsel %vm73, %v943, %v945
    %v949 = vsel %vm73, %v945, %v947
    %952 = vrot.lane.b32.xlu0 %v933, 126
    %v953 = vpop.permute.xlu0 %952
    %954 = vrot.lane.b32.xlu0 %v937, 126
    %v955 = vpop.permute.xlu0 %954
    %956 = vrot.lane.b32.xlu0 %v941, 126
    %v957 = vpop.permute.xlu0 %956
    %v958 = vsel %vm84, %v953, %v955
    %v959 = vsel %vm84, %v955, %v957
    %962 = vrot.lane.b32.xlu0 %v933, 125
    %v963 = vpop.permute.xlu0 %962
    %964 = vrot.lane.b32.xlu0 %v937, 125
    %v965 = vpop.permute.xlu0 %964
    %966 = vrot.lane.b32.xlu0 %v941, 125
    %v967 = vpop.permute.xlu0 %966
    %v968 = vsel %vm95, %v963, %v965
    %v969 = vsel %vm95, %v965, %v967
    %972 = vrot.lane.b32.xlu0 %v933, 124
    %v973 = vpop.permute.xlu0 %972
    %974 = vrot.lane.b32.xlu0 %v937, 124
    %v975 = vpop.permute.xlu0 %974
    %976 = vrot.lane.b32.xlu0 %v941, 124
    %v977 = vpop.permute.xlu0 %976
    %v978 = vsel %vm106, %v973, %v975
    %v979 = vsel %vm106, %v975, %v977
    %982 = vrot.lane.b32.xlu0 %v933, 123
    %v983 = vpop.permute.xlu0 %982
    %984 = vrot.lane.b32.xlu0 %v937, 123
    %v985 = vpop.permute.xlu0 %984
    %986 = vrot.lane.b32.xlu0 %v941, 123
    %v987 = vpop.permute.xlu0 %986
    %v988 = vsel %vm117, %v983, %v985
    %v989 = vsel %vm117, %v985, %v987
    %992 = vrot.lane.b32.xlu0 %v933, 122
    %v993 = vpop.permute.xlu0 %992
    %994 = vrot.lane.b32.xlu0 %v937, 122
    %v995 = vpop.permute.xlu0 %994
    %996 = vrot.lane.b32.xlu0 %v941, 122
    %v997 = vpop.permute.xlu0 %996
    %v998 = vsel %vm128, %v993, %v995
    %v999 = vsel %vm128, %v995, %v997
    %1002 = vrot.lane.b32.xlu0 %v933, 121
    %v1003 = vpop.permute.xlu0 %1002
    %1004 = vrot.lane.b32.xlu0 %v937, 121
    %v1005 = vpop.permute.xlu0 %1004
    %1006 = vrot.lane.b32.xlu0 %v941, 121
    %v1007 = vpop.permute.xlu0 %1006
    %v1008 = vsel %vm139, %v1003, %v1005
    %v1009 = vsel %vm139, %v1005, %v1007
    %1012 = vrot.lane.b32.xlu0 %v933, 120
    %v1013 = vpop.permute.xlu0 %1012
    %1014 = vrot.lane.b32.xlu0 %v937, 120
    %v1015 = vpop.permute.xlu0 %1014
    %1016 = vrot.lane.b32.xlu0 %v941, 120
    %v1017 = vpop.permute.xlu0 %1016
    %v1018 = vsel %vm150, %v1013, %v1015
    %v1019 = vsel %vm150, %v1015, %v1017
    %1022 = vrot.lane.b32.xlu0 %v933, 119
    %v1023 = vpop.permute.xlu0 %1022
    %1024 = vrot.lane.b32.xlu0 %v937, 119
    %v1025 = vpop.permute.xlu0 %1024
    %1026 = vrot.lane.b32.xlu0 %v941, 119
    %v1027 = vpop.permute.xlu0 %1026
    %v1028 = vsel %vm161, %v1023, %v1025
    %v1029 = vsel %vm161, %v1025, %v1027
    %1032 = vrot.lane.b32.xlu0 %v933, 118
    %v1033 = vpop.permute.xlu0 %1032
    %1034 = vrot.lane.b32.xlu0 %v937, 118
    %v1035 = vpop.permute.xlu0 %1034
    %1036 = vrot.lane.b32.xlu0 %v941, 118
    %v1037 = vpop.permute.xlu0 %1036
    %v1038 = vsel %vm172, %v1033, %v1035
    %v1039 = vsel %vm172, %v1035, %v1037
    %1042 = vrot.lane.b32.xlu0 %v933, 117
    %v1043 = vpop.permute.xlu0 %1042
    %1044 = vrot.lane.b32.xlu0 %v937, 117
    %v1045 = vpop.permute.xlu0 %1044
    %1046 = vrot.lane.b32.xlu0 %v941, 117
    %v1047 = vpop.permute.xlu0 %1046
    %v1048 = vsel %vm183, %v1043, %v1045
    %v1049 = vsel %vm183, %v1045, %v1047
    %1052 = vrot.lane.b32.xlu0 %v933, 116
    %v1053 = vpop.permute.xlu0 %1052
    %1054 = vrot.lane.b32.xlu0 %v937, 116
    %v1055 = vpop.permute.xlu0 %1054
    %1056 = vrot.lane.b32.xlu0 %v941, 116
    %v1057 = vpop.permute.xlu0 %1056
    %v1058 = vsel %vm194, %v1053, %v1055
    %v1059 = vsel %vm194, %v1055, %v1057
    %1062 = vrot.lane.b32.xlu0 %v933, 115
    %v1063 = vpop.permute.xlu0 %1062
    %1064 = vrot.lane.b32.xlu0 %v937, 115
    %v1065 = vpop.permute.xlu0 %1064
    %1066 = vrot.lane.b32.xlu0 %v941, 115
    %v1067 = vpop.permute.xlu0 %1066
    %v1068 = vsel %vm205, %v1063, %v1065
    %v1069 = vsel %vm205, %v1065, %v1067
    %1072 = vrot.lane.b32.xlu0 %v933, 114
    %v1073 = vpop.permute.xlu0 %1072
    %1074 = vrot.lane.b32.xlu0 %v937, 114
    %v1075 = vpop.permute.xlu0 %1074
    %1076 = vrot.lane.b32.xlu0 %v941, 114
    %v1077 = vpop.permute.xlu0 %1076
    %v1078 = vsel %vm216, %v1073, %v1075
    %v1079 = vsel %vm216, %v1075, %v1077
    %1082 = vrot.lane.b32.xlu0 %v933, 113
    %v1083 = vpop.permute.xlu0 %1082
    %1084 = vrot.lane.b32.xlu0 %v937, 113
    %v1085 = vpop.permute.xlu0 %1084
    %1086 = vrot.lane.b32.xlu0 %v941, 113
    %v1087 = vpop.permute.xlu0 %1086
    %v1088 = vsel %vm227, %v1083, %v1085
    %v1089 = vsel %vm227, %v1085, %v1087
    %v1092 = vsel %vm232, %v922, %v948
    %v1093 = vsel %vm232, %v926, %v949
    %v1094 = vsel %vm235, %v1092, %v958
    %v1095 = vsel %vm235, %v1093, %v959
    %v1096 = vsel %vm238, %v1094, %v968
    %v1097 = vsel %vm238, %v1095, %v969
    %v1098 = vsel %vm241, %v1096, %v978
    %v1099 = vsel %vm241, %v1097, %v979
    %v1100 = vsel %vm244, %v1098, %v988
    %v1101 = vsel %vm244, %v1099, %v989
    %v1102 = vsel %vm247, %v1100, %v998
    %v1103 = vsel %vm247, %v1101, %v999
    %v1104 = vsel %vm250, %v1102, %v1008
    %v1105 = vsel %vm250, %v1103, %v1009
    %v1106 = vsel %vm232, %v1018, %v1028
    %v1107 = vsel %vm232, %v1019, %v1029
    %v1108 = vsel %vm235, %v1106, %v1038
    %v1109 = vsel %vm235, %v1107, %v1039
    %v1110 = vsel %vm238, %v1108, %v1048
    %v1111 = vsel %vm238, %v1109, %v1049
    %v1112 = vsel %vm241, %v1110, %v1058
    %v1113 = vsel %vm241, %v1111, %v1059
    %v1114 = vsel %vm244, %v1112, %v1068
    %v1115 = vsel %vm244, %v1113, %v1069
    %v1116 = vsel %vm247, %v1114, %v1078
    %v1117 = vsel %vm247, %v1115, %v1079
    %v1118 = vsel %vm250, %v1116, %v1088
    %v1119 = vsel %vm250, %v1117, %v1089
    %v1138 = vsel %vm232, %v933, %v948
    %v1139 = vsel %vm232, %v937, %v949
    %v1140 = vsel %vm232, %v941, %v947
    %v1141 = vsel %vm235, %v1138, %v958
    %v1142 = vsel %vm235, %v1139, %v959
    %v1143 = vsel %vm235, %v1140, %v957
    %v1144 = vsel %vm238, %v1141, %v968
    %v1145 = vsel %vm238, %v1142, %v969
    %v1146 = vsel %vm238, %v1143, %v967
    %v1147 = vsel %vm241, %v1144, %v978
    %v1148 = vsel %vm241, %v1145, %v979
    %v1149 = vsel %vm241, %v1146, %v977
    %v1150 = vsel %vm244, %v1147, %v988
    %v1151 = vsel %vm244, %v1148, %v989
    %v1152 = vsel %vm244, %v1149, %v987
    %v1153 = vsel %vm247, %v1150, %v998
    %v1154 = vsel %vm247, %v1151, %v999
    %v1155 = vsel %vm247, %v1152, %v997
    %v1156 = vsel %vm250, %v1153, %v1008
    %v1157 = vsel %vm250, %v1154, %v1009
    %v1158 = vsel %vm250, %v1155, %v1007
    %v1159 = vsel %vm232, %v1017, %v1027
    %v1160 = vsel %vm235, %v1159, %v1037
    %v1161 = vsel %vm238, %v1160, %v1047
    %v1162 = vsel %vm241, %v1161, %v1057
    %v1163 = vsel %vm244, %v1162, %v1067
    %v1164 = vsel %vm247, %v1163, %v1077
    %v1165 = vsel %vm250, %v1164, %v1087
    %1172 = vrot.lane.b32.xlu0 %v1156, 112
    %v1173 = vpop.permute.xlu0 %1172
    %1174 = vrot.lane.b32.xlu0 %v1157, 112
    %v1175 = vpop.permute.xlu0 %1174
    %1176 = vrot.lane.b32.xlu0 %v1158, 112
    %v1177 = vpop.permute.xlu0 %1176
    %1178 = vrot.lane.b32.xlu0 %v1118, 112
    %v1179 = vpop.permute.xlu0 %1178
    %1180 = vrot.lane.b32.xlu0 %v1119, 112
    %v1181 = vpop.permute.xlu0 %1180
    %1182 = vrot.lane.b32.xlu0 %v1165, 112
    %v1183 = vpop.permute.xlu0 %1182
    %v1184 = vsel %vm331, %v1173, %v1175
    %v1185 = vsel %vm331, %v1175, %v1177
    %v1186 = vsel %vm331, %v1179, %v1181
    %v1187 = vsel %vm331, %v1181, %v1183
    %1192 = vrot.lane.b32.xlu0 %v1156, 96
    %v1193 = vpop.permute.xlu0 %1192
    %1194 = vrot.lane.b32.xlu0 %v1157, 96
    %v1195 = vpop.permute.xlu0 %1194
    %1196 = vrot.lane.b32.xlu0 %v1158, 96
    %v1197 = vpop.permute.xlu0 %1196
    %1198 = vrot.lane.b32.xlu0 %v1118, 96
    %v1199 = vpop.permute.xlu0 %1198
    %1200 = vrot.lane.b32.xlu0 %v1119, 96
    %v1201 = vpop.permute.xlu0 %1200
    %1202 = vrot.lane.b32.xlu0 %v1165, 96
    %v1203 = vpop.permute.xlu0 %1202
    %v1204 = vsel %vm352, %v1193, %v1195
    %v1205 = vsel %vm352, %v1195, %v1197
    %v1206 = vsel %vm352, %v1199, %v1201
    %v1207 = vsel %vm352, %v1201, %v1203
    %1212 = vrot.lane.b32.xlu0 %v1156, 80
    %v1213 = vpop.permute.xlu0 %1212
    %1214 = vrot.lane.b32.xlu0 %v1157, 80
    %v1215 = vpop.permute.xlu0 %1214
    %1216 = vrot.lane.b32.xlu0 %v1158, 80
    %v1217 = vpop.permute.xlu0 %1216
    %1218 = vrot.lane.b32.xlu0 %v1118, 80
    %v1219 = vpop.permute.xlu0 %1218
    %1220 = vrot.lane.b32.xlu0 %v1119, 80
    %v1221 = vpop.permute.xlu0 %1220
    %1222 = vrot.lane.b32.xlu0 %v1165, 80
    %v1223 = vpop.permute.xlu0 %1222
    %v1224 = vsel %vm373, %v1213, %v1215
    %v1225 = vsel %vm373, %v1215, %v1217
    %v1226 = vsel %vm373, %v1219, %v1221
    %v1227 = vsel %vm373, %v1221, %v1223
    %1232 = vrot.lane.b32.xlu0 %v933, 64
    %v1233 = vpop.permute.xlu0 %1232
    %1234 = vrot.lane.b32.xlu0 %v937, 64
    %v1235 = vpop.permute.xlu0 %1234
    %1236 = vrot.lane.b32.xlu0 %v941, 64
    %v1237 = vpop.permute.xlu0 %1236
    %v1238 = vsel %vm388, %v1233, %v1235
    %v1239 = vsel %vm388, %v1235, %v1237
    %v1240 = vsel %vm232, %v1238, 0
    %v1242 = vsel %vm232, %v1239, 0
    %1244 = vmatprep.subr.mxu0 %v1105
    %1245 = vmatpush1.msra.mxu0 %v1104
    %1246 = vmatprep.subr.mxu0 %v1119
    %1247 = vmatpush1.msra.mxu0 %v1118
    %1248 = vmatprep.subr.mxu0 %v1185
    %1249 = vmatpush1.msra.mxu0 %v1184
    %1250 = vmatprep.subr.mxu0 %v1187
    %1251 = vmatpush1.msra.mxu0 %v1186
    %1252 = vmatprep.subr.mxu0 %v1205
    %1253 = vmatpush1.msra.mxu0 %v1204
    %1254 = vmatprep.subr.mxu0 %v1207
    %1255 = vmatpush1.msra.mxu0 %v1206
    %1256 = vmatprep.subr.mxu0 %v1225
    %1257 = vmatpush1.msra.mxu0 %v1224
    %1258 = vmatprep.subr.mxu0 %v1227
    %1259 = vmatpush1.msra.mxu0 %v1226
    %1260 = vmatprep.subr.mxu0 %v1242
    %1261 = vmatpush1.msra.mxu0 %v1240
    %1262 = vmatprep.subr.mxu0 0.0
    %1263 = vmatpush1.msra.mxu0 0.0
    %1264 = vmatprep.subr.mxu0 0.0
    %1265 = vmatpush1.msra.mxu0 0.0
    %1266 = vmatprep.subr.mxu0 0.0
    %1267 = vmatpush1.msra.mxu0 0.0
    %1268 = vmatprep.subr.mxu0 0.0
    %1269 = vmatpush1.msra.mxu0 0.0
    %1270 = vmatprep.subr.mxu0 0.0
    %1271 = vmatpush1.msra.mxu0 0.0
    %1272 = vmatprep.subr.mxu0 0.0
    %1273 = vmatpush1.msra.mxu0 0.0
    %1274 = vmatprep.subr.mxu0 0.0
    %1275 = vmatpush1.msra.mxu0 0.0
    %1276 = vmatprep.subr.mxu0 0.0
    %1277 = vmatpush1.msra.mxu0 0.0
    %1278 = vmatprep.subr.mxu0 0.0
    %1279 = vmatpush1.msra.mxu0 0.0
    %1280 = vmatprep.subr.mxu0 0.0
    %1281 = vmatpush1.msra.mxu0 0.0
    %1282 = vmatprep.subr.mxu0 0.0
    %1283 = vmatpush1.msra.mxu0 0.0
    %1284 = vmatprep.subr.mxu0 0.0
    %1285 = vmatpush1.msra.mxu0 0.0
    %1286 = vmatprep.subr.mxu0 0.0
    %1287 = vmatpush1.msra.mxu0 0.0
    %1288 = vmatprep.subr.mxu0 0.0
    %1289 = vmatpush1.msra.mxu0 0.0
    %1290 = vmatprep.subr.mxu0 0.0
    %1291 = vmatpush1.msra.mxu0 0.0
    %1292 = vmatprep.subr.mxu0 0.0
    %1293 = vmatpush1.msra.mxu0 0.0
    %1294 = vmatprep.subr.mxu0 0.0
    %1295 = vmatpush1.msra.mxu0 0.0
    %1296 = vmatprep.subr.mxu0 0.0
    %1297 = vmatpush1.msra.mxu0 0.0
    %1298 = vmatprep.subr.mxu0 0.0
    %1299 = vmatpush1.msra.mxu0 0.0
    %1300 = vmatprep.subr.mxu0 0.0
    %1301 = vmatpush1.msra.mxu0 0.0
    %1302 = vmatprep.subr.mxu0 0.0
    %1303 = vmatpush1.msra.mxu0 0.0
    %1304 = vmatprep.subr.mxu0 0.0
    %1305 = vmatpush1.msra.mxu0 0.0
    %1306 = vmatprep.subr.mxu0 0.0
    %1307 = vmatpush1.msra.mxu0 0.0
    %1308 = vmatprep.mubr.f32.mxu0 0.0
    %1309 = vmatmul.mubr.f32.gmra.mrb[0].mxu0 %v393
    %v1310 = vpop.f32.mrb[0].mxu0
    %v1311 = vadd.f32 0.0, %v1310
    %v1312 = vpop.f32.mrb[0].mxu0
    %v1313 = vadd.f32 0.0, %v1312
    %1314 = vmatprep.mubr.f32.mxu0 0.0
    %1315 = vmatmul.mubr.f32.gmra.mrb[0].mxu0 %v396
    %v1316 = vpop.f32.mrb[0].mxu0
    %v1317 = vadd.f32 0.0, %v1316
    %v1318 = vpop.f32.mrb[0].mxu0
    %v1319 = vadd.f32 0.0, %v1318
    %1320 = vmatprep.mubr.f32.mxu0 0.0
    %1321 = vmatmul.mubr.f32.gmra.mrb[0].mxu0 %v399
    %v1322 = vpop.f32.mrb[0].mxu0
    %v1323 = vadd.f32 0.0, %v1322
    %v1324 = vpop.f32.mrb[0].mxu0
    %v1325 = vadd.f32 0.0, %v1324
    %1326 = vdwg.mxu0
    %s1327 = scalar_lea.vmem [#allocation7], 96
    %1328 = vst [vmem:[%s1327] sm:$0xff] %v1311
    %1329 = vst [vmem:[%s1327 + $0x8] sm:$0xff] %v1313
    %1330 = vst [vmem:[%s1327 + $0x10] sm:$0xff] %v1317
    %1331 = vst [vmem:[%s1327 + $0x18] sm:$0xff] %v1319
    %1332 = vst [vmem:[%s1327 + $0x20] sm:$0xff] %v1323
    %1333 = vst [vmem:[%s1327 + $0x28] sm:$0xff] %v1325
    %s1334 = scalar_lea.vmem [#allocation2], 3
    %v1335 = vld [vmem:[%s1334] ss:$8 sm:$0x3]
    %s1336 = scalar_lea.vmem [#allocation2], 3
    %v1337 = vld [vmem:[%s1336] ss:$8 sm:$0x7]
    %v1339 = vlaneseq
    %v1340 = vshrl.u32 %v1339, 7
    %v1341 = vsub.s32 0, %v1340
    %v1342 = vrot.slane %v1335, %v1341
    %v1343 = vlaneseq
    %v1344 = vshrl.u32 %v1343, 7
    %v1345 = vsub.s32 1, %v1344
    %v1346 = vrot.slane %v1335, %v1345
    %v1350 = vlaneseq
    %v1351 = vshrl.u32 %v1350, 7
    %v1352 = vsub.s32 0, %v1351
    %v1353 = vrot.slane %v1337, %v1352
    %v1354 = vlaneseq
    %v1355 = vshrl.u32 %v1354, 7
    %v1356 = vsub.s32 1, %v1355
    %v1357 = vrot.slane %v1337, %v1356
    %v1358 = vlaneseq
    %v1359 = vshrl.u32 %v1358, 7
    %v1360 = vsub.s32 2, %v1359
    %v1361 = vrot.slane %v1337, %v1360
    %1362 = vrot.lane.b32.xlu0 %v1353, 127
    %v1363 = vpop.permute.xlu0 %1362
    %1364 = vrot.lane.b32.xlu0 %v1357, 127
    %v1365 = vpop.permute.xlu0 %1364
    %1366 = vrot.lane.b32.xlu0 %v1361, 127
    %v1367 = vpop.permute.xlu0 %1366
    %v1368 = vsel %vm73, %v1363, %v1365
    %v1369 = vsel %vm73, %v1365, %v1367
    %1372 = vrot.lane.b32.xlu0 %v1353, 126
    %v1373 = vpop.permute.xlu0 %1372
    %1374 = vrot.lane.b32.xlu0 %v1357, 126
    %v1375 = vpop.permute.xlu0 %1374
    %1376 = vrot.lane.b32.xlu0 %v1361, 126
    %v1377 = vpop.permute.xlu0 %1376
    %v1378 = vsel %vm84, %v1373, %v1375
    %v1379 = vsel %vm84, %v1375, %v1377
    %1382 = vrot.lane.b32.xlu0 %v1353, 125
    %v1383 = vpop.permute.xlu0 %1382
    %1384 = vrot.lane.b32.xlu0 %v1357, 125
    %v1385 = vpop.permute.xlu0 %1384
    %1386 = vrot.lane.b32.xlu0 %v1361, 125
    %v1387 = vpop.permute.xlu0 %1386
    %v1388 = vsel %vm95, %v1383, %v1385
    %v1389 = vsel %vm95, %v1385, %v1387
    %1392 = vrot.lane.b32.xlu0 %v1353, 124
    %v1393 = vpop.permute.xlu0 %1392
    %1394 = vrot.lane.b32.xlu0 %v1357, 124
    %v1395 = vpop.permute.xlu0 %1394
    %1396 = vrot.lane.b32.xlu0 %v1361, 124
    %v1397 = vpop.permute.xlu0 %1396
    %v1398 = vsel %vm106, %v1393, %v1395
    %v1399 = vsel %vm106, %v1395, %v1397
    %1402 = vrot.lane.b32.xlu0 %v1353, 123
    %v1403 = vpop.permute.xlu0 %1402
    %1404 = vrot.lane.b32.xlu0 %v1357, 123
    %v1405 = vpop.permute.xlu0 %1404
    %1406 = vrot.lane.b32.xlu0 %v1361, 123
    %v1407 = vpop.permute.xlu0 %1406
    %v1408 = vsel %vm117, %v1403, %v1405
    %v1409 = vsel %vm117, %v1405, %v1407
    %1412 = vrot.lane.b32.xlu0 %v1353, 122
    %v1413 = vpop.permute.xlu0 %1412
    %1414 = vrot.lane.b32.xlu0 %v1357, 122
    %v1415 = vpop.permute.xlu0 %1414
    %1416 = vrot.lane.b32.xlu0 %v1361, 122
    %v1417 = vpop.permute.xlu0 %1416
    %v1418 = vsel %vm128, %v1413, %v1415
    %v1419 = vsel %vm128, %v1415, %v1417
    %1422 = vrot.lane.b32.xlu0 %v1353, 121
    %v1423 = vpop.permute.xlu0 %1422
    %1424 = vrot.lane.b32.xlu0 %v1357, 121
    %v1425 = vpop.permute.xlu0 %1424
    %1426 = vrot.lane.b32.xlu0 %v1361, 121
    %v1427 = vpop.permute.xlu0 %1426
    %v1428 = vsel %vm139, %v1423, %v1425
    %v1429 = vsel %vm139, %v1425, %v1427
    %1432 = vrot.lane.b32.xlu0 %v1353, 120
    %v1433 = vpop.permute.xlu0 %1432
    %1434 = vrot.lane.b32.xlu0 %v1357, 120
    %v1435 = vpop.permute.xlu0 %1434
    %1436 = vrot.lane.b32.xlu0 %v1361, 120
    %v1437 = vpop.permute.xlu0 %1436
    %v1438 = vsel %vm150, %v1433, %v1435
    %v1439 = vsel %vm150, %v1435, %v1437
    %1442 = vrot.lane.b32.xlu0 %v1353, 119
    %v1443 = vpop.permute.xlu0 %1442
    %1444 = vrot.lane.b32.xlu0 %v1357, 119
    %v1445 = vpop.permute.xlu0 %1444
    %1446 = vrot.lane.b32.xlu0 %v1361, 119
    %v1447 = vpop.permute.xlu0 %1446
    %v1448 = vsel %vm161, %v1443, %v1445
    %v1449 = vsel %vm161, %v1445, %v1447
    %1452 = vrot.lane.b32.xlu0 %v1353, 118
    %v1453 = vpop.permute.xlu0 %1452
    %1454 = vrot.lane.b32.xlu0 %v1357, 118
    %v1455 = vpop.permute.xlu0 %1454
    %1456 = vrot.lane.b32.xlu0 %v1361, 118
    %v1457 = vpop.permute.xlu0 %1456
    %v1458 = vsel %vm172, %v1453, %v1455
    %v1459 = vsel %vm172, %v1455, %v1457
    %1462 = vrot.lane.b32.xlu0 %v1353, 117
    %v1463 = vpop.permute.xlu0 %1462
    %1464 = vrot.lane.b32.xlu0 %v1357, 117
    %v1465 = vpop.permute.xlu0 %1464
    %1466 = vrot.lane.b32.xlu0 %v1361, 117
    %v1467 = vpop.permute.xlu0 %1466
    %v1468 = vsel %vm183, %v1463, %v1465
    %v1469 = vsel %vm183, %v1465, %v1467
    %1472 = vrot.lane.b32.xlu0 %v1353, 116
    %v1473 = vpop.permute.xlu0 %1472
    %1474 = vrot.lane.b32.xlu0 %v1357, 116
    %v1475 = vpop.permute.xlu0 %1474
    %1476 = vrot.lane.b32.xlu0 %v1361, 116
    %v1477 = vpop.permute.xlu0 %1476
    %v1478 = vsel %vm194, %v1473, %v1475
    %v1479 = vsel %vm194, %v1475, %v1477
    %1482 = vrot.lane.b32.xlu0 %v1353, 115
    %v1483 = vpop.permute.xlu0 %1482
    %1484 = vrot.lane.b32.xlu0 %v1357, 115
    %v1485 = vpop.permute.xlu0 %1484
    %1486 = vrot.lane.b32.xlu0 %v1361, 115
    %v1487 = vpop.permute.xlu0 %1486
    %v1488 = vsel %vm205, %v1483, %v1485
    %v1489 = vsel %vm205, %v1485, %v1487
    %1492 = vrot.lane.b32.xlu0 %v1353, 114
    %v1493 = vpop.permute.xlu0 %1492
    %1494 = vrot.lane.b32.xlu0 %v1357, 114
    %v1495 = vpop.permute.xlu0 %1494
    %1496 = vrot.lane.b32.xlu0 %v1361, 114
    %v1497 = vpop.permute.xlu0 %1496
    %v1498 = vsel %vm216, %v1493, %v1495
    %v1499 = vsel %vm216, %v1495, %v1497
    %1502 = vrot.lane.b32.xlu0 %v1353, 113
    %v1503 = vpop.permute.xlu0 %1502
    %1504 = vrot.lane.b32.xlu0 %v1357, 113
    %v1505 = vpop.permute.xlu0 %1504
    %1506 = vrot.lane.b32.xlu0 %v1361, 113
    %v1507 = vpop.permute.xlu0 %1506
    %v1508 = vsel %vm227, %v1503, %v1505
    %v1509 = vsel %vm227, %v1505, %v1507
    %v1512 = vsel %vm232, %v1342, %v1368
    %v1513 = vsel %vm232, %v1346, %v1369
    %v1514 = vsel %vm235, %v1512, %v1378
    %v1515 = vsel %vm235, %v1513, %v1379
    %v1516 = vsel %vm238, %v1514, %v1388
    %v1517 = vsel %vm238, %v1515, %v1389
    %v1518 = vsel %vm241, %v1516, %v1398
    %v1519 = vsel %vm241, %v1517, %v1399
    %v1520 = vsel %vm244, %v1518, %v1408
    %v1521 = vsel %vm244, %v1519, %v1409
    %v1522 = vsel %vm247, %v1520, %v1418
    %v1523 = vsel %vm247, %v1521, %v1419
    %v1524 = vsel %vm250, %v1522, %v1428
    %v1525 = vsel %vm250, %v1523, %v1429
    %v1526 = vsel %vm232, %v1438, %v1448
    %v1527 = vsel %vm232, %v1439, %v1449
    %v1528 = vsel %vm235, %v1526, %v1458
    %v1529 = vsel %vm235, %v1527, %v1459
    %v1530 = vsel %vm238, %v1528, %v1468
    %v1531 = vsel %vm238, %v1529, %v1469
    %v1532 = vsel %vm241, %v1530, %v1478
    %v1533 = vsel %vm241, %v1531, %v1479
    %v1534 = vsel %vm244, %v1532, %v1488
    %v1535 = vsel %vm244, %v1533, %v1489
    %v1536 = vsel %vm247, %v1534, %v1498
    %v1537 = vsel %vm247, %v1535, %v1499
    %v1538 = vsel %vm250, %v1536, %v1508
    %v1539 = vsel %vm250, %v1537, %v1509
    %v1558 = vsel %vm232, %v1353, %v1368
    %v1559 = vsel %vm232, %v1357, %v1369
    %v1560 = vsel %vm232, %v1361, %v1367
    %v1561 = vsel %vm235, %v1558, %v1378
    %v1562 = vsel %vm235, %v1559, %v1379
    %v1563 = vsel %vm235, %v1560, %v1377
    %v1564 = vsel %vm238, %v1561, %v1388
    %v1565 = vsel %vm238, %v1562, %v1389
    %v1566 = vsel %vm238, %v1563, %v1387
    %v1567 = vsel %vm241, %v1564, %v1398
    %v1568 = vsel %vm241, %v1565, %v1399
    %v1569 = vsel %vm241, %v1566, %v1397
    %v1570 = vsel %vm244, %v1567, %v1408
    %v1571 = vsel %vm244, %v1568, %v1409
    %v1572 = vsel %vm244, %v1569, %v1407
    %v1573 = vsel %vm247, %v1570, %v1418
    %v1574 = vsel %vm247, %v1571, %v1419
    %v1575 = vsel %vm247, %v1572, %v1417
    %v1576 = vsel %vm250, %v1573, %v1428
    %v1577 = vsel %vm250, %v1574, %v1429
    %v1578 = vsel %vm250, %v1575, %v1427
    %v1579 = vsel %vm232, %v1437, %v1447
    %v1580 = vsel %vm235, %v1579, %v1457
    %v1581 = vsel %vm238, %v1580, %v1467
    %v1582 = vsel %vm241, %v1581, %v1477
    %v1583 = vsel %vm244, %v1582, %v1487
    %v1584 = vsel %vm247, %v1583, %v1497
    %v1585 = vsel %vm250, %v1584, %v1507
    %1592 = vrot.lane.b32.xlu0 %v1576, 112
    %v1593 = vpop.permute.xlu0 %1592
    %1594 = vrot.lane.b32.xlu0 %v1577, 112
    %v1595 = vpop.permute.xlu0 %1594
    %1596 = vrot.lane.b32.xlu0 %v1578, 112
    %v1597 = vpop.permute.xlu0 %1596
    %1598 = vrot.lane.b32.xlu0 %v1538, 112
    %v1599 = vpop.permute.xlu0 %1598
    %1600 = vrot.lane.b32.xlu0 %v1539, 112
    %v1601 = vpop.permute.xlu0 %1600
    %1602 = vrot.lane.b32.xlu0 %v1585, 112
    %v1603 = vpop.permute.xlu0 %1602
    %v1604 = vsel %vm331, %v1593, %v1595
    %v1605 = vsel %vm331, %v1595, %v1597
    %v1606 = vsel %vm331, %v1599, %v1601
    %v1607 = vsel %vm331, %v1601, %v1603
    %1612 = vrot.lane.b32.xlu0 %v1576, 96
    %v1613 = vpop.permute.xlu0 %1612
    %1614 = vrot.lane.b32.xlu0 %v1577, 96
    %v1615 = vpop.permute.xlu0 %1614
    %1616 = vrot.lane.b32.xlu0 %v1578, 96
    %v1617 = vpop.permute.xlu0 %1616
    %1618 = vrot.lane.b32.xlu0 %v1538, 96
    %v1619 = vpop.permute.xlu0 %1618
    %1620 = vrot.lane.b32.xlu0 %v1539, 96
    %v1621 = vpop.permute.xlu0 %1620
    %1622 = vrot.lane.b32.xlu0 %v1585, 96
    %v1623 = vpop.permute.xlu0 %1622
    %v1624 = vsel %vm352, %v1613, %v1615
    %v1625 = vsel %vm352, %v1615, %v1617
    %v1626 = vsel %vm352, %v1619, %v1621
    %v1627 = vsel %vm352, %v1621, %v1623
    %1632 = vrot.lane.b32.xlu0 %v1576, 80
    %v1633 = vpop.permute.xlu0 %1632
    %1634 = vrot.lane.b32.xlu0 %v1577, 80
    %v1635 = vpop.permute.xlu0 %1634
    %1636 = vrot.lane.b32.xlu0 %v1578, 80
    %v1637 = vpop.permute.xlu0 %1636
    %1638 = vrot.lane.b32.xlu0 %v1538, 80
    %v1639 = vpop.permute.xlu0 %1638
    %1640 = vrot.lane.b32.xlu0 %v1539, 80
    %v1641 = vpop.permute.xlu0 %1640
    %1642 = vrot.lane.b32.xlu0 %v1585, 80
    %v1643 = vpop.permute.xlu0 %1642
    %v1644 = vsel %vm373, %v1633, %v1635
    %v1645 = vsel %vm373, %v1635, %v1637
    %v1646 = vsel %vm373, %v1639, %v1641
    %v1647 = vsel %vm373, %v1641, %v1643
    %1652 = vrot.lane.b32.xlu0 %v1353, 64
    %v1653 = vpop.permute.xlu0 %1652
    %1654 = vrot.lane.b32.xlu0 %v1357, 64
    %v1655 = vpop.permute.xlu0 %1654
    %1656 = vrot.lane.b32.xlu0 %v1361, 64
    %v1657 = vpop.permute.xlu0 %1656
    %v1658 = vsel %vm388, %v1653, %v1655
    %v1659 = vsel %vm388, %v1655, %v1657
    %v1660 = vsel %vm232, %v1658, 0
    %v1662 = vsel %vm232, %v1659, 0
    %1664 = vmatprep.subr.mxu0 %v1525
    %1665 = vmatpush1.msra.mxu0 %v1524
    %1666 = vmatprep.subr.mxu0 %v1539
    %1667 = vmatpush1.msra.mxu0 %v1538
    %1668 = vmatprep.subr.mxu0 %v1605
    %1669 = vmatpush1.msra.mxu0 %v1604
    %1670 = vmatprep.subr.mxu0 %v1607
    %1671 = vmatpush1.msra.mxu0 %v1606
    %1672 = vmatprep.subr.mxu0 %v1625
    %1673 = vmatpush1.msra.mxu0 %v1624
    %1674 = vmatprep.subr.mxu0 %v1627
    %1675 = vmatpush1.msra.mxu0 %v1626
    %1676 = vmatprep.subr.mxu0 %v1645
    %1677 = vmatpush1.msra.mxu0 %v1644
    %1678 = vmatprep.subr.mxu0 %v1647
    %1679 = vmatpush1.msra.mxu0 %v1646
    %1680 = vmatprep.subr.mxu0 %v1662
    %1681 = vmatpush1.msra.mxu0 %v1660
    %1682 = vmatprep.subr.mxu0 0.0
    %1683 = vmatpush1.msra.mxu0 0.0
    %1684 = vmatprep.subr.mxu0 0.0
    %1685 = vmatpush1.msra.mxu0 0.0
    %1686 = vmatprep.subr.mxu0 0.0
    %1687 = vmatpush1.msra.mxu0 0.0
    %1688 = vmatprep.subr.mxu0 0.0
    %1689 = vmatpush1.msra.mxu0 0.0
    %1690 = vmatprep.subr.mxu0 0.0
    %1691 = vmatpush1.msra.mxu0 0.0
    %1692 = vmatprep.subr.mxu0 0.0
    %1693 = vmatpush1.msra.mxu0 0.0
    %1694 = vmatprep.subr.mxu0 0.0
    %1695 = vmatpush1.msra.mxu0 0.0
    %1696 = vmatprep.subr.mxu0 0.0
    %1697 = vmatpush1.msra.mxu0 0.0
    %1698 = vmatprep.subr.mxu0 0.0
    %1699 = vmatpush1.msra.mxu0 0.0
    %1700 = vmatprep.subr.mxu0 0.0
    %1701 = vmatpush1.msra.mxu0 0.0
    %1702 = vmatprep.subr.mxu0 0.0
    %1703 = vmatpush1.msra.mxu0 0.0
    %1704 = vmatprep.subr.mxu0 0.0
    %1705 = vmatpush1.msra.mxu0 0.0
    %1706 = vmatprep.subr.mxu0 0.0
    %1707 = vmatpush1.msra.mxu0 0.0
    %1708 = vmatprep.subr.mxu0 0.0
    %1709 = vmatpush1.msra.mxu0 0.0
    %1710 = vmatprep.subr.mxu0 0.0
    %1711 = vmatpush1.msra.mxu0 0.0
    %1712 = vmatprep.subr.mxu0 0.0
    %1713 = vmatpush1.msra.mxu0 0.0
    %1714 = vmatprep.subr.mxu0 0.0
    %1715 = vmatpush1.msra.mxu0 0.0
    %1716 = vmatprep.subr.mxu0 0.0
    %1717 = vmatpush1.msra.mxu0 0.0
    %1718 = vmatprep.subr.mxu0 0.0
    %1719 = vmatpush1.msra.mxu0 0.0
    %1720 = vmatprep.subr.mxu0 0.0
    %1721 = vmatpush1.msra.mxu0 0.0
    %1722 = vmatprep.subr.mxu0 0.0
    %1723 = vmatpush1.msra.mxu0 0.0
    %1724 = vmatprep.subr.mxu0 0.0
    %1725 = vmatpush1.msra.mxu0 0.0
    %1726 = vmatprep.subr.mxu0 0.0
    %1727 = vmatpush1.msra.mxu0 0.0
    %1728 = vmatprep.mubr.f32.mxu0 0.0
    %1729 = vmatmul.mubr.f32.gmra.mrb[0].mxu0 %v393
    %v1730 = vpop.f32.mrb[0].mxu0
    %v1731 = vadd.f32 0.0, %v1730
    %v1732 = vpop.f32.mrb[0].mxu0
    %v1733 = vadd.f32 0.0, %v1732
    %1734 = vmatprep.mubr.f32.mxu0 0.0
    %1735 = vmatmul.mubr.f32.gmra.mrb[0].mxu0 %v396
    %v1736 = vpop.f32.mrb[0].mxu0
    %v1737 = vadd.f32 0.0, %v1736
    %v1738 = vpop.f32.mrb[0].mxu0
    %v1739 = vadd.f32 0.0, %v1738
    %1740 = vmatprep.mubr.f32.mxu0 0.0
    %1741 = vmatmul.mubr.f32.gmra.mrb[0].mxu0 %v399
    %v1742 = vpop.f32.mrb[0].mxu0
    %v1743 = vadd.f32 0.0, %v1742
    %v1744 = vpop.f32.mrb[0].mxu0
    %v1745 = vadd.f32 0.0, %v1744
    %1746 = vdwg.mxu0
    %s1747 = scalar_lea.vmem [#allocation7], 144
    %1748 = vst [vmem:[%s1747] sm:$0xff] %v1731
    %1749 = vst [vmem:[%s1747 + $0x8] sm:$0xff] %v1733
    %1750 = vst [vmem:[%s1747 + $0x10] sm:$0xff] %v1737
    %1751 = vst [vmem:[%s1747 + $0x18] sm:$0xff] %v1739
    %1752 = vst [vmem:[%s1747 + $0x20] sm:$0xff] %v1743
    %1753 = vst [vmem:[%s1747 + $0x28] sm:$0xff] %v1745
    %s1754 = scalar_lea.vmem [#allocation2], 4
    %v1755 = vld [vmem:[%s1754] ss:$8 sm:$0x3]
    %s1756 = scalar_lea.vmem [#allocation2], 4
    %v1757 = vld [vmem:[%s1756] ss:$8 sm:$0x7]
    %v1759 = vlaneseq
    %v1760 = vshrl.u32 %v1759, 7
    %v1761 = vsub.s32 0, %v1760
    %v1762 = vrot.slane %v1755, %v1761
    %v1763 = vlaneseq
    %v1764 = vshrl.u32 %v1763, 7
    %v1765 = vsub.s32 1, %v1764
    %v1766 = vrot.slane %v1755, %v1765
    %v1770 = vlaneseq
    %v1771 = vshrl.u32 %v1770, 7
    %v1772 = vsub.s32 0, %v1771
    %v1773 = vrot.slane %v1757, %v1772
    %v1774 = vlaneseq
    %v1775 = vshrl.u32 %v1774, 7
    %v1776 = vsub.s32 1, %v1775
    %v1777 = vrot.slane %v1757, %v1776
    %v1778 = vlaneseq
    %v1779 = vshrl.u32 %v1778, 7
    %v1780 = vsub.s32 2, %v1779
    %v1781 = vrot.slane %v1757, %v1780
    %1782 = vrot.lane.b32.xlu0 %v1773, 127
    %v1783 = vpop.permute.xlu0 %1782
    %1784 = vrot.lane.b32.xlu0 %v1777, 127
    %v1785 = vpop.permute.xlu0 %1784
    %1786 = vrot.lane.b32.xlu0 %v1781, 127
    %v1787 = vpop.permute.xlu0 %1786
    %v1788 = vsel %vm73, %v1783, %v1785
    %v1789 = vsel %vm73, %v1785, %v1787
    %1792 = vrot.lane.b32.xlu0 %v1773, 126
    %v1793 = vpop.permute.xlu0 %1792
    %1794 = vrot.lane.b32.xlu0 %v1777, 126
    %v1795 = vpop.permute.xlu0 %1794
    %1796 = vrot.lane.b32.xlu0 %v1781, 126
    %v1797 = vpop.permute.xlu0 %1796
    %v1798 = vsel %vm84, %v1793, %v1795
    %v1799 = vsel %vm84, %v1795, %v1797
    %1802 = vrot.lane.b32.xlu0 %v1773, 125
    %v1803 = vpop.permute.xlu0 %1802
    %1804 = vrot.lane.b32.xlu0 %v1777, 125
    %v1805 = vpop.permute.xlu0 %1804
    %1806 = vrot.lane.b32.xlu0 %v1781, 125
    %v1807 = vpop.permute.xlu0 %1806
    %v1808 = vsel %vm95, %v1803, %v1805
    %v1809 = vsel %vm95, %v1805, %v1807
    %1812 = vrot.lane.b32.xlu0 %v1773, 124
    %v1813 = vpop.permute.xlu0 %1812
    %1814 = vrot.lane.b32.xlu0 %v1777, 124
    %v1815 = vpop.permute.xlu0 %1814
    %1816 = vrot.lane.b32.xlu0 %v1781, 124
    %v1817 = vpop.permute.xlu0 %1816
    %v1818 = vsel %vm106, %v1813, %v1815
    %v1819 = vsel %vm106, %v1815, %v1817
    %1822 = vrot.lane.b32.xlu0 %v1773, 123
    %v1823 = vpop.permute.xlu0 %1822
    %1824 = vrot.lane.b32.xlu0 %v1777, 123
    %v1825 = vpop.permute.xlu0 %1824
    %1826 = vrot.lane.b32.xlu0 %v1781, 123
    %v1827 = vpop.permute.xlu0 %1826
    %v1828 = vsel %vm117, %v1823, %v1825
    %v1829 = vsel %vm117, %v1825, %v1827
    %1832 = vrot.lane.b32.xlu0 %v1773, 122
    %v1833 = vpop.permute.xlu0 %1832
    %1834 = vrot.lane.b32.xlu0 %v1777, 122
    %v1835 = vpop.permute.xlu0 %1834
    %1836 = vrot.lane.b32.xlu0 %v1781, 122
    %v1837 = vpop.permute.xlu0 %1836
    %v1838 = vsel %vm128, %v1833, %v1835
    %v1839 = vsel %vm128, %v1835, %v1837
    %1842 = vrot.lane.b32.xlu0 %v1773, 121
    %v1843 = vpop.permute.xlu0 %1842
    %1844 = vrot.lane.b32.xlu0 %v1777, 121
    %v1845 = vpop.permute.xlu0 %1844
    %1846 = vrot.lane.b32.xlu0 %v1781, 121
    %v1847 = vpop.permute.xlu0 %1846
    %v1848 = vsel %vm139, %v1843, %v1845
    %v1849 = vsel %vm139, %v1845, %v1847
    %1852 = vrot.lane.b32.xlu0 %v1773, 120
    %v1853 = vpop.permute.xlu0 %1852
    %1854 = vrot.lane.b32.xlu0 %v1777, 120
    %v1855 = vpop.permute.xlu0 %1854
    %1856 = vrot.lane.b32.xlu0 %v1781, 120
    %v1857 = vpop.permute.xlu0 %1856
    %v1858 = vsel %vm150, %v1853, %v1855
    %v1859 = vsel %vm150, %v1855, %v1857
    %1862 = vrot.lane.b32.xlu0 %v1773, 119
    %v1863 = vpop.permute.xlu0 %1862
    %1864 = vrot.lane.b32.xlu0 %v1777, 119
    %v1865 = vpop.permute.xlu0 %1864
    %1866 = vrot.lane.b32.xlu0 %v1781, 119
    %v1867 = vpop.permute.xlu0 %1866
    %v1868 = vsel %vm161, %v1863, %v1865
    %v1869 = vsel %vm161, %v1865, %v1867
    %1872 = vrot.lane.b32.xlu0 %v1773, 118
    %v1873 = vpop.permute.xlu0 %1872
    %1874 = vrot.lane.b32.xlu0 %v1777, 118
    %v1875 = vpop.permute.xlu0 %1874
    %1876 = vrot.lane.b32.xlu0 %v1781, 118
    %v1877 = vpop.permute.xlu0 %1876
    %v1878 = vsel %vm172, %v1873, %v1875
    %v1879 = vsel %vm172, %v1875, %v1877
    %1882 = vrot.lane.b32.xlu0 %v1773, 117
    %v1883 = vpop.permute.xlu0 %1882
    %1884 = vrot.lane.b32.xlu0 %v1777, 117
    %v1885 = vpop.permute.xlu0 %1884
    %1886 = vrot.lane.b32.xlu0 %v1781, 117
    %v1887 = vpop.permute.xlu0 %1886
    %v1888 = vsel %vm183, %v1883, %v1885
    %v1889 = vsel %vm183, %v1885, %v1887
    %1892 = vrot.lane.b32.xlu0 %v1773, 116
    %v1893 = vpop.permute.xlu0 %1892
    %1894 = vrot.lane.b32.xlu0 %v1777, 116
    %v1895 = vpop.permute.xlu0 %1894
    %1896 = vrot.lane.b32.xlu0 %v1781, 116
    %v1897 = vpop.permute.xlu0 %1896
    %v1898 = vsel %vm194, %v1893, %v1895
    %v1899 = vsel %vm194, %v1895, %v1897
    %1902 = vrot.lane.b32.xlu0 %v1773, 115
    %v1903 = vpop.permute.xlu0 %1902
    %1904 = vrot.lane.b32.xlu0 %v1777, 115
    %v1905 = vpop.permute.xlu0 %1904
    %1906 = vrot.lane.b32.xlu0 %v1781, 115
    %v1907 = vpop.permute.xlu0 %1906
    %v1908 = vsel %vm205, %v1903, %v1905
    %v1909 = vsel %vm205, %v1905, %v1907
    %1912 = vrot.lane.b32.xlu0 %v1773, 114
    %v1913 = vpop.permute.xlu0 %1912
    %1914 = vrot.lane.b32.xlu0 %v1777, 114
    %v1915 = vpop.permute.xlu0 %1914
    %1916 = vrot.lane.b32.xlu0 %v1781, 114
    %v1917 = vpop.permute.xlu0 %1916
    %v1918 = vsel %vm216, %v1913, %v1915
    %v1919 = vsel %vm216, %v1915, %v1917
    %1922 = vrot.lane.b32.xlu0 %v1773, 113
    %v1923 = vpop.permute.xlu0 %1922
    %1924 = vrot.lane.b32.xlu0 %v1777, 113
    %v1925 = vpop.permute.xlu0 %1924
    %1926 = vrot.lane.b32.xlu0 %v1781, 113
    %v1927 = vpop.permute.xlu0 %1926
    %v1928 = vsel %vm227, %v1923, %v1925
    %v1929 = vsel %vm227, %v1925, %v1927
    %v1932 = vsel %vm232, %v1762, %v1788
    %v1933 = vsel %vm232, %v1766, %v1789
    %v1934 = vsel %vm235, %v1932, %v1798
    %v1935 = vsel %vm235, %v1933, %v1799
    %v1936 = vsel %vm238, %v1934, %v1808
    %v1937 = vsel %vm238, %v1935, %v1809
    %v1938 = vsel %vm241, %v1936, %v1818
    %v1939 = vsel %vm241, %v1937, %v1819
    %v1940 = vsel %vm244, %v1938, %v1828
    %v1941 = vsel %vm244, %v1939, %v1829
    %v1942 = vsel %vm247, %v1940, %v1838
    %v1943 = vsel %vm247, %v1941, %v1839
    %v1944 = vsel %vm250, %v1942, %v1848
    %v1945 = vsel %vm250, %v1943, %v1849
    %v1946 = vsel %vm232, %v1858, %v1868
    %v1947 = vsel %vm232, %v1859, %v1869
    %v1948 = vsel %vm235, %v1946, %v1878
    %v1949 = vsel %vm235, %v1947, %v1879
    %v1950 = vsel %vm238, %v1948, %v1888
    %v1951 = vsel %vm238, %v1949, %v1889
    %v1952 = vsel %vm241, %v1950, %v1898
    %v1953 = vsel %vm241, %v1951, %v1899
    %v1954 = vsel %vm244, %v1952, %v1908
    %v1955 = vsel %vm244, %v1953, %v1909
    %v1956 = vsel %vm247, %v1954, %v1918
    %v1957 = vsel %vm247, %v1955, %v1919
    %v1958 = vsel %vm250, %v1956, %v1928
    %v1959 = vsel %vm250, %v1957, %v1929
    %v1978 = vsel %vm232, %v1773, %v1788
    %v1979 = vsel %vm232, %v1777, %v1789
    %v1980 = vsel %vm232, %v1781, %v1787
    %v1981 = vsel %vm235, %v1978, %v1798
    %v1982 = vsel %vm235, %v1979, %v1799
    %v1983 = vsel %vm235, %v1980, %v1797
    %v1984 = vsel %vm238, %v1981, %v1808
    %v1985 = vsel %vm238, %v1982, %v1809
    %v1986 = vsel %vm238, %v1983, %v1807
    %v1987 = vsel %vm241, %v1984, %v1818
    %v1988 = vsel %vm241, %v1985, %v1819
    %v1989 = vsel %vm241, %v1986, %v1817
    %v1990 = vsel %vm244, %v1987, %v1828
    %v1991 = vsel %vm244, %v1988, %v1829
    %v1992 = vsel %vm244, %v1989, %v1827
    %v1993 = vsel %vm247, %v1990, %v1838
    %v1994 = vsel %vm247, %v1991, %v1839
    %v1995 = vsel %vm247, %v1992, %v1837
    %v1996 = vsel %vm250, %v1993, %v1848
    %v1997 = vsel %vm250, %v1994, %v1849
    %v1998 = vsel %vm250, %v1995, %v1847
    %v1999 = vsel %vm232, %v1857, %v1867
    %v2000 = vsel %vm235, %v1999, %v1877
    %v2001 = vsel %vm238, %v2000, %v1887
    %v2002 = vsel %vm241, %v2001, %v1897
    %v2003 = vsel %vm244, %v2002, %v1907
    %v2004 = vsel %vm247, %v2003, %v1917
    %v2005 = vsel %vm250, %v2004, %v1927
    %2012 = vrot.lane.b32.xlu0 %v1996, 112
    %v2013 = vpop.permute.xlu0 %2012
    %2014 = vrot.lane.b32.xlu0 %v1997, 112
    %v2015 = vpop.permute.xlu0 %2014
    %2016 = vrot.lane.b32.xlu0 %v1998, 112
    %v2017 = vpop.permute.xlu0 %2016
    %2018 = vrot.lane.b32.xlu0 %v1958, 112
    %v2019 = vpop.permute.xlu0 %2018
    %2020 = vrot.lane.b32.xlu0 %v1959, 112
    %v2021 = vpop.permute.xlu0 %2020
    %2022 = vrot.lane.b32.xlu0 %v2005, 112
    %v2023 = vpop.permute.xlu0 %2022
    %v2024 = vsel %vm331, %v2013, %v2015
    %v2025 = vsel %vm331, %v2015, %v2017
    %v2026 = vsel %vm331, %v2019, %v2021
    %v2027 = vsel %vm331, %v2021, %v2023
    %2032 = vrot.lane.b32.xlu0 %v1996, 96
    %v2033 = vpop.permute.xlu0 %2032
    %2034 = vrot.lane.b32.xlu0 %v1997, 96
    %v2035 = vpop.permute.xlu0 %2034
    %2036 = vrot.lane.b32.xlu0 %v1998, 96
    %v2037 = vpop.permute.xlu0 %2036
    %2038 = vrot.lane.b32.xlu0 %v1958, 96
    %v2039 = vpop.permute.xlu0 %2038
    %2040 = vrot.lane.b32.xlu0 %v1959, 96
    %v2041 = vpop.permute.xlu0 %2040
    %2042 = vrot.lane.b32.xlu0 %v2005, 96
    %v2043 = vpop.permute.xlu0 %2042
    %v2044 = vsel %vm352, %v2033, %v2035
    %v2045 = vsel %vm352, %v2035, %v2037
    %v2046 = vsel %vm352, %v2039, %v2041
    %v2047 = vsel %vm352, %v2041, %v2043
    %2052 = vrot.lane.b32.xlu0 %v1996, 80
    %v2053 = vpop.permute.xlu0 %2052
    %2054 = vrot.lane.b32.xlu0 %v1997, 80
    %v2055 = vpop.permute.xlu0 %2054
    %2056 = vrot.lane.b32.xlu0 %v1998, 80
    %v2057 = vpop.permute.xlu0 %2056
    %2058 = vrot.lane.b32.xlu0 %v1958, 80
    %v2059 = vpop.permute.xlu0 %2058
    %2060 = vrot.lane.b32.xlu0 %v1959, 80
    %v2061 = vpop.permute.xlu0 %2060
    %2062 = vrot.lane.b32.xlu0 %v2005, 80
    %v2063 = vpop.permute.xlu0 %2062
    %v2064 = vsel %vm373, %v2053, %v2055
    %v2065 = vsel %vm373, %v2055, %v2057
    %v2066 = vsel %vm373, %v2059, %v2061
    %v2067 = vsel %vm373, %v2061, %v2063
    %2072 = vrot.lane.b32.xlu0 %v1773, 64
    %v2073 = vpop.permute.xlu0 %2072
    %2074 = vrot.lane.b32.xlu0 %v1777, 64
    %v2075 = vpop.permute.xlu0 %2074
    %2076 = vrot.lane.b32.xlu0 %v1781, 64
    %v2077 = vpop.permute.xlu0 %2076
    %v2078 = vsel %vm388, %v2073, %v2075
    %v2079 = vsel %vm388, %v2075, %v2077
    %v2080 = vsel %vm232, %v2078, 0
    %v2082 = vsel %vm232, %v2079, 0
    %2084 = vmatprep.subr.mxu0 %v1945
    %2085 = vmatpush1.msra.mxu0 %v1944
    %2086 = vmatprep.subr.mxu0 %v1959
    %2087 = vmatpush1.msra.mxu0 %v1958
    %2088 = vmatprep.subr.mxu0 %v2025
    %2089 = vmatpush1.msra.mxu0 %v2024
    %2090 = vmatprep.subr.mxu0 %v2027
    %2091 = vmatpush1.msra.mxu0 %v2026
    %2092 = vmatprep.subr.mxu0 %v2045
    %2093 = vmatpush1.msra.mxu0 %v2044
    %2094 = vmatprep.subr.mxu0 %v2047
    %2095 = vmatpush1.msra.mxu0 %v2046
    %2096 = vmatprep.subr.mxu0 %v2065
    %2097 = vmatpush1.msra.mxu0 %v2064
    %2098 = vmatprep.subr.mxu0 %v2067
    %2099 = vmatpush1.msra.mxu0 %v2066
    %2100 = vmatprep.subr.mxu0 %v2082
    %2101 = vmatpush1.msra.mxu0 %v2080
    %2102 = vmatprep.subr.mxu0 0.0
    %2103 = vmatpush1.msra.mxu0 0.0
    %2104 = vmatprep.subr.mxu0 0.0
    %2105 = vmatpush1.msra.mxu0 0.0
    %2106 = vmatprep.subr.mxu0 0.0
    %2107 = vmatpush1.msra.mxu0 0.0
    %2108 = vmatprep.subr.mxu0 0.0
    %2109 = vmatpush1.msra.mxu0 0.0
    %2110 = vmatprep.subr.mxu0 0.0
    %2111 = vmatpush1.msra.mxu0 0.0
    %2112 = vmatprep.subr.mxu0 0.0
    %2113 = vmatpush1.msra.mxu0 0.0
    %2114 = vmatprep.subr.mxu0 0.0
    %2115 = vmatpush1.msra.mxu0 0.0
    %2116 = vmatprep.subr.mxu0 0.0
    %2117 = vmatpush1.msra.mxu0 0.0
    %2118 = vmatprep.subr.mxu0 0.0
    %2119 = vmatpush1.msra.mxu0 0.0
    %2120 = vmatprep.subr.mxu0 0.0
    %2121 = vmatpush1.msra.mxu0 0.0
    %2122 = vmatprep.subr.mxu0 0.0
    %2123 = vmatpush1.msra.mxu0 0.0
    %2124 = vmatprep.subr.mxu0 0.0
    %2125 = vmatpush1.msra.mxu0 0.0
    %2126 = vmatprep.subr.mxu0 0.0
    %2127 = vmatpush1.msra.mxu0 0.0
    %2128 = vmatprep.subr.mxu0 0.0
    %2129 = vmatpush1.msra.mxu0 0.0
    %2130 = vmatprep.subr.mxu0 0.0
    %2131 = vmatpush1.msra.mxu0 0.0
    %2132 = vmatprep.subr.mxu0 0.0
    %2133 = vmatpush1.msra.mxu0 0.0
    %2134 = vmatprep.subr.mxu0 0.0
    %2135 = vmatpush1.msra.mxu0 0.0
    %2136 = vmatprep.subr.mxu0 0.0
    %2137 = vmatpush1.msra.mxu0 0.0
    %2138 = vmatprep.subr.mxu0 0.0
    %2139 = vmatpush1.msra.mxu0 0.0
    %2140 = vmatprep.subr.mxu0 0.0
    %2141 = vmatpush1.msra.mxu0 0.0
    %2142 = vmatprep.subr.mxu0 0.0
    %2143 = vmatpush1.msra.mxu0 0.0
    %2144 = vmatprep.subr.mxu0 0.0
    %2145 = vmatpush1.msra.mxu0 0.0
    %2146 = vmatprep.subr.mxu0 0.0
    %2147 = vmatpush1.msra.mxu0 0.0
    %2148 = vmatprep.mubr.f32.mxu0 0.0
    %2149 = vmatmul.mubr.f32.gmra.mrb[0].mxu0 %v393
    %v2150 = vpop.f32.mrb[0].mxu0
    %v2151 = vadd.f32 0.0, %v2150
    %v2152 = vpop.f32.mrb[0].mxu0
    %v2153 = vadd.f32 0.0, %v2152
    %2154 = vmatprep.mubr.f32.mxu0 0.0
    %2155 = vmatmul.mubr.f32.gmra.mrb[0].mxu0 %v396
    %v2156 = vpop.f32.mrb[0].mxu0
    %v2157 = vadd.f32 0.0, %v2156
    %v2158 = vpop.f32.mrb[0].mxu0
    %v2159 = vadd.f32 0.0, %v2158
    %2160 = vmatprep.mubr.f32.mxu0 0.0
    %2161 = vmatmul.mubr.f32.gmra.mrb[0].mxu0 %v399
    %v2162 = vpop.f32.mrb[0].mxu0
    %v2163 = vadd.f32 0.0, %v2162
    %v2164 = vpop.f32.mrb[0].mxu0
    %v2165 = vadd.f32 0.0, %v2164
    %2166 = vdwg.mxu0
    %s2167 = scalar_lea.vmem [#allocation7], 192
    %2168 = vst [vmem:[%s2167] sm:$0xff] %v2151
    %2169 = vst [vmem:[%s2167 + $0x8] sm:$0xff] %v2153
    %2170 = vst [vmem:[%s2167 + $0x10] sm:$0xff] %v2157
    %2171 = vst [vmem:[%s2167 + $0x18] sm:$0xff] %v2159
    %2172 = vst [vmem:[%s2167 + $0x20] sm:$0xff] %v2163
    %2173 = vst [vmem:[%s2167 + $0x28] sm:$0xff] %v2165
    %s2174 = scalar_lea.vmem [#allocation2], 5
    %v2175 = vld [vmem:[%s2174] ss:$8 sm:$0x3]
    %s2176 = scalar_lea.vmem [#allocation2], 5
    %v2177 = vld [vmem:[%s2176] ss:$8 sm:$0x7]
    %v2179 = vlaneseq
    %v2180 = vshrl.u32 %v2179, 7
    %v2181 = vsub.s32 0, %v2180
    %v2182 = vrot.slane %v2175, %v2181
    %v2183 = vlaneseq
    %v2184 = vshrl.u32 %v2183, 7
    %v2185 = vsub.s32 1, %v2184
    %v2186 = vrot.slane %v2175, %v2185
    %v2190 = vlaneseq
    %v2191 = vshrl.u32 %v2190, 7
    %v2192 = vsub.s32 0, %v2191
    %v2193 = vrot.slane %v2177, %v2192
    %v2194 = vlaneseq
    %v2195 = vshrl.u32 %v2194, 7
    %v2196 = vsub.s32 1, %v2195
    %v2197 = vrot.slane %v2177, %v2196
    %v2198 = vlaneseq
    %v2199 = vshrl.u32 %v2198, 7
    %v2200 = vsub.s32 2, %v2199
    %v2201 = vrot.slane %v2177, %v2200
    %2202 = vrot.lane.b32.xlu0 %v2193, 127
    %v2203 = vpop.permute.xlu0 %2202
    %2204 = vrot.lane.b32.xlu0 %v2197, 127
    %v2205 = vpop.permute.xlu0 %2204
    %2206 = vrot.lane.b32.xlu0 %v2201, 127
    %v2207 = vpop.permute.xlu0 %2206
    %v2208 = vsel %vm73, %v2203, %v2205
    %v2209 = vsel %vm73, %v2205, %v2207
    %2212 = vrot.lane.b32.xlu0 %v2193, 126
    %v2213 = vpop.permute.xlu0 %2212
    %2214 = vrot.lane.b32.xlu0 %v2197, 126
    %v2215 = vpop.permute.xlu0 %2214
    %2216 = vrot.lane.b32.xlu0 %v2201, 126
    %v2217 = vpop.permute.xlu0 %2216
    %v2218 = vsel %vm84, %v2213, %v2215
    %v2219 = vsel %vm84, %v2215, %v2217
    %2222 = vrot.lane.b32.xlu0 %v2193, 125
    %v2223 = vpop.permute.xlu0 %2222
    %2224 = vrot.lane.b32.xlu0 %v2197, 125
    %v2225 = vpop.permute.xlu0 %2224
    %2226 = vrot.lane.b32.xlu0 %v2201, 125
    %v2227 = vpop.permute.xlu0 %2226
    %v2228 = vsel %vm95, %v2223, %v2225
    %v2229 = vsel %vm95, %v2225, %v2227
    %2232 = vrot.lane.b32.xlu0 %v2193, 124
    %v2233 = vpop.permute.xlu0 %2232
    %2234 = vrot.lane.b32.xlu0 %v2197, 124
    %v2235 = vpop.permute.xlu0 %2234
    %2236 = vrot.lane.b32.xlu0 %v2201, 124
    %v2237 = vpop.permute.xlu0 %2236
    %v2238 = vsel %vm106, %v2233, %v2235
    %v2239 = vsel %vm106, %v2235, %v2237
    %2242 = vrot.lane.b32.xlu0 %v2193, 123
    %v2243 = vpop.permute.xlu0 %2242
    %2244 = vrot.lane.b32.xlu0 %v2197, 123
    %v2245 = vpop.permute.xlu0 %2244
    %2246 = vrot.lane.b32.xlu0 %v2201, 123
    %v2247 = vpop.permute.xlu0 %2246
    %v2248 = vsel %vm117, %v2243, %v2245
    %v2249 = vsel %vm117, %v2245, %v2247
    %2252 = vrot.lane.b32.xlu0 %v2193, 122
    %v2253 = vpop.permute.xlu0 %2252
    %2254 = vrot.lane.b32.xlu0 %v2197, 122
    %v2255 = vpop.permute.xlu0 %2254
    %2256 = vrot.lane.b32.xlu0 %v2201, 122
    %v2257 = vpop.permute.xlu0 %2256
    %v2258 = vsel %vm128, %v2253, %v2255
    %v2259 = vsel %vm128, %v2255, %v2257
    %2262 = vrot.lane.b32.xlu0 %v2193, 121
    %v2263 = vpop.permute.xlu0 %2262
    %2264 = vrot.lane.b32.xlu0 %v2197, 121
    %v2265 = vpop.permute.xlu0 %2264
    %2266 = vrot.lane.b32.xlu0 %v2201, 121
    %v2267 = vpop.permute.xlu0 %2266
    %v2268 = vsel %vm139, %v2263, %v2265
    %v2269 = vsel %vm139, %v2265, %v2267
    %2272 = vrot.lane.b32.xlu0 %v2193, 120
    %v2273 = vpop.permute.xlu0 %2272
    %2274 = vrot.lane.b32.xlu0 %v2197, 120
    %v2275 = vpop.permute.xlu0 %2274
    %2276 = vrot.lane.b32.xlu0 %v2201, 120
    %v2277 = vpop.permute.xlu0 %2276
    %v2278 = vsel %vm150, %v2273, %v2275
    %v2279 = vsel %vm150, %v2275, %v2277
    %2282 = vrot.lane.b32.xlu0 %v2193, 119
    %v2283 = vpop.permute.xlu0 %2282
    %2284 = vrot.lane.b32.xlu0 %v2197, 119
    %v2285 = vpop.permute.xlu0 %2284
    %2286 = vrot.lane.b32.xlu0 %v2201, 119
    %v2287 = vpop.permute.xlu0 %2286
    %v2288 = vsel %vm161, %v2283, %v2285
    %v2289 = vsel %vm161, %v2285, %v2287
    %2292 = vrot.lane.b32.xlu0 %v2193, 118
    %v2293 = vpop.permute.xlu0 %2292
    %2294 = vrot.lane.b32.xlu0 %v2197, 118
    %v2295 = vpop.permute.xlu0 %2294
    %2296 = vrot.lane.b32.xlu0 %v2201, 118
    %v2297 = vpop.permute.xlu0 %2296
    %v2298 = vsel %vm172, %v2293, %v2295
    %v2299 = vsel %vm172, %v2295, %v2297
    %2302 = vrot.lane.b32.xlu0 %v2193, 117
    %v2303 = vpop.permute.xlu0 %2302
    %2304 = vrot.lane.b32.xlu0 %v2197, 117
    %v2305 = vpop.permute.xlu0 %2304
    %2306 = vrot.lane.b32.xlu0 %v2201, 117
    %v2307 = vpop.permute.xlu0 %2306
    %v2308 = vsel %vm183, %v2303, %v2305
    %v2309 = vsel %vm183, %v2305, %v2307
    %2312 = vrot.lane.b32.xlu0 %v2193, 116
    %v2313 = vpop.permute.xlu0 %2312
    %2314 = vrot.lane.b32.xlu0 %v2197, 116
    %v2315 = vpop.permute.xlu0 %2314
    %2316 = vrot.lane.b32.xlu0 %v2201, 116
    %v2317 = vpop.permute.xlu0 %2316
    %v2318 = vsel %vm194, %v2313, %v2315
    %v2319 = vsel %vm194, %v2315, %v2317
    %2322 = vrot.lane.b32.xlu0 %v2193, 115
    %v2323 = vpop.permute.xlu0 %2322
    %2324 = vrot.lane.b32.xlu0 %v2197, 115
    %v2325 = vpop.permute.xlu0 %2324
    %2326 = vrot.lane.b32.xlu0 %v2201, 115
    %v2327 = vpop.permute.xlu0 %2326
    %v2328 = vsel %vm205, %v2323, %v2325
    %v2329 = vsel %vm205, %v2325, %v2327
    %2332 = vrot.lane.b32.xlu0 %v2193, 114
    %v2333 = vpop.permute.xlu0 %2332
    %2334 = vrot.lane.b32.xlu0 %v2197, 114
    %v2335 = vpop.permute.xlu0 %2334
    %2336 = vrot.lane.b32.xlu0 %v2201, 114
    %v2337 = vpop.permute.xlu0 %2336
    %v2338 = vsel %vm216, %v2333, %v2335
    %v2339 = vsel %vm216, %v2335, %v2337
    %2342 = vrot.lane.b32.xlu0 %v2193, 113
    %v2343 = vpop.permute.xlu0 %2342
    %2344 = vrot.lane.b32.xlu0 %v2197, 113
    %v2345 = vpop.permute.xlu0 %2344
    %2346 = vrot.lane.b32.xlu0 %v2201, 113
    %v2347 = vpop.permute.xlu0 %2346
    %v2348 = vsel %vm227, %v2343, %v2345
    %v2349 = vsel %vm227, %v2345, %v2347
    %v2352 = vsel %vm232, %v2182, %v2208
    %v2353 = vsel %vm232, %v2186, %v2209
    %v2354 = vsel %vm235, %v2352, %v2218
    %v2355 = vsel %vm235, %v2353, %v2219
    %v2356 = vsel %vm238, %v2354, %v2228
    %v2357 = vsel %vm238, %v2355, %v2229
    %v2358 = vsel %vm241, %v2356, %v2238
    %v2359 = vsel %vm241, %v2357, %v2239
    %v2360 = vsel %vm244, %v2358, %v2248
    %v2361 = vsel %vm244, %v2359, %v2249
    %v2362 = vsel %vm247, %v2360, %v2258
    %v2363 = vsel %vm247, %v2361, %v2259
    %v2364 = vsel %vm250, %v2362, %v2268
    %v2365 = vsel %vm250, %v2363, %v2269
    %v2366 = vsel %vm232, %v2278, %v2288
    %v2367 = vsel %vm232, %v2279, %v2289
    %v2368 = vsel %vm235, %v2366, %v2298
    %v2369 = vsel %vm235, %v2367, %v2299
    %v2370 = vsel %vm238, %v2368, %v2308
    %v2371 = vsel %vm238, %v2369, %v2309
    %v2372 = vsel %vm241, %v2370, %v2318
    %v2373 = vsel %vm241, %v2371, %v2319
    %v2374 = vsel %vm244, %v2372, %v2328
    %v2375 = vsel %vm244, %v2373, %v2329
    %v2376 = vsel %vm247, %v2374, %v2338
    %v2377 = vsel %vm247, %v2375, %v2339
    %v2378 = vsel %vm250, %v2376, %v2348
    %v2379 = vsel %vm250, %v2377, %v2349
    %v2398 = vsel %vm232, %v2193, %v2208
    %v2399 = vsel %vm232, %v2197, %v2209
    %v2400 = vsel %vm232, %v2201, %v2207
    %v2401 = vsel %vm235, %v2398, %v2218
    %v2402 = vsel %vm235, %v2399, %v2219
    %v2403 = vsel %vm235, %v2400, %v2217
    %v2404 = vsel %vm238, %v2401, %v2228
    %v2405 = vsel %vm238, %v2402, %v2229
    %v2406 = vsel %vm238, %v2403, %v2227
    %v2407 = vsel %vm241, %v2404, %v2238
    %v2408 = vsel %vm241, %v2405, %v2239
    %v2409 = vsel %vm241, %v2406, %v2237
    %v2410 = vsel %vm244, %v2407, %v2248
    %v2411 = vsel %vm244, %v2408, %v2249
    %v2412 = vsel %vm244, %v2409, %v2247
    %v2413 = vsel %vm247, %v2410, %v2258
    %v2414 = vsel %vm247, %v2411, %v2259
    %v2415 = vsel %vm247, %v2412, %v2257
    %v2416 = vsel %vm250, %v2413, %v2268
    %v2417 = vsel %vm250, %v2414, %v2269
    %v2418 = vsel %vm250, %v2415, %v2267
    %v2419 = vsel %vm232, %v2277, %v2287
    %v2420 = vsel %vm235, %v2419, %v2297
    %v2421 = vsel %vm238, %v2420, %v2307
    %v2422 = vsel %vm241, %v2421, %v2317
    %v2423 = vsel %vm244, %v2422, %v2327
    %v2424 = vsel %vm247, %v2423, %v2337
    %v2425 = vsel %vm250, %v2424, %v2347
    %2432 = vrot.lane.b32.xlu0 %v2416, 112
    %v2433 = vpop.permute.xlu0 %2432
    %2434 = vrot.lane.b32.xlu0 %v2417, 112
    %v2435 = vpop.permute.xlu0 %2434
    %2436 = vrot.lane.b32.xlu0 %v2418, 112
    %v2437 = vpop.permute.xlu0 %2436
    %2438 = vrot.lane.b32.xlu0 %v2378, 112
    %v2439 = vpop.permute.xlu0 %2438
    %2440 = vrot.lane.b32.xlu0 %v2379, 112
    %v2441 = vpop.permute.xlu0 %2440
    %2442 = vrot.lane.b32.xlu0 %v2425, 112
    %v2443 = vpop.permute.xlu0 %2442
    %v2444 = vsel %vm331, %v2433, %v2435
    %v2445 = vsel %vm331, %v2435, %v2437
    %v2446 = vsel %vm331, %v2439, %v2441
    %v2447 = vsel %vm331, %v2441, %v2443
    %2452 = vrot.lane.b32.xlu0 %v2416, 96
    %v2453 = vpop.permute.xlu0 %2452
    %2454 = vrot.lane.b32.xlu0 %v2417, 96
    %v2455 = vpop.permute.xlu0 %2454
    %2456 = vrot.lane.b32.xlu0 %v2418, 96
    %v2457 = vpop.permute.xlu0 %2456
    %2458 = vrot.lane.b32.xlu0 %v2378, 96
    %v2459 = vpop.permute.xlu0 %2458
    %2460 = vrot.lane.b32.xlu0 %v2379, 96
    %v2461 = vpop.permute.xlu0 %2460
    %2462 = vrot.lane.b32.xlu0 %v2425, 96
    %v2463 = vpop.permute.xlu0 %2462
    %v2464 = vsel %vm352, %v2453, %v2455
    %v2465 = vsel %vm352, %v2455, %v2457
    %v2466 = vsel %vm352, %v2459, %v2461
    %v2467 = vsel %vm352, %v2461, %v2463
    %2472 = vrot.lane.b32.xlu0 %v2416, 80
    %v2473 = vpop.permute.xlu0 %2472
    %2474 = vrot.lane.b32.xlu0 %v2417, 80
    %v2475 = vpop.permute.xlu0 %2474
    %2476 = vrot.lane.b32.xlu0 %v2418, 80
    %v2477 = vpop.permute.xlu0 %2476
    %2478 = vrot.lane.b32.xlu0 %v2378, 80
    %v2479 = vpop.permute.xlu0 %2478
    %2480 = vrot.lane.b32.xlu0 %v2379, 80
    %v2481 = vpop.permute.xlu0 %2480
    %2482 = vrot.lane.b32.xlu0 %v2425, 80
    %v2483 = vpop.permute.xlu0 %2482
    %v2484 = vsel %vm373, %v2473, %v2475
    %v2485 = vsel %vm373, %v2475, %v2477
    %v2486 = vsel %vm373, %v2479, %v2481
    %v2487 = vsel %vm373, %v2481, %v2483
    %2492 = vrot.lane.b32.xlu0 %v2193, 64
    %v2493 = vpop.permute.xlu0 %2492
    %2494 = vrot.lane.b32.xlu0 %v2197, 64
    %v2495 = vpop.permute.xlu0 %2494
    %2496 = vrot.lane.b32.xlu0 %v2201, 64
    %v2497 = vpop.permute.xlu0 %2496
    %v2498 = vsel %vm388, %v2493, %v2495
    %v2499 = vsel %vm388, %v2495, %v2497
    %v2500 = vsel %vm232, %v2498, 0
    %v2502 = vsel %vm232, %v2499, 0
    %2504 = vmatprep.subr.mxu0 %v2365
    %2505 = vmatpush1.msra.mxu0 %v2364
    %2506 = vmatprep.subr.mxu0 %v2379
    %2507 = vmatpush1.msra.mxu0 %v2378
    %2508 = vmatprep.subr.mxu0 %v2445
    %2509 = vmatpush1.msra.mxu0 %v2444
    %2510 = vmatprep.subr.mxu0 %v2447
    %2511 = vmatpush1.msra.mxu0 %v2446
    %2512 = vmatprep.subr.mxu0 %v2465
    %2513 = vmatpush1.msra.mxu0 %v2464
    %2514 = vmatprep.subr.mxu0 %v2467
    %2515 = vmatpush1.msra.mxu0 %v2466
    %2516 = vmatprep.subr.mxu0 %v2485
    %2517 = vmatpush1.msra.mxu0 %v2484
    %2518 = vmatprep.subr.mxu0 %v2487
    %2519 = vmatpush1.msra.mxu0 %v2486
    %2520 = vmatprep.subr.mxu0 %v2502
    %2521 = vmatpush1.msra.mxu0 %v2500
    %2522 = vmatprep.subr.mxu0 0.0
    %2523 = vmatpush1.msra.mxu0 0.0
    %2524 = vmatprep.subr.mxu0 0.0
    %2525 = vmatpush1.msra.mxu0 0.0
    %2526 = vmatprep.subr.mxu0 0.0
    %2527 = vmatpush1.msra.mxu0 0.0
    %2528 = vmatprep.subr.mxu0 0.0
    %2529 = vmatpush1.msra.mxu0 0.0
    %2530 = vmatprep.subr.mxu0 0.0
    %2531 = vmatpush1.msra.mxu0 0.0
    %2532 = vmatprep.subr.mxu0 0.0
    %2533 = vmatpush1.msra.mxu0 0.0
    %2534 = vmatprep.subr.mxu0 0.0
    %2535 = vmatpush1.msra.mxu0 0.0
    %2536 = vmatprep.subr.mxu0 0.0
    %2537 = vmatpush1.msra.mxu0 0.0
    %2538 = vmatprep.subr.mxu0 0.0
    %2539 = vmatpush1.msra.mxu0 0.0
    %2540 = vmatprep.subr.mxu0 0.0
    %2541 = vmatpush1.msra.mxu0 0.0
    %2542 = vmatprep.subr.mxu0 0.0
    %2543 = vmatpush1.msra.mxu0 0.0
    %2544 = vmatprep.subr.mxu0 0.0
    %2545 = vmatpush1.msra.mxu0 0.0
    %2546 = vmatprep.subr.mxu0 0.0
    %2547 = vmatpush1.msra.mxu0 0.0
    %2548 = vmatprep.subr.mxu0 0.0
    %2549 = vmatpush1.msra.mxu0 0.0
    %2550 = vmatprep.subr.mxu0 0.0
    %2551 = vmatpush1.msra.mxu0 0.0
    %2552 = vmatprep.subr.mxu0 0.0
    %2553 = vmatpush1.msra.mxu0 0.0
    %2554 = vmatprep.subr.mxu0 0.0
    %2555 = vmatpush1.msra.mxu0 0.0
    %2556 = vmatprep.subr.mxu0 0.0
    %2557 = vmatpush1.msra.mxu0 0.0
    %2558 = vmatprep.subr.mxu0 0.0
    %2559 = vmatpush1.msra.mxu0 0.0
    %2560 = vmatprep.subr.mxu0 0.0
    %2561 = vmatpush1.msra.mxu0 0.0
    %2562 = vmatprep.subr.mxu0 0.0
    %2563 = vmatpush1.msra.mxu0 0.0
    %2564 = vmatprep.subr.mxu0 0.0
    %2565 = vmatpush1.msra.mxu0 0.0
    %2566 = vmatprep.subr.mxu0 0.0
    %2567 = vmatpush1.msra.mxu0 0.0
    %2568 = vmatprep.mubr.f32.mxu0 0.0
    %2569 = vmatmul.mubr.f32.gmra.mrb[0].mxu0 %v393
    %v2570 = vpop.f32.mrb[0].mxu0
    %v2571 = vadd.f32 0.0, %v2570
    %v2572 = vpop.f32.mrb[0].mxu0
    %v2573 = vadd.f32 0.0, %v2572
    %2574 = vmatprep.mubr.f32.mxu0 0.0
    %2575 = vmatmul.mubr.f32.gmra.mrb[0].mxu0 %v396
    %v2576 = vpop.f32.mrb[0].mxu0
    %v2577 = vadd.f32 0.0, %v2576
    %v2578 = vpop.f32.mrb[0].mxu0
    %v2579 = vadd.f32 0.0, %v2578
    %2580 = vmatprep.mubr.f32.mxu0 0.0
    %2581 = vmatmul.mubr.f32.gmra.mrb[0].mxu0 %v399
    %v2582 = vpop.f32.mrb[0].mxu0
    %v2583 = vadd.f32 0.0, %v2582
    %v2584 = vpop.f32.mrb[0].mxu0
    %v2585 = vadd.f32 0.0, %v2584
    %2586 = vdwg.mxu0
    %s2587 = scalar_lea.vmem [#allocation7], 240
    %2588 = vst [vmem:[%s2587] sm:$0xff] %v2571
    %2589 = vst [vmem:[%s2587 + $0x8] sm:$0xff] %v2573
    %2590 = vst [vmem:[%s2587 + $0x10] sm:$0xff] %v2577
    %2591 = vst [vmem:[%s2587 + $0x18] sm:$0xff] %v2579
    %2592 = vst [vmem:[%s2587 + $0x20] sm:$0xff] %v2583
    %2593 = vst [vmem:[%s2587 + $0x28] sm:$0xff] %v2585
    %s2594 = scalar_lea.vmem [#allocation2], 6
    %v2595 = vld [vmem:[%s2594] ss:$8 sm:$0x3]
    %s2596 = scalar_lea.vmem [#allocation2], 6
    %v2597 = vld [vmem:[%s2596] ss:$8 sm:$0x7]
    %v2599 = vlaneseq
    %v2600 = vshrl.u32 %v2599, 7
    %v2601 = vsub.s32 0, %v2600
    %v2602 = vrot.slane %v2595, %v2601
    %v2603 = vlaneseq
    %v2604 = vshrl.u32 %v2603, 7
    %v2605 = vsub.s32 1, %v2604
    %v2606 = vrot.slane %v2595, %v2605
    %v2610 = vlaneseq
    %v2611 = vshrl.u32 %v2610, 7
    %v2612 = vsub.s32 0, %v2611
    %v2613 = vrot.slane %v2597, %v2612
    %v2614 = vlaneseq
    %v2615 = vshrl.u32 %v2614, 7
    %v2616 = vsub.s32 1, %v2615
    %v2617 = vrot.slane %v2597, %v2616
    %v2618 = vlaneseq
    %v2619 = vshrl.u32 %v2618, 7
    %v2620 = vsub.s32 2, %v2619
    %v2621 = vrot.slane %v2597, %v2620
    %2622 = vrot.lane.b32.xlu0 %v2613, 127
    %v2623 = vpop.permute.xlu0 %2622
    %2624 = vrot.lane.b32.xlu0 %v2617, 127
    %v2625 = vpop.permute.xlu0 %2624
    %2626 = vrot.lane.b32.xlu0 %v2621, 127
    %v2627 = vpop.permute.xlu0 %2626
    %v2628 = vsel %vm73, %v2623, %v2625
    %v2629 = vsel %vm73, %v2625, %v2627
    %2632 = vrot.lane.b32.xlu0 %v2613, 126
    %v2633 = vpop.permute.xlu0 %2632
    %2634 = vrot.lane.b32.xlu0 %v2617, 126
    %v2635 = vpop.permute.xlu0 %2634
    %2636 = vrot.lane.b32.xlu0 %v2621, 126
    %v2637 = vpop.permute.xlu0 %2636
    %v2638 = vsel %vm84, %v2633, %v2635
    %v2639 = vsel %vm84, %v2635, %v2637
    %2642 = vrot.lane.b32.xlu0 %v2613, 125
    %v2643 = vpop.permute.xlu0 %2642
    %2644 = vrot.lane.b32.xlu0 %v2617, 125
    %v2645 = vpop.permute.xlu0 %2644
    %2646 = vrot.lane.b32.xlu0 %v2621, 125
    %v2647 = vpop.permute.xlu0 %2646
    %v2648 = vsel %vm95, %v2643, %v2645
    %v2649 = vsel %vm95, %v2645, %v2647
    %2652 = vrot.lane.b32.xlu0 %v2613, 124
    %v2653 = vpop.permute.xlu0 %2652
    %2654 = vrot.lane.b32.xlu0 %v2617, 124
    %v2655 = vpop.permute.xlu0 %2654
    %2656 = vrot.lane.b32.xlu0 %v2621, 124
    %v2657 = vpop.permute.xlu0 %2656
    %v2658 = vsel %vm106, %v2653, %v2655
    %v2659 = vsel %vm106, %v2655, %v2657
    %2662 = vrot.lane.b32.xlu0 %v2613, 123
    %v2663 = vpop.permute.xlu0 %2662
    %2664 = vrot.lane.b32.xlu0 %v2617, 123
    %v2665 = vpop.permute.xlu0 %2664
    %2666 = vrot.lane.b32.xlu0 %v2621, 123
    %v2667 = vpop.permute.xlu0 %2666
    %v2668 = vsel %vm117, %v2663, %v2665
    %v2669 = vsel %vm117, %v2665, %v2667
    %2672 = vrot.lane.b32.xlu0 %v2613, 122
    %v2673 = vpop.permute.xlu0 %2672
    %2674 = vrot.lane.b32.xlu0 %v2617, 122
    %v2675 = vpop.permute.xlu0 %2674
    %2676 = vrot.lane.b32.xlu0 %v2621, 122
    %v2677 = vpop.permute.xlu0 %2676
    %v2678 = vsel %vm128, %v2673, %v2675
    %v2679 = vsel %vm128, %v2675, %v2677
    %2682 = vrot.lane.b32.xlu0 %v2613, 121
    %v2683 = vpop.permute.xlu0 %2682
    %2684 = vrot.lane.b32.xlu0 %v2617, 121
    %v2685 = vpop.permute.xlu0 %2684
    %2686 = vrot.lane.b32.xlu0 %v2621, 121
    %v2687 = vpop.permute.xlu0 %2686
    %v2688 = vsel %vm139, %v2683, %v2685
    %v2689 = vsel %vm139, %v2685, %v2687
    %2692 = vrot.lane.b32.xlu0 %v2613, 120
    %v2693 = vpop.permute.xlu0 %2692
    %2694 = vrot.lane.b32.xlu0 %v2617, 120
    %v2695 = vpop.permute.xlu0 %2694
    %2696 = vrot.lane.b32.xlu0 %v2621, 120
    %v2697 = vpop.permute.xlu0 %2696
    %v2698 = vsel %vm150, %v2693, %v2695
    %v2699 = vsel %vm150, %v2695, %v2697
    %2702 = vrot.lane.b32.xlu0 %v2613, 119
    %v2703 = vpop.permute.xlu0 %2702
    %2704 = vrot.lane.b32.xlu0 %v2617, 119
    %v2705 = vpop.permute.xlu0 %2704
    %2706 = vrot.lane.b32.xlu0 %v2621, 119
    %v2707 = vpop.permute.xlu0 %2706
    %v2708 = vsel %vm161, %v2703, %v2705
    %v2709 = vsel %vm161, %v2705, %v2707
    %2712 = vrot.lane.b32.xlu0 %v2613, 118
    %v2713 = vpop.permute.xlu0 %2712
    %2714 = vrot.lane.b32.xlu0 %v2617, 118
    %v2715 = vpop.permute.xlu0 %2714
    %2716 = vrot.lane.b32.xlu0 %v2621, 118
    %v2717 = vpop.permute.xlu0 %2716
    %v2718 = vsel %vm172, %v2713, %v2715
    %v2719 = vsel %vm172, %v2715, %v2717
    %2722 = vrot.lane.b32.xlu0 %v2613, 117
    %v2723 = vpop.permute.xlu0 %2722
    %2724 = vrot.lane.b32.xlu0 %v2617, 117
    %v2725 = vpop.permute.xlu0 %2724
    %2726 = vrot.lane.b32.xlu0 %v2621, 117
    %v2727 = vpop.permute.xlu0 %2726
    %v2728 = vsel %vm183, %v2723, %v2725
    %v2729 = vsel %vm183, %v2725, %v2727
    %2732 = vrot.lane.b32.xlu0 %v2613, 116
    %v2733 = vpop.permute.xlu0 %2732
    %2734 = vrot.lane.b32.xlu0 %v2617, 116
    %v2735 = vpop.permute.xlu0 %2734
    %2736 = vrot.lane.b32.xlu0 %v2621, 116
    %v2737 = vpop.permute.xlu0 %2736
    %v2738 = vsel %vm194, %v2733, %v2735
    %v2739 = vsel %vm194, %v2735, %v2737
    %2742 = vrot.lane.b32.xlu0 %v2613, 115
    %v2743 = vpop.permute.xlu0 %2742
    %2744 = vrot.lane.b32.xlu0 %v2617, 115
    %v2745 = vpop.permute.xlu0 %2744
    %2746 = vrot.lane.b32.xlu0 %v2621, 115
    %v2747 = vpop.permute.xlu0 %2746
    %v2748 = vsel %vm205, %v2743, %v2745
    %v2749 = vsel %vm205, %v2745, %v2747
    %2752 = vrot.lane.b32.xlu0 %v2613, 114
    %v2753 = vpop.permute.xlu0 %2752
    %2754 = vrot.lane.b32.xlu0 %v2617, 114
    %v2755 = vpop.permute.xlu0 %2754
    %2756 = vrot.lane.b32.xlu0 %v2621, 114
    %v2757 = vpop.permute.xlu0 %2756
    %v2758 = vsel %vm216, %v2753, %v2755
    %v2759 = vsel %vm216, %v2755, %v2757
    %2762 = vrot.lane.b32.xlu0 %v2613, 113
    %v2763 = vpop.permute.xlu0 %2762
    %2764 = vrot.lane.b32.xlu0 %v2617, 113
    %v2765 = vpop.permute.xlu0 %2764
    %2766 = vrot.lane.b32.xlu0 %v2621, 113
    %v2767 = vpop.permute.xlu0 %2766
    %v2768 = vsel %vm227, %v2763, %v2765
    %v2769 = vsel %vm227, %v2765, %v2767
    %v2772 = vsel %vm232, %v2602, %v2628
    %v2773 = vsel %vm232, %v2606, %v2629
    %v2774 = vsel %vm235, %v2772, %v2638
    %v2775 = vsel %vm235, %v2773, %v2639
    %v2776 = vsel %vm238, %v2774, %v2648
    %v2777 = vsel %vm238, %v2775, %v2649
    %v2778 = vsel %vm241, %v2776, %v2658
    %v2779 = vsel %vm241, %v2777, %v2659
    %v2780 = vsel %vm244, %v2778, %v2668
    %v2781 = vsel %vm244, %v2779, %v2669
    %v2782 = vsel %vm247, %v2780, %v2678
    %v2783 = vsel %vm247, %v2781, %v2679
    %v2784 = vsel %vm250, %v2782, %v2688
    %v2785 = vsel %vm250, %v2783, %v2689
    %v2786 = vsel %vm232, %v2698, %v2708
    %v2787 = vsel %vm232, %v2699, %v2709
    %v2788 = vsel %vm235, %v2786, %v2718
    %v2789 = vsel %vm235, %v2787, %v2719
    %v2790 = vsel %vm238, %v2788, %v2728
    %v2791 = vsel %vm238, %v2789, %v2729
    %v2792 = vsel %vm241, %v2790, %v2738
    %v2793 = vsel %vm241, %v2791, %v2739
    %v2794 = vsel %vm244, %v2792, %v2748
    %v2795 = vsel %vm244, %v2793, %v2749
    %v2796 = vsel %vm247, %v2794, %v2758
    %v2797 = vsel %vm247, %v2795, %v2759
    %v2798 = vsel %vm250, %v2796, %v2768
    %v2799 = vsel %vm250, %v2797, %v2769
    %v2818 = vsel %vm232, %v2613, %v2628
    %v2819 = vsel %vm232, %v2617, %v2629
    %v2820 = vsel %vm232, %v2621, %v2627
    %v2821 = vsel %vm235, %v2818, %v2638
    %v2822 = vsel %vm235, %v2819, %v2639
    %v2823 = vsel %vm235, %v2820, %v2637
    %v2824 = vsel %vm238, %v2821, %v2648
    %v2825 = vsel %vm238, %v2822, %v2649
    %v2826 = vsel %vm238, %v2823, %v2647
    %v2827 = vsel %vm241, %v2824, %v2658
    %v2828 = vsel %vm241, %v2825, %v2659
    %v2829 = vsel %vm241, %v2826, %v2657
    %v2830 = vsel %vm244, %v2827, %v2668
    %v2831 = vsel %vm244, %v2828, %v2669
    %v2832 = vsel %vm244, %v2829, %v2667
    %v2833 = vsel %vm247, %v2830, %v2678
    %v2834 = vsel %vm247, %v2831, %v2679
    %v2835 = vsel %vm247, %v2832, %v2677
    %v2836 = vsel %vm250, %v2833, %v2688
    %v2837 = vsel %vm250, %v2834, %v2689
    %v2838 = vsel %vm250, %v2835, %v2687
    %v2839 = vsel %vm232, %v2697, %v2707
    %v2840 = vsel %vm235, %v2839, %v2717
    %v2841 = vsel %vm238, %v2840, %v2727
    %v2842 = vsel %vm241, %v2841, %v2737
    %v2843 = vsel %vm244, %v2842, %v2747
    %v2844 = vsel %vm247, %v2843, %v2757
    %v2845 = vsel %vm250, %v2844, %v2767
    %2852 = vrot.lane.b32.xlu0 %v2836, 112
    %v2853 = vpop.permute.xlu0 %2852
    %2854 = vrot.lane.b32.xlu0 %v2837, 112
    %v2855 = vpop.permute.xlu0 %2854
    %2856 = vrot.lane.b32.xlu0 %v2838, 112
    %v2857 = vpop.permute.xlu0 %2856
    %2858 = vrot.lane.b32.xlu0 %v2798, 112
    %v2859 = vpop.permute.xlu0 %2858
    %2860 = vrot.lane.b32.xlu0 %v2799, 112
    %v2861 = vpop.permute.xlu0 %2860
    %2862 = vrot.lane.b32.xlu0 %v2845, 112
    %v2863 = vpop.permute.xlu0 %2862
    %v2864 = vsel %vm331, %v2853, %v2855
    %v2865 = vsel %vm331, %v2855, %v2857
    %v2866 = vsel %vm331, %v2859, %v2861
    %v2867 = vsel %vm331, %v2861, %v2863
    %2872 = vrot.lane.b32.xlu0 %v2836, 96
    %v2873 = vpop.permute.xlu0 %2872
    %2874 = vrot.lane.b32.xlu0 %v2837, 96
    %v2875 = vpop.permute.xlu0 %2874
    %2876 = vrot.lane.b32.xlu0 %v2838, 96
    %v2877 = vpop.permute.xlu0 %2876
    %2878 = vrot.lane.b32.xlu0 %v2798, 96
    %v2879 = vpop.permute.xlu0 %2878
    %2880 = vrot.lane.b32.xlu0 %v2799, 96
    %v2881 = vpop.permute.xlu0 %2880
    %2882 = vrot.lane.b32.xlu0 %v2845, 96
    %v2883 = vpop.permute.xlu0 %2882
    %v2884 = vsel %vm352, %v2873, %v2875
    %v2885 = vsel %vm352, %v2875, %v2877
    %v2886 = vsel %vm352, %v2879, %v2881
    %v2887 = vsel %vm352, %v2881, %v2883
    %2892 = vrot.lane.b32.xlu0 %v2836, 80
    %v2893 = vpop.permute.xlu0 %2892
    %2894 = vrot.lane.b32.xlu0 %v2837, 80
    %v2895 = vpop.permute.xlu0 %2894
    %2896 = vrot.lane.b32.xlu0 %v2838, 80
    %v2897 = vpop.permute.xlu0 %2896
    %2898 = vrot.lane.b32.xlu0 %v2798, 80
    %v2899 = vpop.permute.xlu0 %2898
    %2900 = vrot.lane.b32.xlu0 %v2799, 80
    %v2901 = vpop.permute.xlu0 %2900
    %2902 = vrot.lane.b32.xlu0 %v2845, 80
    %v2903 = vpop.permute.xlu0 %2902
    %v2904 = vsel %vm373, %v2893, %v2895
    %v2905 = vsel %vm373, %v2895, %v2897
    %v2906 = vsel %vm373, %v2899, %v2901
    %v2907 = vsel %vm373, %v2901, %v2903
    %2912 = vrot.lane.b32.xlu0 %v2613, 64
    %v2913 = vpop.permute.xlu0 %2912
    %2914 = vrot.lane.b32.xlu0 %v2617, 64
    %v2915 = vpop.permute.xlu0 %2914
    %2916 = vrot.lane.b32.xlu0 %v2621, 64
    %v2917 = vpop.permute.xlu0 %2916
    %v2918 = vsel %vm388, %v2913, %v2915
    %v2919 = vsel %vm388, %v2915, %v2917
    %v2920 = vsel %vm232, %v2918, 0
    %v2922 = vsel %vm232, %v2919, 0
    %2924 = vmatprep.subr.mxu0 %v2785
    %2925 = vmatpush1.msra.mxu0 %v2784
    %2926 = vmatprep.subr.mxu0 %v2799
    %2927 = vmatpush1.msra.mxu0 %v2798
    %2928 = vmatprep.subr.mxu0 %v2865
    %2929 = vmatpush1.msra.mxu0 %v2864
    %2930 = vmatprep.subr.mxu0 %v2867
    %2931 = vmatpush1.msra.mxu0 %v2866
    %2932 = vmatprep.subr.mxu0 %v2885
    %2933 = vmatpush1.msra.mxu0 %v2884
    %2934 = vmatprep.subr.mxu0 %v2887
    %2935 = vmatpush1.msra.mxu0 %v2886
    %2936 = vmatprep.subr.mxu0 %v2905
    %2937 = vmatpush1.msra.mxu0 %v2904
    %2938 = vmatprep.subr.mxu0 %v2907
    %2939 = vmatpush1.msra.mxu0 %v2906
    %2940 = vmatprep.subr.mxu0 %v2922
    %2941 = vmatpush1.msra.mxu0 %v2920
    %2942 = vmatprep.subr.mxu0 0.0
    %2943 = vmatpush1.msra.mxu0 0.0
    %2944 = vmatprep.subr.mxu0 0.0
    %2945 = vmatpush1.msra.mxu0 0.0
    %2946 = vmatprep.subr.mxu0 0.0
    %2947 = vmatpush1.msra.mxu0 0.0
    %2948 = vmatprep.subr.mxu0 0.0
    %2949 = vmatpush1.msra.mxu0 0.0
    %2950 = vmatprep.subr.mxu0 0.0
    %2951 = vmatpush1.msra.mxu0 0.0
    %2952 = vmatprep.subr.mxu0 0.0
    %2953 = vmatpush1.msra.mxu0 0.0
    %2954 = vmatprep.subr.mxu0 0.0
    %2955 = vmatpush1.msra.mxu0 0.0
    %2956 = vmatprep.subr.mxu0 0.0
    %2957 = vmatpush1.msra.mxu0 0.0
    %2958 = vmatprep.subr.mxu0 0.0
    %2959 = vmatpush1.msra.mxu0 0.0
    %2960 = vmatprep.subr.mxu0 0.0
    %2961 = vmatpush1.msra.mxu0 0.0
    %2962 = vmatprep.subr.mxu0 0.0
    %2963 = vmatpush1.msra.mxu0 0.0
    %2964 = vmatprep.subr.mxu0 0.0
    %2965 = vmatpush1.msra.mxu0 0.0
    %2966 = vmatprep.subr.mxu0 0.0
    %2967 = vmatpush1.msra.mxu0 0.0
    %2968 = vmatprep.subr.mxu0 0.0
    %2969 = vmatpush1.msra.mxu0 0.0
    %2970 = vmatprep.subr.mxu0 0.0
    %2971 = vmatpush1.msra.mxu0 0.0
    %2972 = vmatprep.subr.mxu0 0.0
    %2973 = vmatpush1.msra.mxu0 0.0
    %2974 = vmatprep.subr.mxu0 0.0
    %2975 = vmatpush1.msra.mxu0 0.0
    %2976 = vmatprep.subr.mxu0 0.0
    %2977 = vmatpush1.msra.mxu0 0.0
    %2978 = vmatprep.subr.mxu0 0.0
    %2979 = vmatpush1.msra.mxu0 0.0
    %2980 = vmatprep.subr.mxu0 0.0
    %2981 = vmatpush1.msra.mxu0 0.0
    %2982 = vmatprep.subr.mxu0 0.0
    %2983 = vmatpush1.msra.mxu0 0.0
    %2984 = vmatprep.subr.mxu0 0.0
    %2985 = vmatpush1.msra.mxu0 0.0
    %2986 = vmatprep.subr.mxu0 0.0
    %2987 = vmatpush1.msra.mxu0 0.0
    %2988 = vmatprep.mubr.f32.mxu0 0.0
    %2989 = vmatmul.mubr.f32.gmra.mrb[0].mxu0 %v393
    %v2990 = vpop.f32.mrb[0].mxu0
    %v2991 = vadd.f32 0.0, %v2990
    %v2992 = vpop.f32.mrb[0].mxu0
    %v2993 = vadd.f32 0.0, %v2992
    %2994 = vmatprep.mubr.f32.mxu0 0.0
    %2995 = vmatmul.mubr.f32.gmra.mrb[0].mxu0 %v396
    %v2996 = vpop.f32.mrb[0].mxu0
    %v2997 = vadd.f32 0.0, %v2996
    %v2998 = vpop.f32.mrb[0].mxu0
    %v2999 = vadd.f32 0.0, %v2998
    %3000 = vmatprep.mubr.f32.mxu0 0.0
    %3001 = vmatmul.mubr.f32.gmra.mrb[0].mxu0 %v399
    %v3002 = vpop.f32.mrb[0].mxu0
    %v3003 = vadd.f32 0.0, %v3002
    %v3004 = vpop.f32.mrb[0].mxu0
    %v3005 = vadd.f32 0.0, %v3004
    %3006 = vdwg.mxu0
    %s3007 = scalar_lea.vmem [#allocation7], 288
    %3008 = vst [vmem:[%s3007] sm:$0xff] %v2991
    %3009 = vst [vmem:[%s3007 + $0x8] sm:$0xff] %v2993
    %3010 = vst [vmem:[%s3007 + $0x10] sm:$0xff] %v2997
    %3011 = vst [vmem:[%s3007 + $0x18] sm:$0xff] %v2999
    %3012 = vst [vmem:[%s3007 + $0x20] sm:$0xff] %v3003
    %3013 = vst [vmem:[%s3007 + $0x28] sm:$0xff] %v3005
    %s3014 = scalar_lea.vmem [#allocation2], 7
    %v3015 = vld [vmem:[%s3014] ss:$8 sm:$0x3]
    %s3016 = scalar_lea.vmem [#allocation2], 7
    %v3017 = vld [vmem:[%s3016] ss:$8 sm:$0x7]
    %v3019 = vlaneseq
    %v3020 = vshrl.u32 %v3019, 7
    %v3021 = vsub.s32 0, %v3020
    %v3022 = vrot.slane %v3015, %v3021
    %v3023 = vlaneseq
    %v3024 = vshrl.u32 %v3023, 7
    %v3025 = vsub.s32 1, %v3024
    %v3026 = vrot.slane %v3015, %v3025
    %v3030 = vlaneseq
    %v3031 = vshrl.u32 %v3030, 7
    %v3032 = vsub.s32 0, %v3031
    %v3033 = vrot.slane %v3017, %v3032
    %v3034 = vlaneseq
    %v3035 = vshrl.u32 %v3034, 7
    %v3036 = vsub.s32 1, %v3035
    %v3037 = vrot.slane %v3017, %v3036
    %v3038 = vlaneseq
    %v3039 = vshrl.u32 %v3038, 7
    %v3040 = vsub.s32 2, %v3039
    %v3041 = vrot.slane %v3017, %v3040
    %3042 = vrot.lane.b32.xlu0 %v3033, 127
    %v3043 = vpop.permute.xlu0 %3042
    %3044 = vrot.lane.b32.xlu0 %v3037, 127
    %v3045 = vpop.permute.xlu0 %3044
    %3046 = vrot.lane.b32.xlu0 %v3041, 127
    %v3047 = vpop.permute.xlu0 %3046
    %v3048 = vsel %vm73, %v3043, %v3045
    %v3049 = vsel %vm73, %v3045, %v3047
    %3052 = vrot.lane.b32.xlu0 %v3033, 126
    %v3053 = vpop.permute.xlu0 %3052
    %3054 = vrot.lane.b32.xlu0 %v3037, 126
    %v3055 = vpop.permute.xlu0 %3054
    %3056 = vrot.lane.b32.xlu0 %v3041, 126
    %v3057 = vpop.permute.xlu0 %3056
    %v3058 = vsel %vm84, %v3053, %v3055
    %v3059 = vsel %vm84, %v3055, %v3057
    %3062 = vrot.lane.b32.xlu0 %v3033, 125
    %v3063 = vpop.permute.xlu0 %3062
    %3064 = vrot.lane.b32.xlu0 %v3037, 125
    %v3065 = vpop.permute.xlu0 %3064
    %3066 = vrot.lane.b32.xlu0 %v3041, 125
    %v3067 = vpop.permute.xlu0 %3066
    %v3068 = vsel %vm95, %v3063, %v3065
    %v3069 = vsel %vm95, %v3065, %v3067
    %3072 = vrot.lane.b32.xlu0 %v3033, 124
    %v3073 = vpop.permute.xlu0 %3072
    %3074 = vrot.lane.b32.xlu0 %v3037, 124
    %v3075 = vpop.permute.xlu0 %3074
    %3076 = vrot.lane.b32.xlu0 %v3041, 124
    %v3077 = vpop.permute.xlu0 %3076
    %v3078 = vsel %vm106, %v3073, %v3075
    %v3079 = vsel %vm106, %v3075, %v3077
    %3082 = vrot.lane.b32.xlu0 %v3033, 123
    %v3083 = vpop.permute.xlu0 %3082
    %3084 = vrot.lane.b32.xlu0 %v3037, 123
    %v3085 = vpop.permute.xlu0 %3084
    %3086 = vrot.lane.b32.xlu0 %v3041, 123
    %v3087 = vpop.permute.xlu0 %3086
    %v3088 = vsel %vm117, %v3083, %v3085
    %v3089 = vsel %vm117, %v3085, %v3087
    %3092 = vrot.lane.b32.xlu0 %v3033, 122
    %v3093 = vpop.permute.xlu0 %3092
    %3094 = vrot.lane.b32.xlu0 %v3037, 122
    %v3095 = vpop.permute.xlu0 %3094
    %3096 = vrot.lane.b32.xlu0 %v3041, 122
    %v3097 = vpop.permute.xlu0 %3096
    %v3098 = vsel %vm128, %v3093, %v3095
    %v3099 = vsel %vm128, %v3095, %v3097
    %3102 = vrot.lane.b32.xlu0 %v3033, 121
    %v3103 = vpop.permute.xlu0 %3102
    %3104 = vrot.lane.b32.xlu0 %v3037, 121
    %v3105 = vpop.permute.xlu0 %3104
    %3106 = vrot.lane.b32.xlu0 %v3041, 121
    %v3107 = vpop.permute.xlu0 %3106
    %v3108 = vsel %vm139, %v3103, %v3105
    %v3109 = vsel %vm139, %v3105, %v3107
    %3112 = vrot.lane.b32.xlu0 %v3033, 120
    %v3113 = vpop.permute.xlu0 %3112
    %3114 = vrot.lane.b32.xlu0 %v3037, 120
    %v3115 = vpop.permute.xlu0 %3114
    %3116 = vrot.lane.b32.xlu0 %v3041, 120
    %v3117 = vpop.permute.xlu0 %3116
    %v3118 = vsel %vm150, %v3113, %v3115
    %v3119 = vsel %vm150, %v3115, %v3117
    %3122 = vrot.lane.b32.xlu0 %v3033, 119
    %v3123 = vpop.permute.xlu0 %3122
    %3124 = vrot.lane.b32.xlu0 %v3037, 119
    %v3125 = vpop.permute.xlu0 %3124
    %3126 = vrot.lane.b32.xlu0 %v3041, 119
    %v3127 = vpop.permute.xlu0 %3126
    %v3128 = vsel %vm161, %v3123, %v3125
    %v3129 = vsel %vm161, %v3125, %v3127
    %3132 = vrot.lane.b32.xlu0 %v3033, 118
    %v3133 = vpop.permute.xlu0 %3132
    %3134 = vrot.lane.b32.xlu0 %v3037, 118
    %v3135 = vpop.permute.xlu0 %3134
    %3136 = vrot.lane.b32.xlu0 %v3041, 118
    %v3137 = vpop.permute.xlu0 %3136
    %v3138 = vsel %vm172, %v3133, %v3135
    %v3139 = vsel %vm172, %v3135, %v3137
    %3142 = vrot.lane.b32.xlu0 %v3033, 117
    %v3143 = vpop.permute.xlu0 %3142
    %3144 = vrot.lane.b32.xlu0 %v3037, 117
    %v3145 = vpop.permute.xlu0 %3144
    %3146 = vrot.lane.b32.xlu0 %v3041, 117
    %v3147 = vpop.permute.xlu0 %3146
    %v3148 = vsel %vm183, %v3143, %v3145
    %v3149 = vsel %vm183, %v3145, %v3147
    %3152 = vrot.lane.b32.xlu0 %v3033, 116
    %v3153 = vpop.permute.xlu0 %3152
    %3154 = vrot.lane.b32.xlu0 %v3037, 116
    %v3155 = vpop.permute.xlu0 %3154
    %3156 = vrot.lane.b32.xlu0 %v3041, 116
    %v3157 = vpop.permute.xlu0 %3156
    %v3158 = vsel %vm194, %v3153, %v3155
    %v3159 = vsel %vm194, %v3155, %v3157
    %3162 = vrot.lane.b32.xlu0 %v3033, 115
    %v3163 = vpop.permute.xlu0 %3162
    %3164 = vrot.lane.b32.xlu0 %v3037, 115
    %v3165 = vpop.permute.xlu0 %3164
    %3166 = vrot.lane.b32.xlu0 %v3041, 115
    %v3167 = vpop.permute.xlu0 %3166
    %v3168 = vsel %vm205, %v3163, %v3165
    %v3169 = vsel %vm205, %v3165, %v3167
    %3172 = vrot.lane.b32.xlu0 %v3033, 114
    %v3173 = vpop.permute.xlu0 %3172
    %3174 = vrot.lane.b32.xlu0 %v3037, 114
    %v3175 = vpop.permute.xlu0 %3174
    %3176 = vrot.lane.b32.xlu0 %v3041, 114
    %v3177 = vpop.permute.xlu0 %3176
    %v3178 = vsel %vm216, %v3173, %v3175
    %v3179 = vsel %vm216, %v3175, %v3177
    %3182 = vrot.lane.b32.xlu0 %v3033, 113
    %v3183 = vpop.permute.xlu0 %3182
    %3184 = vrot.lane.b32.xlu0 %v3037, 113
    %v3185 = vpop.permute.xlu0 %3184
    %3186 = vrot.lane.b32.xlu0 %v3041, 113
    %v3187 = vpop.permute.xlu0 %3186
    %v3188 = vsel %vm227, %v3183, %v3185
    %v3189 = vsel %vm227, %v3185, %v3187
    %v3192 = vsel %vm232, %v3022, %v3048
    %v3193 = vsel %vm232, %v3026, %v3049
    %v3194 = vsel %vm235, %v3192, %v3058
    %v3195 = vsel %vm235, %v3193, %v3059
    %v3196 = vsel %vm238, %v3194, %v3068
    %v3197 = vsel %vm238, %v3195, %v3069
    %v3198 = vsel %vm241, %v3196, %v3078
    %v3199 = vsel %vm241, %v3197, %v3079
    %v3200 = vsel %vm244, %v3198, %v3088
    %v3201 = vsel %vm244, %v3199, %v3089
    %v3202 = vsel %vm247, %v3200, %v3098
    %v3203 = vsel %vm247, %v3201, %v3099
    %v3204 = vsel %vm250, %v3202, %v3108
    %v3205 = vsel %vm250, %v3203, %v3109
    %v3206 = vsel %vm232, %v3118, %v3128
    %v3207 = vsel %vm232, %v3119, %v3129
    %v3208 = vsel %vm235, %v3206, %v3138
    %v3209 = vsel %vm235, %v3207, %v3139
    %v3210 = vsel %vm238, %v3208, %v3148
    %v3211 = vsel %vm238, %v3209, %v3149
    %v3212 = vsel %vm241, %v3210, %v3158
    %v3213 = vsel %vm241, %v3211, %v3159
    %v3214 = vsel %vm244, %v3212, %v3168
    %v3215 = vsel %vm244, %v3213, %v3169
    %v3216 = vsel %vm247, %v3214, %v3178
    %v3217 = vsel %vm247, %v3215, %v3179
    %v3218 = vsel %vm250, %v3216, %v3188
    %v3219 = vsel %vm250, %v3217, %v3189
    %v3238 = vsel %vm232, %v3033, %v3048
    %v3239 = vsel %vm232, %v3037, %v3049
    %v3240 = vsel %vm232, %v3041, %v3047
    %v3241 = vsel %vm235, %v3238, %v3058
    %v3242 = vsel %vm235, %v3239, %v3059
    %v3243 = vsel %vm235, %v3240, %v3057
    %v3244 = vsel %vm238, %v3241, %v3068
    %v3245 = vsel %vm238, %v3242, %v3069
    %v3246 = vsel %vm238, %v3243, %v3067
    %v3247 = vsel %vm241, %v3244, %v3078
    %v3248 = vsel %vm241, %v3245, %v3079
    %v3249 = vsel %vm241, %v3246, %v3077
    %v3250 = vsel %vm244, %v3247, %v3088
    %v3251 = vsel %vm244, %v3248, %v3089
    %v3252 = vsel %vm244, %v3249, %v3087
    %v3253 = vsel %vm247, %v3250, %v3098
    %v3254 = vsel %vm247, %v3251, %v3099
    %v3255 = vsel %vm247, %v3252, %v3097
    %v3256 = vsel %vm250, %v3253, %v3108
    %v3257 = vsel %vm250, %v3254, %v3109
    %v3258 = vsel %vm250, %v3255, %v3107
    %v3259 = vsel %vm232, %v3117, %v3127
    %v3260 = vsel %vm235, %v3259, %v3137
    %v3261 = vsel %vm238, %v3260, %v3147
    %v3262 = vsel %vm241, %v3261, %v3157
    %v3263 = vsel %vm244, %v3262, %v3167
    %v3264 = vsel %vm247, %v3263, %v3177
    %v3265 = vsel %vm250, %v3264, %v3187
    %3272 = vrot.lane.b32.xlu0 %v3256, 112
    %v3273 = vpop.permute.xlu0 %3272
    %3274 = vrot.lane.b32.xlu0 %v3257, 112
    %v3275 = vpop.permute.xlu0 %3274
    %3276 = vrot.lane.b32.xlu0 %v3258, 112
    %v3277 = vpop.permute.xlu0 %3276
    %3278 = vrot.lane.b32.xlu0 %v3218, 112
    %v3279 = vpop.permute.xlu0 %3278
    %3280 = vrot.lane.b32.xlu0 %v3219, 112
    %v3281 = vpop.permute.xlu0 %3280
    %3282 = vrot.lane.b32.xlu0 %v3265, 112
    %v3283 = vpop.permute.xlu0 %3282
    %v3284 = vsel %vm331, %v3273, %v3275
    %v3285 = vsel %vm331, %v3275, %v3277
    %v3286 = vsel %vm331, %v3279, %v3281
    %v3287 = vsel %vm331, %v3281, %v3283
    %3292 = vrot.lane.b32.xlu0 %v3256, 96
    %v3293 = vpop.permute.xlu0 %3292
    %3294 = vrot.lane.b32.xlu0 %v3257, 96
    %v3295 = vpop.permute.xlu0 %3294
    %3296 = vrot.lane.b32.xlu0 %v3258, 96
    %v3297 = vpop.permute.xlu0 %3296
    %3298 = vrot.lane.b32.xlu0 %v3218, 96
    %v3299 = vpop.permute.xlu0 %3298
    %3300 = vrot.lane.b32.xlu0 %v3219, 96
    %v3301 = vpop.permute.xlu0 %3300
    %3302 = vrot.lane.b32.xlu0 %v3265, 96
    %v3303 = vpop.permute.xlu0 %3302
    %v3304 = vsel %vm352, %v3293, %v3295
    %v3305 = vsel %vm352, %v3295, %v3297
    %v3306 = vsel %vm352, %v3299, %v3301
    %v3307 = vsel %vm352, %v3301, %v3303
    %3312 = vrot.lane.b32.xlu0 %v3256, 80
    %v3313 = vpop.permute.xlu0 %3312
    %3314 = vrot.lane.b32.xlu0 %v3257, 80
    %v3315 = vpop.permute.xlu0 %3314
    %3316 = vrot.lane.b32.xlu0 %v3258, 80
    %v3317 = vpop.permute.xlu0 %3316
    %3318 = vrot.lane.b32.xlu0 %v3218, 80
    %v3319 = vpop.permute.xlu0 %3318
    %3320 = vrot.lane.b32.xlu0 %v3219, 80
    %v3321 = vpop.permute.xlu0 %3320
    %3322 = vrot.lane.b32.xlu0 %v3265, 80
    %v3323 = vpop.permute.xlu0 %3322
    %v3324 = vsel %vm373, %v3313, %v3315
    %v3325 = vsel %vm373, %v3315, %v3317
    %v3326 = vsel %vm373, %v3319, %v3321
    %v3327 = vsel %vm373, %v3321, %v3323
    %3332 = vrot.lane.b32.xlu0 %v3033, 64
    %v3333 = vpop.permute.xlu0 %3332
    %3334 = vrot.lane.b32.xlu0 %v3037, 64
    %v3335 = vpop.permute.xlu0 %3334
    %3336 = vrot.lane.b32.xlu0 %v3041, 64
    %v3337 = vpop.permute.xlu0 %3336
    %v3338 = vsel %vm388, %v3333, %v3335
    %v3339 = vsel %vm388, %v3335, %v3337
    %v3340 = vsel %vm232, %v3338, 0
    %v3342 = vsel %vm232, %v3339, 0
    %3344 = vmatprep.subr.mxu0 %v3205
    %3345 = vmatpush1.msra.mxu0 %v3204
    %3346 = vmatprep.subr.mxu0 %v3219
    %3347 = vmatpush1.msra.mxu0 %v3218
    %3348 = vmatprep.subr.mxu0 %v3285
    %3349 = vmatpush1.msra.mxu0 %v3284
    %3350 = vmatprep.subr.mxu0 %v3287
    %3351 = vmatpush1.msra.mxu0 %v3286
    %3352 = vmatprep.subr.mxu0 %v3305
    %3353 = vmatpush1.msra.mxu0 %v3304
    %3354 = vmatprep.subr.mxu0 %v3307
    %3355 = vmatpush1.msra.mxu0 %v3306
    %3356 = vmatprep.subr.mxu0 %v3325
    %3357 = vmatpush1.msra.mxu0 %v3324
    %3358 = vmatprep.subr.mxu0 %v3327
    %3359 = vmatpush1.msra.mxu0 %v3326
    %3360 = vmatprep.subr.mxu0 %v3342
    %3361 = vmatpush1.msra.mxu0 %v3340
    %3362 = vmatprep.subr.mxu0 0.0
    %3363 = vmatpush1.msra.mxu0 0.0
    %3364 = vmatprep.subr.mxu0 0.0
    %3365 = vmatpush1.msra.mxu0 0.0
    %3366 = vmatprep.subr.mxu0 0.0
    %3367 = vmatpush1.msra.mxu0 0.0
    %3368 = vmatprep.subr.mxu0 0.0
    %3369 = vmatpush1.msra.mxu0 0.0
    %3370 = vmatprep.subr.mxu0 0.0
    %3371 = vmatpush1.msra.mxu0 0.0
    %3372 = vmatprep.subr.mxu0 0.0
    %3373 = vmatpush1.msra.mxu0 0.0
    %3374 = vmatprep.subr.mxu0 0.0
    %3375 = vmatpush1.msra.mxu0 0.0
    %3376 = vmatprep.subr.mxu0 0.0
    %3377 = vmatpush1.msra.mxu0 0.0
    %3378 = vmatprep.subr.mxu0 0.0
    %3379 = vmatpush1.msra.mxu0 0.0
    %3380 = vmatprep.subr.mxu0 0.0
    %3381 = vmatpush1.msra.mxu0 0.0
    %3382 = vmatprep.subr.mxu0 0.0
    %3383 = vmatpush1.msra.mxu0 0.0
    %3384 = vmatprep.subr.mxu0 0.0
    %3385 = vmatpush1.msra.mxu0 0.0
    %3386 = vmatprep.subr.mxu0 0.0
    %3387 = vmatpush1.msra.mxu0 0.0
    %3388 = vmatprep.subr.mxu0 0.0
    %3389 = vmatpush1.msra.mxu0 0.0
    %3390 = vmatprep.subr.mxu0 0.0
    %3391 = vmatpush1.msra.mxu0 0.0
    %3392 = vmatprep.subr.mxu0 0.0
    %3393 = vmatpush1.msra.mxu0 0.0
    %3394 = vmatprep.subr.mxu0 0.0
    %3395 = vmatpush1.msra.mxu0 0.0
    %3396 = vmatprep.subr.mxu0 0.0
    %3397 = vmatpush1.msra.mxu0 0.0
    %3398 = vmatprep.subr.mxu0 0.0
    %3399 = vmatpush1.msra.mxu0 0.0
    %3400 = vmatprep.subr.mxu0 0.0
    %3401 = vmatpush1.msra.mxu0 0.0
    %3402 = vmatprep.subr.mxu0 0.0
    %3403 = vmatpush1.msra.mxu0 0.0
    %3404 = vmatprep.subr.mxu0 0.0
    %3405 = vmatpush1.msra.mxu0 0.0
    %3406 = vmatprep.subr.mxu0 0.0
    %3407 = vmatpush1.msra.mxu0 0.0
    %3408 = vmatprep.mubr.f32.mxu0 0.0
    %3409 = vmatmul.mubr.f32.gmra.mrb[0].mxu0 %v393
    %v3410 = vpop.f32.mrb[0].mxu0
    %v3411 = vadd.f32 0.0, %v3410
    %v3412 = vpop.f32.mrb[0].mxu0
    %v3413 = vadd.f32 0.0, %v3412
    %3414 = vmatprep.mubr.f32.mxu0 0.0
    %3415 = vmatmul.mubr.f32.gmra.mrb[0].mxu0 %v396
    %v3416 = vpop.f32.mrb[0].mxu0
    %v3417 = vadd.f32 0.0, %v3416
    %v3418 = vpop.f32.mrb[0].mxu0
    %v3419 = vadd.f32 0.0, %v3418
    %3420 = vmatprep.mubr.f32.mxu0 0.0
    %3421 = vmatmul.mubr.f32.gmra.mrb[0].mxu0 %v399
    %v3422 = vpop.f32.mrb[0].mxu0
    %v3423 = vadd.f32 0.0, %v3422
    %v3424 = vpop.f32.mrb[0].mxu0
    %v3425 = vadd.f32 0.0, %v3424
    %3426 = vdwg.mxu0
    %s3427 = scalar_lea.vmem [#allocation7], 336
    %3428 = vst [vmem:[%s3427] sm:$0xff] %v3411
    %3429 = vst [vmem:[%s3427 + $0x8] sm:$0xff] %v3413
    %3430 = vst [vmem:[%s3427 + $0x10] sm:$0xff] %v3417
    %3431 = vst [vmem:[%s3427 + $0x18] sm:$0xff] %v3419
    %3432 = vst [vmem:[%s3427 + $0x20] sm:$0xff] %v3423
    %3433 = vst [vmem:[%s3427 + $0x28] sm:$0xff] %v3425
    // Predicated region
    $region18: #{tpu_custom_call.1} parent=1 // pred_check
      _
    $region19: #{tpu_custom_call.1} parent=1 // pred_check_branch
      %3435 = sbr.rel (0) target = $region21
    $region20: #{tpu_custom_call.1} parent=1 // pred_region
      %s3437 = ssub.s32 6144, 6144
      %3438 = vsyncadd [#allocation4], %s3437
      %s3439 = sshll.u32 [#allocation7], 4
      %s3440 = int_to_ptr.vmem [resolvable:$true] %s3439
      %3445 = dma.vmem_to_hbm [thread:$0]  %s3440, 6144, %s2, [#allocation4], 256, 256, 16
    $region21: #{tpu_custom_call.1} parent=1 // pred_fallthru
      _
    // Predicated region
    $region22: #{tpu_custom_call.1} parent=1 // pred_check
      _
    $region23: #{tpu_custom_call.1} parent=1 // pred_check_branch
      %3447 = sbr.rel (0) target = $region25
    $region24: #{tpu_custom_call.1} parent=1 // pred_region
      %3448 = dma.done [#allocation4], 6144
    $region25: #{tpu_custom_call.1} parent=1 // pred_fallthru
      _
    %3449 = vsyncpa [#allocation3], 1
    %3450 = vsyncpa [#allocation6], 1
    %3451 = vsyncpa [#allocation4], 1

</llo_original>
